<compile_context>
chip_gen: v7x
topology: tpu7x:2x2x1
jax: 0.10.0
libtpu: 0.0.40
codegen_flags: <defaults>
</compile_context>

<pallas_src>
import math

import jax
import jax.numpy as jnp
from jax.experimental import pallas as pl
from jax.experimental.pallas import tpu as pltpu


def calculate_theta(d):
    """Bernstein-basis polynomial coefficients, ascending powers.

    Matches the sympy/scipy reference:
      f_i(x) = (x/2)^i (1-x/2)^(d-i) / Beta(i+1, d+1-i)
    with 1/Beta(i+1, d+1-i) = (d+1) * C(d, i).
    """
    thetas = []
    for i in range(d + 1):
        inv_beta = (d + 1) * math.comb(d, i)
        coeffs = [0.0] * (d + 1)
        for j in range(d - i + 1):
            coeffs[i + j] = inv_beta * math.comb(d - i, j) * ((-1.0) ** j) / (2.0 ** (i + j))
        thetas.append(coeffs)
    return thetas


def make_bwgnn_kernel(tile_n, hp, d):
    """Builds the Pallas kernel.  Grid = (d, dst_tiles, src_tiles)."""

    def kernel(l_ref, x_ref,
               w1_ref, b1_ref, w2_ref, b2_ref,
               wt_ref, bm1_ref, wm2_ref, bm2_ref,
               out_ref,
               pbf_ref, hacc_ref, acc_ref):
        k = pl.program_id(0)          # power step: produces p_{k+1}
        i = pl.program_id(1)          # destination-node tile
        j = pl.program_id(2)          # source-node tile (reduction axis)
        n_src = pl.num_programs(2)

        row_i = pl.multiple_of(i * tile_n, tile_n)
        row_j = pl.multiple_of(j * tile_n, tile_n)

        # ---- distributed prologue: p_0 for SOURCE tile j --------------------
        # Runs only while the first dst tile of the first power is being
        # reduced, so the feature MLP hides under the L-tile DMA stream
        # instead of being a serialized O(N) bubble.
        @pl.when((k == 0) & (i == 0))
        def _():
            h = jnp.maximum(
                jnp.dot(x_ref[pl.ds(row_j, tile_n), :], w1_ref[...],
                        preferred_element_type=jnp.float32) + b1_ref[...], 0.0)
            h = jnp.maximum(
                jnp.dot(h, w2_ref[...],
                        preferred_element_type=jnp.float32) + b2_ref[...], 0.0)
            pbf_ref[0, pl.ds(row_j, tile_n), :] = h.astype(jnp.bfloat16)
            # head accumulator gets the power-0 contribution + bias (once).
            hacc_ref[pl.ds(row_j, tile_n), :] = (
                jnp.dot(h, wt_ref[0], preferred_element_type=jnp.float32)
                + bm1_ref[...])

        # ---- start of the src reduction for this (power, dst tile) ----------
        @pl.when(j == 0)
        def _():
            acc_ref[...] = jnp.zeros_like(acc_ref)

        # Output blocks are revisited once per power; keep the non-final
        # writebacks deterministic (zeros) instead of flushing stale VMEM.
        @pl.when((j == 0) & (k != d - 1))
        def _():
            out_ref[...] = jnp.zeros_like(out_ref)

        # ---- power accumulate:  p_{k+1}[i] += L[i, j] @ p_k[j] ---------------
        acc_ref[...] += jnp.dot(
            l_ref[...], pbf_ref[k % 2, pl.ds(row_j, tile_n), :],
            preferred_element_type=jnp.float32)

        # ---- epilogue for this (power, dst tile) -----------------------------
        @pl.when(j == n_src - 1)
        def _():
            r = acc_ref[...]                                  # f32 p_{k+1}[i]
            # theta-folded head contribution of power k+1
            hacc_ref[pl.ds(row_i, tile_n), :] += jnp.dot(
                r, wt_ref[k + 1], preferred_element_type=jnp.float32)

            # bf16 snapshot feeds the next power's MXU RHS (ping-pong buffer);
            # spread across tiles so it never forms a pipeline bubble.
            @pl.when(k < d - 1)
            def _():
                pbf_ref[(k + 1) % 2, pl.ds(row_i, tile_n), :] = (
                    r.astype(jnp.bfloat16))

            # all powers done for this tile -> second head layer + writeback
            @pl.when(k == d - 1)
            def _():
                m = jnp.maximum(hacc_ref[pl.ds(row_i, tile_n), :], 0.0)
                out_ref[...] = (
                    jnp.dot(m, wm2_ref[...], preferred_element_type=jnp.float32)
                    + bm2_ref[...])

    return kernel


def _pad2(a, rows, cols):
    out = jnp.zeros((rows, cols), jnp.float32)
    return out.at[:a.shape[0], :a.shape[1]].set(a.astype(jnp.float32))


def bwgnn_forward(adj, x, params, thetas, *, tile_n=None, hp=128, cp=128):
    """Plain-JAX glue (normalization, padding, theta folding) around the kernel."""
    N, in_feats = x.shape
    n_conv = len(thetas)
    d = n_conv - 1
    h_feats = params["w1"].shape[1]
    num_classes = params["wm2"].shape[1]
    assert d >= 1
    if tile_n is None:
        for cand in (512, 256, 128):          # biggest tile the node count allows
            if N % cand == 0:
                tile_n = cand
                break
        else:
            raise ValueError("N must be a multiple of 128")
    assert N % tile_n == 0, "pad the node count to a multiple of tile_n"
    assert tile_n % 128 == 0
    assert h_feats <= hp and num_classes <= cp
    n_tiles = N // tile_n

    # Normalized Laplacian with the identity folded in (L = I - D^-1/2 A^T D^-1/2);
    # the transpose fuses with this elementwise pass.  bf16 halves the dominant
    # N^2 HBM stream.
    in_deg = jnp.maximum(adj.sum(axis=0), 1.0)            # in-degree, clamp(min=1)
    dinv = in_deg.astype(jnp.float32) ** -0.5
    lap = (jnp.eye(N, dtype=jnp.float32)
           - dinv[:, None] * adj.T * dinv[None, :]).astype(jnp.bfloat16)

    # Zero-pad hidden width (h_feats -> hp) and class width (-> cp): lane-dense
    # operands, unmasked stores.  Padded channels stay identically zero.
    w1p = _pad2(params["w1"], in_feats, hp)
    b1p = _pad2(params["b1"], 1, hp)
    w2p = _pad2(params["w2"], hp, hp)
    b2p = _pad2(params["b2"], 1, hp)
    bm1p = _pad2(params["bm1"], 1, hp)
    wm2p = _pad2(params["wm2"], hp, cp)
    bm2p = _pad2(params["bm2"], 1, cp)

    # Fold theta coefficients into the first head layer:
    #   concat_c(poly_c) @ Wm1 = sum_k p_k @ (sum_c theta_c[k] * Wm1_block_c)
    wt = jnp.zeros((n_conv, hp, hp), jnp.float32)
    for kk in range(n_conv):
        blk = sum(thetas[c][kk] * params["wm1"][c * h_feats:(c + 1) * h_feats, :]
                  for c in range(n_conv))
        wt = wt.at[kk, :h_feats, :h_feats].set(blk.astype(jnp.float32))

    kernel = make_bwgnn_kernel(tile_n, hp, d)
    x32 = x.astype(jnp.float32)

    def _resident(arr):
        nd = arr.ndim
        return pl.BlockSpec(arr.shape, lambda k, i, j, _n=nd: (0,) * _n)

    in_specs = [
        # L tiles, streamed once per power (double-buffered by Pallas).
        # TODO(synk): sweep pipeline_mode=pl.Buffered(3) if a profile shows
        # exposed DMA waits at power/tile boundaries.
        pl.BlockSpec((tile_n, tile_n), lambda k, i, j: (i, j)),
        _resident(x32),
        _resident(w1p), _resident(b1p), _resident(w2p), _resident(b2p),
        _resident(wt), _resident(bm1p), _resident(wm2p), _resident(bm2p),
    ]
    out_spec = pl.BlockSpec((tile_n, cp), lambda k, i, j: (i, 0))

    scratch_shapes = [
        pltpu.VMEM((2, N, hp), jnp.bfloat16),   # p_k / p_{k+1} ping-pong (MXU RHS)
        pltpu.VMEM((N, hp), jnp.float32),       # theta-folded head accumulator
        pltpu.VMEM((tile_n, hp), jnp.float32),  # per-dst-tile reduction accumulator
    ]

    flops = (2 * d * N * N * hp                        # Laplacian powers
             + 2 * N * (in_feats * hp + hp * hp)       # feature MLP
             + 2 * N * (n_conv * hp * hp + hp * cp))   # folded head
    bytes_accessed = (d * N * N * 2                    # L streamed once per power
                      + N * in_feats * 4 + N * cp * 4
                      + 4 * (w1p.size + b1p.size + w2p.size + b2p.size
                             + wt.size + bm1p.size + wm2p.size + bm2p.size))

    # Explicit VMEM budget: resident scratch + resident weights/x + streamed
    # double buffers, with ~25% headroom (scoped default is only 16/32 MiB).
    weight_bytes = 4 * (w1p.size + b1p.size + w2p.size + b2p.size
                        + wt.size + bm1p.size + wm2p.size + bm2p.size)
    resident_bytes = (2 * N * hp * 2 + N * hp * 4 + tile_n * hp * 4
                      + N * in_feats * 4 + weight_bytes)
    stream_bytes = 2 * tile_n * tile_n * 2 + 2 * tile_n * cp * 4
    vmem_limit = int(min(max((resident_bytes + stream_bytes) * 5 // 4 + (2 << 20),
                             32 << 20), 100 << 20))

    out_padded = pl.pallas_call(
        kernel,
        out_shape=jax.ShapeDtypeStruct((N, cp), jnp.float32),
        grid=(d, n_tiles, n_tiles),
        in_specs=in_specs,
        out_specs=out_spec,
        scratch_shapes=scratch_shapes,
        # All three axes carry sequential deps through the resident scratch
        # (each power must finish over all dst tiles before the next starts).
        # TODO(synk): on v7x, split the dst-tile axis across the 2 TensorCores
        # (core_map) with a per-power exchange of each core's half of p_{k+1}.
        compiler_params=pltpu.CompilerParams(
            dimension_semantics=("arbitrary", "arbitrary", "arbitrary"),
            vmem_limit_bytes=vmem_limit),
        cost_estimate=pl.CostEstimate(
            flops=int(flops), transcendentals=0,
            bytes_accessed=int(bytes_accessed)),
    )(lap, x32, w1p, b1p, w2p, b2p, wt, bm1p, wm2p, bm2p)

    return out_padded[:, :num_classes]


def bwgnn_ref(adj, x, params, thetas, *, match_kernel=False):
    """Pure-JAX reference mirroring the PyTorch module semantics.

    With match_kernel=True it applies the same bf16 roundings as the kernel
    (bf16 L = I - A_hat, and the feature entering each power step rounded to
    bf16), giving a tight structural check."""
    hi = jax.lax.Precision.HIGHEST
    N = adj.shape[0]
    in_deg = jnp.maximum(adj.sum(axis=0), 1.0)
    dinv = in_deg ** -0.5
    a_hat = dinv[:, None] * adj.T * dinv[None, :]
    lap = jnp.eye(N, dtype=jnp.float32) - a_hat
    if match_kernel:
        lap = lap.astype(jnp.bfloat16).astype(jnp.float32)
    h = jnp.maximum(jnp.dot(x, params["w1"], precision=hi) + params["b1"], 0.0)
    h = jnp.maximum(jnp.dot(h, params["w2"], precision=hi) + params["b2"], 0.0)
    pieces = []
    for theta in thetas:
        feat = h
        poly = theta[0] * feat
        for k in range(1, len(theta)):
            if match_kernel:
                rhs = feat.astype(jnp.bfloat16).astype(jnp.float32)
                feat = jnp.dot(lap, rhs, precision=hi)
            else:
                feat = feat - jnp.dot(a_hat, feat, precision=hi)
            poly = poly + theta[k] * feat
        pieces.append(poly)
    hf = jnp.concatenate(pieces, axis=-1)
    m = jnp.maximum(jnp.dot(hf, params["wm1"], precision=hi) + params["bm1"], 0.0)
    return jnp.dot(m, params["wm2"], precision=hi) + params["bm2"]


if __name__ == "__main__":
    # Small shapes consistent with the module defaults (h_feats=32, 2 classes,
    # num_layers=2 -> 3 PolyConvs).  N=512 with tile_n=256 gives a 2x2 tile
    # grid on L so the blocked reduction / ping-pong paths are exercised.
    N = 512
    in_feats = 16
    h_feats = 32
    num_classes = 2
    num_layers = 2

    thetas = calculate_theta(d=num_layers)
    n_conv = len(thetas)

    key = jax.random.PRNGKey(0)
    keys = jax.random.split(key, 10)

    params = {
        "w1":  0.1 * jax.random.normal(keys[0], (in_feats, h_feats), jnp.float32),
        "b1":  0.1 * jax.random.normal(keys[1], (1, h_feats), jnp.float32),
        "w2":  0.1 * jax.random.normal(keys[2], (h_feats, h_feats), jnp.float32),
        "b2":  0.1 * jax.random.normal(keys[3], (1, h_feats), jnp.float32),
        "wm1": 0.1 * jax.random.normal(keys[4], (h_feats * n_conv, h_feats), jnp.float32),
        "bm1": 0.1 * jax.random.normal(keys[5], (1, h_feats), jnp.float32),
        "wm2": 0.1 * jax.random.normal(keys[6], (h_feats, num_classes), jnp.float32),
        "bm2": 0.1 * jax.random.normal(keys[7], (1, num_classes), jnp.float32),
    }

    x = jax.random.normal(keys[8], (N, in_feats), jnp.float32)
    adj = (jax.random.uniform(keys[9], (N, N)) < 0.05).astype(jnp.float32)
    adj = adj * (1.0 - jnp.eye(N, dtype=jnp.float32))   # no self-loops

    out = bwgnn_forward(adj, x, params, thetas, tile_n=256)
    out = jax.block_until_ready(out)
    assert out.shape == (N, num_classes)

    # Tight structural check (reference with the same bf16 rounding as kernel).
    ref_match = bwgnn_ref(adj, x, params, thetas, match_kernel=True)
    assert jnp.allclose(out, ref_match, rtol=2e-3, atol=2e-3), "structural mismatch"

    # Loose check against exact-f32 module semantics (bf16 Laplacian / bf16
    # per-step features only perturb the result slightly).
    ref_f32 = bwgnn_ref(adj, x, params, thetas, match_kernel=False)
    assert jnp.allclose(out, ref_f32, rtol=5e-2, atol=5e-2), "semantic drift too large"

    print("KERNEL_OK")
</pallas_src>

<mosaic_0001>
module attributes {stable_mosaic.version = 11 : i64} {
  func.func @kernel(%arg0: i32, %arg1: i32, %arg2: i32, %arg3: memref<256x256xbf16, #tpu.memory_space<vmem>>, %arg4: memref<512x16xf32, #tpu.memory_space<vmem>>, %arg5: memref<16x128xf32, #tpu.memory_space<vmem>>, %arg6: memref<1x128xf32, #tpu.memory_space<vmem>>, %arg7: memref<128x128xf32, #tpu.memory_space<vmem>>, %arg8: memref<1x128xf32, #tpu.memory_space<vmem>>, %arg9: memref<3x128x128xf32, #tpu.memory_space<vmem>>, %arg10: memref<1x128xf32, #tpu.memory_space<vmem>>, %arg11: memref<128x128xf32, #tpu.memory_space<vmem>>, %arg12: memref<1x128xf32, #tpu.memory_space<vmem>>, %arg13: memref<256x128xf32, #tpu.memory_space<vmem>>, %arg14: memref<2x512x128xbf16, #tpu.memory_space<vmem>>, %arg15: memref<512x128xf32, #tpu.memory_space<vmem>>, %arg16: memref<256x128xf32, #tpu.memory_space<vmem>>) attributes {dimension_semantics = [#tpu.dimension_semantics<arbitrary>, #tpu.dimension_semantics<arbitrary>, #tpu.dimension_semantics<arbitrary>], iteration_bounds = array<i64: 2, 2, 2>, scalar_prefetch = 0 : i64, scratch_operands = 3 : i64, tpu.core_type = #tpu.core_type<tc>, window_params = [{transform_indices = @transform_0, window_bounds = array<i64: 256, 256>}, {pipeline_mode = #tpu.pipeline_mode<synchronous>, transform_indices = @transform_1, window_bounds = array<i64: 512, 16>}, {pipeline_mode = #tpu.pipeline_mode<synchronous>, transform_indices = @transform_2, window_bounds = array<i64: 16, 128>}, {pipeline_mode = #tpu.pipeline_mode<synchronous>, transform_indices = @transform_3, window_bounds = array<i64: 1, 128>}, {pipeline_mode = #tpu.pipeline_mode<synchronous>, transform_indices = @transform_4, window_bounds = array<i64: 128, 128>}, {pipeline_mode = #tpu.pipeline_mode<synchronous>, transform_indices = @transform_5, window_bounds = array<i64: 1, 128>}, {pipeline_mode = #tpu.pipeline_mode<synchronous>, transform_indices = @transform_6, window_bounds = array<i64: 3, 128, 128>}, {pipeline_mode = #tpu.pipeline_mode<synchronous>, transform_indices = @transform_7, window_bounds = array<i64: 1, 128>}, {pipeline_mode = #tpu.pipeline_mode<synchronous>, transform_indices = @transform_8, window_bounds = array<i64: 128, 128>}, {pipeline_mode = #tpu.pipeline_mode<synchronous>, transform_indices = @transform_9, window_bounds = array<i64: 1, 128>}, {transform_indices = @transform_10, window_bounds = array<i64: 256, 128>}]} {
    %c256_i32 = arith.constant 256 : i32
    %0 = arith.muli %arg1, %c256_i32 : i32
    %1 = tpu.assume_multiple %0, 256 : i32
    %c256_i32_0 = arith.constant 256 : i32
    %2 = arith.muli %arg2, %c256_i32_0 : i32
    %3 = tpu.assume_multiple %2, 256 : i32
    %c0_i32 = arith.constant 0 : i32
    %4 = arith.cmpi eq, %arg0, %c0_i32 : i32
    %c0_i32_1 = arith.constant 0 : i32
    %5 = arith.cmpi eq, %arg1, %c0_i32_1 : i32
    %6 = arith.andi %4, %5 : i1
    %7 = arith.extui %6 : i1 to i32
    %c0_i32_2 = arith.constant 0 : i32
    %8 = arith.cmpi ne, %7, %c0_i32_2 : i32
    scf.if %8 {
      %39 = arith.index_cast %3 : i32 to index
      %c0_20 = arith.constant 0 : index
      %40 = vector.load %arg4[%39, %c0_20] : memref<512x16xf32, #tpu.memory_space<vmem>>, vector<256x16xf32>
      %c0_21 = arith.constant 0 : index
      %c0_22 = arith.constant 0 : index
      %41 = vector.load %arg5[%c0_21, %c0_22] : memref<16x128xf32, #tpu.memory_space<vmem>>, vector<16x128xf32>
      %cst_23 = arith.constant dense<0.000000e+00> : vector<256x128xf32>
      %42 = tpu.matmul %40, %41, %cst_23 {dimension_numbers = #tpu.dot_dimension_numbers<[1], [0], [0], [1], [0, 0, 1, 1], [], []>} : vector<256x16xf32>, vector<16x128xf32>, vector<256x128xf32> -> vector<256x128xf32>
      %c0_24 = arith.constant 0 : index
      %c0_25 = arith.constant 0 : index
      %43 = vector.load %arg6[%c0_24, %c0_25] : memref<1x128xf32, #tpu.memory_space<vmem>>, vector<1x128xf32>
      %44 = vector.broadcast %43 : vector<1x128xf32> to vector<256x128xf32>
      %45 = arith.addf %42, %44 : vector<256x128xf32>
      %cst_26 = arith.constant 0.000000e+00 : f32
      %46 = vector.broadcast %cst_26 : f32 to vector<256x128xf32>
      %47 = arith.maximumf %45, %46 : vector<256x128xf32>
      %c0_27 = arith.constant 0 : index
      %c0_28 = arith.constant 0 : index
      %48 = vector.load %arg7[%c0_27, %c0_28] : memref<128x128xf32, #tpu.memory_space<vmem>>, vector<128x128xf32>
      %cst_29 = arith.constant dense<0.000000e+00> : vector<256x128xf32>
      %49 = tpu.matmul %47, %48, %cst_29 {dimension_numbers = #tpu.dot_dimension_numbers<[1], [0], [0], [1], [0, 0, 1, 1], [], []>} : vector<256x128xf32>, vector<128x128xf32>, vector<256x128xf32> -> vector<256x128xf32>
      %c0_30 = arith.constant 0 : index
      %c0_31 = arith.constant 0 : index
      %50 = vector.load %arg8[%c0_30, %c0_31] : memref<1x128xf32, #tpu.memory_space<vmem>>, vector<1x128xf32>
      %51 = vector.broadcast %50 : vector<1x128xf32> to vector<256x128xf32>
      %52 = arith.addf %49, %51 : vector<256x128xf32>
      %cst_32 = arith.constant 0.000000e+00 : f32
      %53 = vector.broadcast %cst_32 : f32 to vector<256x128xf32>
      %54 = arith.maximumf %52, %53 : vector<256x128xf32>
      %55 = arith.truncf %54 : vector<256x128xf32> to vector<256x128xbf16>
      %c0_33 = arith.constant 0 : index
      %56 = arith.index_cast %3 : i32 to index
      %c0_34 = arith.constant 0 : index
      %57 = vector.load %arg14[%c0_33, %56, %c0_34] : memref<2x512x128xbf16, #tpu.memory_space<vmem>>, vector<1x256x128xbf16>
      %58 = vector.shape_cast %57 : vector<1x256x128xbf16> to vector<256x128xbf16>
      %59 = vector.shape_cast %55 : vector<256x128xbf16> to vector<1x256x128xbf16>
      tpu.vector_store %arg14[%c0_33, %56, %c0_34], %59 {strides = array<i32>} : memref<2x512x128xbf16, #tpu.memory_space<vmem>>, vector<1x256x128xbf16>,
      %c0_35 = arith.constant 0 : index
      %c0_36 = arith.constant 0 : index
      %c0_37 = arith.constant 0 : index
      %60 = vector.load %arg9[%c0_35, %c0_36, %c0_37] : memref<3x128x128xf32, #tpu.memory_space<vmem>>, vector<1x128x128xf32>
      %61 = vector.shape_cast %60 : vector<1x128x128xf32> to vector<128x128xf32>
      %cst_38 = arith.constant dense<0.000000e+00> : vector<256x128xf32>
      %62 = tpu.matmul %54, %61, %cst_38 {dimension_numbers = #tpu.dot_dimension_numbers<[1], [0], [0], [1], [0, 0, 1, 1], [], []>} : vector<256x128xf32>, vector<128x128xf32>, vector<256x128xf32> -> vector<256x128xf32>
      %c0_39 = arith.constant 0 : index
      %c0_40 = arith.constant 0 : index
      %63 = vector.load %arg10[%c0_39, %c0_40] : memref<1x128xf32, #tpu.memory_space<vmem>>, vector<1x128xf32>
      %64 = vector.broadcast %63 : vector<1x128xf32> to vector<256x128xf32>
      %65 = arith.addf %62, %64 : vector<256x128xf32>
      %66 = arith.index_cast %3 : i32 to index
      %c0_41 = arith.constant 0 : index
      %67 = vector.load %arg15[%66, %c0_41] : memref<512x128xf32, #tpu.memory_space<vmem>>, vector<256x128xf32>
      tpu.vector_store %arg15[%66, %c0_41], %65 {strides = array<i32>} : memref<512x128xf32, #tpu.memory_space<vmem>>, vector<256x128xf32>,
    } else {
    }
    %c0_i32_3 = arith.constant 0 : i32
    %9 = arith.cmpi eq, %arg2, %c0_i32_3 : i32
    %10 = arith.extui %9 : i1 to i32
    %c0_i32_4 = arith.constant 0 : i32
    %11 = arith.cmpi ne, %10, %c0_i32_4 : i32
    scf.if %11 {
      %cst_20 = arith.constant 0.000000e+00 : f32
      %39 = vector.broadcast %cst_20 : f32 to vector<256x128xf32>
      %c0_21 = arith.constant 0 : index
      %c0_22 = arith.constant 0 : index
      %40 = vector.load %arg16[%c0_21, %c0_22] : memref<256x128xf32, #tpu.memory_space<vmem>>, vector<256x128xf32>
      tpu.vector_store %arg16[%c0_21, %c0_22], %39 {strides = array<i32>} : memref<256x128xf32, #tpu.memory_space<vmem>>, vector<256x128xf32>,
    } else {
    }
    %c0_i32_5 = arith.constant 0 : i32
    %12 = arith.cmpi eq, %arg2, %c0_i32_5 : i32
    %c1_i32 = arith.constant 1 : i32
    %13 = arith.cmpi ne, %arg0, %c1_i32 : i32
    %14 = arith.andi %12, %13 : i1
    %15 = arith.extui %14 : i1 to i32
    %c0_i32_6 = arith.constant 0 : i32
    %16 = arith.cmpi ne, %15, %c0_i32_6 : i32
    scf.if %16 {
      %cst_20 = arith.constant 0.000000e+00 : f32
      %39 = vector.broadcast %cst_20 : f32 to vector<256x128xf32>
      %c0_21 = arith.constant 0 : index
      %c0_22 = arith.constant 0 : index
      %40 = vector.load %arg13[%c0_21, %c0_22] : memref<256x128xf32, #tpu.memory_space<vmem>>, vector<256x128xf32>
      tpu.vector_store %arg13[%c0_21, %c0_22], %39 {strides = array<i32>} : memref<256x128xf32, #tpu.memory_space<vmem>>, vector<256x128xf32>,
    } else {
    }
    %c0 = arith.constant 0 : index
    %c0_7 = arith.constant 0 : index
    %17 = vector.load %arg16[%c0, %c0_7] : memref<256x128xf32, #tpu.memory_space<vmem>>, vector<256x128xf32>
    %c0_8 = arith.constant 0 : index
    %c0_9 = arith.constant 0 : index
    %18 = vector.load %arg3[%c0_8, %c0_9] : memref<256x256xbf16, #tpu.memory_space<vmem>>, vector<256x256xbf16>
    %c2_i32 = arith.constant 2 : i32
    %c0_i32_10 = arith.constant 0 : i32
    %19 = arith.cmpi eq, %c2_i32, %c0_i32_10 : i32
    %c1_i32_11 = arith.constant 1 : i32
    %20 = arith.select %19, %c1_i32_11, %c2_i32 : i32
    %21 = arith.remsi %arg0, %20 : i32
    %c0_i32_12 = arith.constant 0 : i32
    %22 = arith.cmpi ne, %21, %c0_i32_12 : i32
    %c0_i32_13 = arith.constant 0 : i32
    %23 = arith.cmpi slt, %21, %c0_i32_13 : i32
    %c0_i32_14 = arith.constant 0 : i32
    %24 = arith.cmpi slt, %20, %c0_i32_14 : i32
    %25 = arith.xori %23, %24 : i1
    %26 = arith.andi %25, %22 : i1
    %27 = arith.addi %21, %20 : i32
    %28 = arith.select %26, %27, %21 : i32
    %29 = arith.index_cast %28 : i32 to index
    %30 = arith.index_cast %3 : i32 to index
    %c0_15 = arith.constant 0 : index
    %31 = vector.load %arg14[%29, %30, %c0_15] : memref<2x512x128xbf16, #tpu.memory_space<vmem>>, vector<1x256x128xbf16>
    %32 = vector.shape_cast %31 : vector<1x256x128xbf16> to vector<256x128xbf16>
    %cst = arith.constant dense<0.000000e+00> : vector<256x128xf32>
    %33 = tpu.matmul %18, %32, %cst {dimension_numbers = #tpu.dot_dimension_numbers<[1], [0], [0], [1], [0, 0, 1, 1], [], []>} : vector<256x256xbf16>, vector<256x128xbf16>, vector<256x128xf32> -> vector<256x128xf32>
    %34 = arith.addf %17, %33 : vector<256x128xf32>
    %c0_16 = arith.constant 0 : index
    %c0_17 = arith.constant 0 : index
    %35 = vector.load %arg16[%c0_16, %c0_17] : memref<256x128xf32, #tpu.memory_space<vmem>>, vector<256x128xf32>
    tpu.vector_store %arg16[%c0_16, %c0_17], %34 {strides = array<i32>} : memref<256x128xf32, #tpu.memory_space<vmem>>, vector<256x128xf32>,
    %c1_i32_18 = arith.constant 1 : i32
    %36 = arith.cmpi eq, %arg2, %c1_i32_18 : i32
    %37 = arith.extui %36 : i1 to i32
    %c0_i32_19 = arith.constant 0 : i32
    %38 = arith.cmpi ne, %37, %c0_i32_19 : i32
    scf.if %38 {
      %c0_20 = arith.constant 0 : index
      %c0_21 = arith.constant 0 : index
      %39 = vector.load %arg16[%c0_20, %c0_21] : memref<256x128xf32, #tpu.memory_space<vmem>>, vector<256x128xf32>
      %40 = arith.index_cast %1 : i32 to index
      %c0_22 = arith.constant 0 : index
      %41 = vector.load %arg15[%40, %c0_22] : memref<512x128xf32, #tpu.memory_space<vmem>>, vector<256x128xf32>
      %c1_i32_23 = arith.constant 1 : i32
      %42 = arith.addi %arg0, %c1_i32_23 : i32
      %43 = arith.index_cast %42 : i32 to index
      %c0_24 = arith.constant 0 : index
      %c0_25 = arith.constant 0 : index
      %44 = vector.load %arg9[%43, %c0_24, %c0_25] : memref<3x128x128xf32, #tpu.memory_space<vmem>>, vector<1x128x128xf32>
      %45 = vector.shape_cast %44 : vector<1x128x128xf32> to vector<128x128xf32>
      %cst_26 = arith.constant dense<0.000000e+00> : vector<256x128xf32>
      %46 = tpu.matmul %39, %45, %cst_26 {dimension_numbers = #tpu.dot_dimension_numbers<[1], [0], [0], [1], [0, 0, 1, 1], [], []>} : vector<256x128xf32>, vector<128x128xf32>, vector<256x128xf32> -> vector<256x128xf32>
      %47 = arith.addf %41, %46 : vector<256x128xf32>
      %48 = arith.index_cast %1 : i32 to index
      %c0_27 = arith.constant 0 : index
      %49 = vector.load %arg15[%48, %c0_27] : memref<512x128xf32, #tpu.memory_space<vmem>>, vector<256x128xf32>
      tpu.vector_store %arg15[%48, %c0_27], %47 {strides = array<i32>} : memref<512x128xf32, #tpu.memory_space<vmem>>, vector<256x128xf32>,
      %c1_i32_28 = arith.constant 1 : i32
      %50 = arith.cmpi slt, %arg0, %c1_i32_28 : i32
      %51 = arith.extui %50 : i1 to i32
      %c0_i32_29 = arith.constant 0 : i32
      %52 = arith.cmpi ne, %51, %c0_i32_29 : i32
      scf.if %52 {
        %56 = arith.truncf %39 : vector<256x128xf32> to vector<256x128xbf16>
        %c1_i32_32 = arith.constant 1 : i32
        %57 = arith.addi %arg0, %c1_i32_32 : i32
        %c2_i32_33 = arith.constant 2 : i32
        %c0_i32_34 = arith.constant 0 : i32
        %58 = arith.cmpi eq, %c2_i32_33, %c0_i32_34 : i32
        %c1_i32_35 = arith.constant 1 : i32
        %59 = arith.select %58, %c1_i32_35, %c2_i32_33 : i32
        %60 = arith.remsi %57, %59 : i32
        %c0_i32_36 = arith.constant 0 : i32
        %61 = arith.cmpi ne, %60, %c0_i32_36 : i32
        %c0_i32_37 = arith.constant 0 : i32
        %62 = arith.cmpi slt, %60, %c0_i32_37 : i32
        %c0_i32_38 = arith.constant 0 : i32
        %63 = arith.cmpi slt, %59, %c0_i32_38 : i32
        %64 = arith.xori %62, %63 : i1
        %65 = arith.andi %64, %61 : i1
        %66 = arith.addi %60, %59 : i32
        %67 = arith.select %65, %66, %60 : i32
        %68 = arith.index_cast %67 : i32 to index
        %69 = arith.index_cast %1 : i32 to index
        %c0_39 = arith.constant 0 : index
        %70 = vector.load %arg14[%68, %69, %c0_39] : memref<2x512x128xbf16, #tpu.memory_space<vmem>>, vector<1x256x128xbf16>
        %71 = vector.shape_cast %70 : vector<1x256x128xbf16> to vector<256x128xbf16>
        %72 = vector.shape_cast %56 : vector<256x128xbf16> to vector<1x256x128xbf16>
        tpu.vector_store %arg14[%68, %69, %c0_39], %72 {strides = array<i32>} : memref<2x512x128xbf16, #tpu.memory_space<vmem>>, vector<1x256x128xbf16>,
      } else {
      }
      %c1_i32_30 = arith.constant 1 : i32
      %53 = arith.cmpi eq, %arg0, %c1_i32_30 : i32
      %54 = arith.extui %53 : i1 to i32
      %c0_i32_31 = arith.constant 0 : i32
      %55 = arith.cmpi ne, %54, %c0_i32_31 : i32
      scf.if %55 {
        %56 = arith.index_cast %1 : i32 to index
        %c0_32 = arith.constant 0 : index
        %57 = vector.load %arg15[%56, %c0_32] : memref<512x128xf32, #tpu.memory_space<vmem>>, vector<256x128xf32>
        %cst_33 = arith.constant 0.000000e+00 : f32
        %58 = vector.broadcast %cst_33 : f32 to vector<256x128xf32>
        %59 = arith.maximumf %57, %58 : vector<256x128xf32>
        %c0_34 = arith.constant 0 : index
        %c0_35 = arith.constant 0 : index
        %60 = vector.load %arg11[%c0_34, %c0_35] : memref<128x128xf32, #tpu.memory_space<vmem>>, vector<128x128xf32>
        %cst_36 = arith.constant dense<0.000000e+00> : vector<256x128xf32>
        %61 = tpu.matmul %59, %60, %cst_36 {dimension_numbers = #tpu.dot_dimension_numbers<[1], [0], [0], [1], [0, 0, 1, 1], [], []>} : vector<256x128xf32>, vector<128x128xf32>, vector<256x128xf32> -> vector<256x128xf32>
        %c0_37 = arith.constant 0 : index
        %c0_38 = arith.constant 0 : index
        %62 = vector.load %arg12[%c0_37, %c0_38] : memref<1x128xf32, #tpu.memory_space<vmem>>, vector<1x128xf32>
        %63 = vector.broadcast %62 : vector<1x128xf32> to vector<256x128xf32>
        %64 = arith.addf %61, %63 : vector<256x128xf32>
        %c0_39 = arith.constant 0 : index
        %c0_40 = arith.constant 0 : index
        %65 = vector.load %arg13[%c0_39, %c0_40] : memref<256x128xf32, #tpu.memory_space<vmem>>, vector<256x128xf32>
        tpu.vector_store %arg13[%c0_39, %c0_40], %64 {strides = array<i32>} : memref<256x128xf32, #tpu.memory_space<vmem>>, vector<256x128xf32>,
      } else {
      }
    } else {
    }
    return
  }
  func.func @transform_0(%arg0: i32, %arg1: i32, %arg2: i32) -> (i32, i32) {
    %c0_i32 = arith.constant 0 : i32
    return %arg1, %arg2 : i32, i32
  }
  func.func @transform_1(%arg0: i32, %arg1: i32, %arg2: i32) -> (i32, i32) {
    %c0_i32 = arith.constant 0 : i32
    %c0_i32_0 = arith.constant 0 : i32
    %c0_i32_1 = arith.constant 0 : i32
    return %c0_i32, %c0_i32_0 : i32, i32
  }
  func.func @transform_2(%arg0: i32, %arg1: i32, %arg2: i32) -> (i32, i32) {
    %c0_i32 = arith.constant 0 : i32
    %c0_i32_0 = arith.constant 0 : i32
    %c0_i32_1 = arith.constant 0 : i32
    return %c0_i32, %c0_i32_0 : i32, i32
  }
  func.func @transform_3(%arg0: i32, %arg1: i32, %arg2: i32) -> (i32, i32) {
    %c0_i32 = arith.constant 0 : i32
    %c0_i32_0 = arith.constant 0 : i32
    %c0_i32_1 = arith.constant 0 : i32
    return %c0_i32, %c0_i32_0 : i32, i32
  }
  func.func @transform_4(%arg0: i32, %arg1: i32, %arg2: i32) -> (i32, i32) {
    %c0_i32 = arith.constant 0 : i32
    %c0_i32_0 = arith.constant 0 : i32
    %c0_i32_1 = arith.constant 0 : i32
    return %c0_i32, %c0_i32_0 : i32, i32
  }
  func.func @transform_5(%arg0: i32, %arg1: i32, %arg2: i32) -> (i32, i32) {
    %c0_i32 = arith.constant 0 : i32
    %c0_i32_0 = arith.constant 0 : i32
    %c0_i32_1 = arith.constant 0 : i32
    return %c0_i32, %c0_i32_0 : i32, i32
  }
  func.func @transform_6(%arg0: i32, %arg1: i32, %arg2: i32) -> (i32, i32, i32) {
    %c0_i32 = arith.constant 0 : i32
    %c0_i32_0 = arith.constant 0 : i32
    %c0_i32_1 = arith.constant 0 : i32
    %c0_i32_2 = arith.constant 0 : i32
    return %c0_i32, %c0_i32_0, %c0_i32_1 : i32, i32, i32
  }
  func.func @transform_7(%arg0: i32, %arg1: i32, %arg2: i32) -> (i32, i32) {
    %c0_i32 = arith.constant 0 : i32
    %c0_i32_0 = arith.constant 0 : i32
    %c0_i32_1 = arith.constant 0 : i32
    return %c0_i32, %c0_i32_0 : i32, i32
  }
  func.func @transform_8(%arg0: i32, %arg1: i32, %arg2: i32) -> (i32, i32) {
    %c0_i32 = arith.constant 0 : i32
    %c0_i32_0 = arith.constant 0 : i32
    %c0_i32_1 = arith.constant 0 : i32
    return %c0_i32, %c0_i32_0 : i32, i32
  }
  func.func @transform_9(%arg0: i32, %arg1: i32, %arg2: i32) -> (i32, i32) {
    %c0_i32 = arith.constant 0 : i32
    %c0_i32_0 = arith.constant 0 : i32
    %c0_i32_1 = arith.constant 0 : i32
    return %c0_i32, %c0_i32_0 : i32, i32
  }
  func.func @transform_10(%arg0: i32, %arg1: i32, %arg2: i32) -> (i32, i32) {
    %c0_i32 = arith.constant 0 : i32
    %c0_i32_0 = arith.constant 0 : i32
    return %arg1, %c0_i32 : i32, i32
  }
}

</mosaic_0001>

<llo_original>
// kernel: tpu_custom_call.1
$region0: #{tpu_custom_call.1}
  #allocation0 [shape = 'u32[]', space=smem, size = 0x4, offset = 0x4, fixed_abs, tag = 'smem constant byte address 0x4 - core index']
  #allocation1 [shape = 'u32[144,128]{1,0:T(1,128)}', space=vmem, size = 0x12000, scoped, tag = 'internal scratch']
  #allocation2 [shape = 'bf16[2,512,128]{2,1,0:T(16,128)(2,1)}', space=vmem, size = 0x40000, scoped, tag = 'scratch operand']
  #allocation3 [shape = 'f32[512,128]{1,0:T(8,128)}', space=vmem, size = 0x40000, scoped, tag = 'scratch operand']
  #allocation4 [shape = 'f32[256,128]{1,0:T(8,128)}', space=vmem, size = 0x20000, scoped, tag = 'scratch operand']
  %s0 = inlined_call_operand.hbm [shape: bf16[512,512], index: 0, kind: input, shape index: {}]
  %s1 = inlined_call_operand.vmem [shape: f32[512,16], index: 1, kind: input, shape index: {}]
  %s2 = inlined_call_operand.vmem [shape: f32[16,128], index: 2, kind: input, shape index: {}]
  %s3 = inlined_call_operand.vmem [shape: f32[1,128], index: 3, kind: input, shape index: {}]
  %s4 = inlined_call_operand.vmem [shape: f32[128,128], index: 4, kind: input, shape index: {}]
  %s5 = inlined_call_operand.vmem [shape: f32[1,128], index: 5, kind: input, shape index: {}]
  %s6 = inlined_call_operand.vmem [shape: f32[3,128,128], index: 6, kind: input, shape index: {}]
  %s7 = inlined_call_operand.vmem [shape: f32[1,128], index: 7, kind: input, shape index: {}]
  %s8 = inlined_call_operand.hbm [shape: f32[128,128], index: 8, kind: input, shape index: {}]
  %s9 = inlined_call_operand.vmem [shape: f32[1,128], index: 9, kind: input, shape index: {}]
  %s10 = inlined_call_operand.hbm [shape: f32[512,128], index: 10, kind: output, shape index: {}]
  %s11 = sld [smem:[#allocation0]]
  $region105: #{tpu_custom_call.1} parent=0
    _
  %s13 = ssub.s32 1, %s11
  %s14 = scalar_select 0, %s13, %s11
  $region1: #{tpu_custom_call.1} parent=0
    #allocation5 [shape = 'u8[262144]{0}', space=vmem, size = 0x40000, scoped, tag = 'input window, operand 0']
    #allocation6 [shape = 's32[2]{0}', space=sflag, size = 0x8, scoped, tag = 'scoped memory for tpu_custom_call.1']
    #allocation7 [shape = 's32[2]{0}', space=sflag, size = 0x8, scoped, tag = 'scoped memory for tpu_custom_call.1']
    #allocation8 [shape = 'u8[65536]{0}', space=vmem, size = 0x10000, scoped, tag = 'input window, operand 8, single buffered']
    #allocation9 [shape = 's32[1]{0}', space=sflag, size = 0x4, scoped, tag = 'scoped memory for tpu_custom_call.1']
    #allocation10 [shape = 'u8[262144]{0}', space=vmem, size = 0x40000, scoped, tag = 'output window, operand 0']
    %15 = vsyncpa [#allocation6], 0
    %s16 = scalar_lea.sflag [#allocation6], 1
    %17 = vsyncpa %s16, 0
    %18 = vsyncpa [#allocation9], 0
    %19 = vsyncpa [#allocation7], 0
    %s20 = scalar_lea.sflag [#allocation7], 1
    %21 = vsyncpa %s20, 0
    loop: start=0, step=1, limit=10
    $region2: #{tpu_custom_call.1} parent=1 // loop_pre_header
      _
    $region3: #{tpu_custom_call.1} parent=1 // loop_header
      %s23 = sphi 0, %s27
      %p24 = scmp.ge.s32.totalorder %s23, 10
      %s30 = sphi 0, %s49
      %s31 = sphi 0, %s45
      %s32 = sphi 0, %s41
      %s33 = sphi 0, %s30
      %s34 = sphi 0, %s31
      %s35 = sphi 0, %s32
      %s36 = sphi 0, %s33
      %s37 = sphi 0, %s34
      %s38 = sphi 0, %s35
      %s54 = sphi 0, %s56
      %s57 = sphi 0, %s54
      %s58 = sphi 0, %s57
      %s74 = sphi 0, %s58
      %s78 = sphi 0, %s78
      %s80 = sphi 0, %s78
      %s81 = sphi 0, %s80
      %s95 = sphi 0, %s81
      %s99 = sphi 0, %s99
      %s101 = sphi 0, %s99
      %s102 = sphi 0, %s101
      %s116 = sphi 0, %s102
      %s120 = sphi 0, %s120
      %s122 = sphi 0, %s120
      %s123 = sphi 0, %s122
      %s137 = sphi 0, %s123
      %s141 = sphi 0, %s141
      %s143 = sphi 0, %s141
      %s144 = sphi 0, %s143
      %s158 = sphi 0, %s144
      %s162 = sphi 0, %s162
      %s164 = sphi 0, %s162
      %s165 = sphi 0, %s164
      %s179 = sphi 0, %s165
      %s183 = sphi 0, %s183
      %s185 = sphi 0, %s183
      %s186 = sphi 0, %s185
      %s200 = sphi 0, %s186
      %s204 = sphi 0, %s204
      %s206 = sphi 0, %s204
      %s207 = sphi 0, %s206
      %s221 = sphi 0, %s207
      %s225 = sphi 0, %s225
      %s227 = sphi 0, %s225
      %s228 = sphi 0, %s227
      %s242 = sphi 0, %s228
      %s246 = sphi 0, %s246
      %s248 = sphi 0, %s246
      %s249 = sphi 0, %s248
      %s263 = sphi 0, %s249
      %s269 = sphi 0, %s271
      %s272 = sphi 0, %s269
      %s273 = sphi 0, %s272
      %s289 = sphi 0, %s273
    $region4: #{tpu_custom_call.1} parent=1 // loop_header_branch
      %26 = sbr.rel (%p24) target = $region8
    $region5: #{tpu_custom_call.1} parent=1 // loop_body
      %s28 = ssub.s32 %s23, 1
      %s29 = ssub.s32 %s23, 2
      %s39 = sadd.s32 1, %s32
      %p40 = scmp.ge.s32.totalorder %s39, 2
      %s41 = scalar_select %p40, 0, %s39
      %s42 = sadd.s32 1, %s31
      %s43 = scalar_select %p40, %s42, %s31
      %p44 = scmp.ge.s32.totalorder %s43, 2
      %s45 = scalar_select %p44, 0, %s43
      %s46 = sadd.s32 1, %s30
      %s47 = scalar_select %p44, %s46, %s30
      %p48 = scmp.ge.s32.totalorder %s47, 2
      %s49 = scalar_select %p48, 0, %s47
      %s50 = ssub.s32 %s31, %s45
      %s51 = ssub.s32 %s32, %s41
      %s52 = sor.u32 %s50, %s51
      %p53 = scmp.eq.s32.totalorder %s52, 0
      %s55 = sadd.s32 %s54, 1
      %s56 = scalar_select %p53, %s54, %s55
      %p59 = pneg %p53
      %p60 = scmp.eq.s32.totalorder %s23, 7
      %p61 = por %p59, %p60
      %p62 = scmp.ne.s32.totalorder %s54, %s57
      %p63 = scmp.eq.s32.totalorder %s23, 0
      %p64 = por %p62, %p63
      %p65 = scmp.ne.s32.totalorder %s54, %s57
      %p66 = scmp.eq.s32.totalorder %s28, 7
      %p67 = por %p65, %p66
      %p68 = scmp.ne.s32.totalorder %s57, %s58
      %p69 = scmp.eq.s32.totalorder %s28, 0
      %p70 = por %p68, %p69
      %p71 = scmp.ne.s32.totalorder %s57, %s58
      %p72 = scmp.eq.s32.totalorder %s29, 7
      %p73 = por %p71, %p72
      %p75 = scmp.ne.s32.totalorder %s58, %s74
      %p76 = scmp.eq.s32.totalorder %s29, 0
      %p77 = por %p75, %p76
      %s79 = sadd.s32 %s78, 1
      %p82 = scmp.eq.s32.totalorder %s23, 7
      %p83 = scmp.ne.s32.totalorder %s78, %s80
      %p84 = scmp.eq.s32.totalorder %s23, 0
      %p85 = por %p83, %p84
      %p86 = scmp.ne.s32.totalorder %s78, %s80
      %p87 = scmp.eq.s32.totalorder %s28, 7
      %p88 = por %p86, %p87
      %p89 = scmp.ne.s32.totalorder %s80, %s81
      %p90 = scmp.eq.s32.totalorder %s28, 0
      %p91 = por %p89, %p90
      %p92 = scmp.ne.s32.totalorder %s80, %s81
      %p93 = scmp.eq.s32.totalorder %s29, 7
      %p94 = por %p92, %p93
      %p96 = scmp.ne.s32.totalorder %s81, %s95
      %p97 = scmp.eq.s32.totalorder %s29, 0
      %p98 = por %p96, %p97
      %s100 = sadd.s32 %s99, 1
      %p103 = scmp.eq.s32.totalorder %s23, 7
      %p104 = scmp.ne.s32.totalorder %s99, %s101
      %p105 = scmp.eq.s32.totalorder %s23, 0
      %p106 = por %p104, %p105
      %p107 = scmp.ne.s32.totalorder %s99, %s101
      %p108 = scmp.eq.s32.totalorder %s28, 7
      %p109 = por %p107, %p108
      %p110 = scmp.ne.s32.totalorder %s101, %s102
      %p111 = scmp.eq.s32.totalorder %s28, 0
      %p112 = por %p110, %p111
      %p113 = scmp.ne.s32.totalorder %s101, %s102
      %p114 = scmp.eq.s32.totalorder %s29, 7
      %p115 = por %p113, %p114
      %p117 = scmp.ne.s32.totalorder %s102, %s116
      %p118 = scmp.eq.s32.totalorder %s29, 0
      %p119 = por %p117, %p118
      %s121 = sadd.s32 %s120, 1
      %p124 = scmp.eq.s32.totalorder %s23, 7
      %p125 = scmp.ne.s32.totalorder %s120, %s122
      %p126 = scmp.eq.s32.totalorder %s23, 0
      %p127 = por %p125, %p126
      %p128 = scmp.ne.s32.totalorder %s120, %s122
      %p129 = scmp.eq.s32.totalorder %s28, 7
      %p130 = por %p128, %p129
      %p131 = scmp.ne.s32.totalorder %s122, %s123
      %p132 = scmp.eq.s32.totalorder %s28, 0
      %p133 = por %p131, %p132
      %p134 = scmp.ne.s32.totalorder %s122, %s123
      %p135 = scmp.eq.s32.totalorder %s29, 7
      %p136 = por %p134, %p135
      %p138 = scmp.ne.s32.totalorder %s123, %s137
      %p139 = scmp.eq.s32.totalorder %s29, 0
      %p140 = por %p138, %p139
      %s142 = sadd.s32 %s141, 1
      %p145 = scmp.eq.s32.totalorder %s23, 7
      %p146 = scmp.ne.s32.totalorder %s141, %s143
      %p147 = scmp.eq.s32.totalorder %s23, 0
      %p148 = por %p146, %p147
      %p149 = scmp.ne.s32.totalorder %s141, %s143
      %p150 = scmp.eq.s32.totalorder %s28, 7
      %p151 = por %p149, %p150
      %p152 = scmp.ne.s32.totalorder %s143, %s144
      %p153 = scmp.eq.s32.totalorder %s28, 0
      %p154 = por %p152, %p153
      %p155 = scmp.ne.s32.totalorder %s143, %s144
      %p156 = scmp.eq.s32.totalorder %s29, 7
      %p157 = por %p155, %p156
      %p159 = scmp.ne.s32.totalorder %s144, %s158
      %p160 = scmp.eq.s32.totalorder %s29, 0
      %p161 = por %p159, %p160
      %s163 = sadd.s32 %s162, 1
      %p166 = scmp.eq.s32.totalorder %s23, 7
      %p167 = scmp.ne.s32.totalorder %s162, %s164
      %p168 = scmp.eq.s32.totalorder %s23, 0
      %p169 = por %p167, %p168
      %p170 = scmp.ne.s32.totalorder %s162, %s164
      %p171 = scmp.eq.s32.totalorder %s28, 7
      %p172 = por %p170, %p171
      %p173 = scmp.ne.s32.totalorder %s164, %s165
      %p174 = scmp.eq.s32.totalorder %s28, 0
      %p175 = por %p173, %p174
      %p176 = scmp.ne.s32.totalorder %s164, %s165
      %p177 = scmp.eq.s32.totalorder %s29, 7
      %p178 = por %p176, %p177
      %p180 = scmp.ne.s32.totalorder %s165, %s179
      %p181 = scmp.eq.s32.totalorder %s29, 0
      %p182 = por %p180, %p181
      %s184 = sadd.s32 %s183, 1
      %p187 = scmp.eq.s32.totalorder %s23, 7
      %p188 = scmp.ne.s32.totalorder %s183, %s185
      %p189 = scmp.eq.s32.totalorder %s23, 0
      %p190 = por %p188, %p189
      %p191 = scmp.ne.s32.totalorder %s183, %s185
      %p192 = scmp.eq.s32.totalorder %s28, 7
      %p193 = por %p191, %p192
      %p194 = scmp.ne.s32.totalorder %s185, %s186
      %p195 = scmp.eq.s32.totalorder %s28, 0
      %p196 = por %p194, %p195
      %p197 = scmp.ne.s32.totalorder %s185, %s186
      %p198 = scmp.eq.s32.totalorder %s29, 7
      %p199 = por %p197, %p198
      %p201 = scmp.ne.s32.totalorder %s186, %s200
      %p202 = scmp.eq.s32.totalorder %s29, 0
      %p203 = por %p201, %p202
      %s205 = sadd.s32 %s204, 1
      %p208 = scmp.eq.s32.totalorder %s23, 7
      %p209 = scmp.ne.s32.totalorder %s204, %s206
      %p210 = scmp.eq.s32.totalorder %s23, 0
      %p211 = por %p209, %p210
      %p212 = scmp.ne.s32.totalorder %s204, %s206
      %p213 = scmp.eq.s32.totalorder %s28, 7
      %p214 = por %p212, %p213
      %p215 = scmp.ne.s32.totalorder %s206, %s207
      %p216 = scmp.eq.s32.totalorder %s28, 0
      %p217 = por %p215, %p216
      %p218 = scmp.ne.s32.totalorder %s206, %s207
      %p219 = scmp.eq.s32.totalorder %s29, 7
      %p220 = por %p218, %p219
      %p222 = scmp.ne.s32.totalorder %s207, %s221
      %p223 = scmp.eq.s32.totalorder %s29, 0
      %p224 = por %p222, %p223
      %s226 = sadd.s32 %s225, 1
      %p229 = scmp.eq.s32.totalorder %s23, 7
      %p230 = scmp.ne.s32.totalorder %s225, %s227
      %p231 = scmp.eq.s32.totalorder %s23, 0
      %p232 = por %p230, %p231
      %p233 = scmp.ne.s32.totalorder %s225, %s227
      %p234 = scmp.eq.s32.totalorder %s28, 7
      %p235 = por %p233, %p234
      %p236 = scmp.ne.s32.totalorder %s227, %s228
      %p237 = scmp.eq.s32.totalorder %s28, 0
      %p238 = por %p236, %p237
      %p239 = scmp.ne.s32.totalorder %s227, %s228
      %p240 = scmp.eq.s32.totalorder %s29, 7
      %p241 = por %p239, %p240
      %p243 = scmp.ne.s32.totalorder %s228, %s242
      %p244 = scmp.eq.s32.totalorder %s29, 0
      %p245 = por %p243, %p244
      %s247 = sadd.s32 %s246, 1
      %p250 = scmp.eq.s32.totalorder %s23, 7
      %p251 = scmp.ne.s32.totalorder %s246, %s248
      %p252 = scmp.eq.s32.totalorder %s23, 0
      %p253 = por %p251, %p252
      %p254 = scmp.ne.s32.totalorder %s246, %s248
      %p255 = scmp.eq.s32.totalorder %s28, 7
      %p256 = por %p254, %p255
      %p257 = scmp.ne.s32.totalorder %s248, %s249
      %p258 = scmp.eq.s32.totalorder %s28, 0
      %p259 = por %p257, %p258
      %p260 = scmp.ne.s32.totalorder %s248, %s249
      %p261 = scmp.eq.s32.totalorder %s29, 7
      %p262 = por %p260, %p261
      %p264 = scmp.ne.s32.totalorder %s249, %s263
      %p265 = scmp.eq.s32.totalorder %s29, 0
      %p266 = por %p264, %p265
      %s267 = ssub.s32 %s31, %s45
      %p268 = scmp.eq.s32.totalorder %s267, 0
      %s270 = sadd.s32 %s269, 1
      %s271 = scalar_select %p268, %s269, %s270
      %p274 = pneg %p268
      %p275 = scmp.eq.s32.totalorder %s23, 7
      %p276 = por %p274, %p275
      %p277 = scmp.ne.s32.totalorder %s269, %s272
      %p278 = scmp.eq.s32.totalorder %s23, 0
      %p279 = por %p277, %p278
      %p280 = scmp.ne.s32.totalorder %s269, %s272
      %p281 = scmp.eq.s32.totalorder %s28, 7
      %p282 = por %p280, %p281
      %p283 = scmp.ne.s32.totalorder %s272, %s273
      %p284 = scmp.eq.s32.totalorder %s28, 0
      %p285 = por %p283, %p284
      %p286 = scmp.ne.s32.totalorder %s272, %s273
      %p287 = scmp.eq.s32.totalorder %s29, 7
      %p288 = por %p286, %p287
      %p290 = scmp.ne.s32.totalorder %s273, %s289
      %p291 = scmp.eq.s32.totalorder %s29, 0
      %p292 = por %p290, %p291
      %p293 = scmp.le.s32.totalorder 1, %s23
      %p294 = scmp.lt.s32.totalorder %s23, 9
      %p295 = pnand %p293, %p294
      %p296 = pneg %p295
      // Predicated region
      $region9: #{tpu_custom_call.1} parent=5 // pred_check
        _
      $region10: #{tpu_custom_call.1} parent=5 // pred_check_branch
        %298 = sbr.rel (%p295) target = $region12
      $region11: #{tpu_custom_call.1} parent=5 // pred_region
        %s299 = ssub.s32 %s23, 1
        // Predicated region
        $region13: #{tpu_custom_call.1} parent=11 // pred_check
          %p300 = pneg %p91
        $region14: #{tpu_custom_call.1} parent=11 // pred_check_branch
          %302 = sbr.rel (%p300) target = $region16
        $region15: #{tpu_custom_call.1} parent=11 // pred_region
          _
        $region16: #{tpu_custom_call.1} parent=11 // pred_fallthru
          _
        // Predicated region
        $region17: #{tpu_custom_call.1} parent=11 // pred_check
          %p303 = pneg %p112
        $region18: #{tpu_custom_call.1} parent=11 // pred_check_branch
          %305 = sbr.rel (%p303) target = $region20
        $region19: #{tpu_custom_call.1} parent=11 // pred_region
          _
        $region20: #{tpu_custom_call.1} parent=11 // pred_fallthru
          _
        // Predicated region
        $region21: #{tpu_custom_call.1} parent=11 // pred_check
          %p306 = pneg %p133
        $region22: #{tpu_custom_call.1} parent=11 // pred_check_branch
          %308 = sbr.rel (%p306) target = $region24
        $region23: #{tpu_custom_call.1} parent=11 // pred_region
          _
        $region24: #{tpu_custom_call.1} parent=11 // pred_fallthru
          _
        // Predicated region
        $region25: #{tpu_custom_call.1} parent=11 // pred_check
          %p309 = pneg %p154
        $region26: #{tpu_custom_call.1} parent=11 // pred_check_branch
          %311 = sbr.rel (%p309) target = $region28
        $region27: #{tpu_custom_call.1} parent=11 // pred_region
          _
        $region28: #{tpu_custom_call.1} parent=11 // pred_fallthru
          _
        // Predicated region
        $region29: #{tpu_custom_call.1} parent=11 // pred_check
          %p312 = pneg %p175
        $region30: #{tpu_custom_call.1} parent=11 // pred_check_branch
          %314 = sbr.rel (%p312) target = $region32
        $region31: #{tpu_custom_call.1} parent=11 // pred_region
          _
        $region32: #{tpu_custom_call.1} parent=11 // pred_fallthru
          _
        // Predicated region
        $region33: #{tpu_custom_call.1} parent=11 // pred_check
          %p315 = pneg %p196
        $region34: #{tpu_custom_call.1} parent=11 // pred_check_branch
          %317 = sbr.rel (%p315) target = $region36
        $region35: #{tpu_custom_call.1} parent=11 // pred_region
          _
        $region36: #{tpu_custom_call.1} parent=11 // pred_fallthru
          _
        // Predicated region
        $region37: #{tpu_custom_call.1} parent=11 // pred_check
          %p318 = pneg %p217
        $region38: #{tpu_custom_call.1} parent=11 // pred_check_branch
          %320 = sbr.rel (%p318) target = $region40
        $region39: #{tpu_custom_call.1} parent=11 // pred_region
          _
        $region40: #{tpu_custom_call.1} parent=11 // pred_fallthru
          _
        // Predicated region
        $region41: #{tpu_custom_call.1} parent=11 // pred_check
          %p321 = pneg %p238
        $region42: #{tpu_custom_call.1} parent=11 // pred_check_branch
          %323 = sbr.rel (%p321) target = $region44
        $region43: #{tpu_custom_call.1} parent=11 // pred_region
          %s325 = ssub.s32 2048, 2048
          %326 = vsyncadd [#allocation9], %s325
          %s327 = sshll.u32 [#allocation8], 4
          %s328 = int_to_ptr.vmem [resolvable:$true] %s327
          %333 = dma.hbm_to_vmem [thread:$0]  %s8, 2048, %s328, [#allocation9], 128, 128, 8
        $region44: #{tpu_custom_call.1} parent=11 // pred_fallthru
          _
        // Predicated region
        $region45: #{tpu_custom_call.1} parent=11 // pred_check
          %p334 = pneg %p259
        $region46: #{tpu_custom_call.1} parent=11 // pred_check_branch
          %336 = sbr.rel (%p334) target = $region48
        $region47: #{tpu_custom_call.1} parent=11 // pred_region
          _
        $region48: #{tpu_custom_call.1} parent=11 // pred_fallthru
          _
      $region12: #{tpu_custom_call.1} parent=5 // pred_fallthru
        _
      %p337 = scmp.lt.s32.totalorder %s23, 8
      // Predicated region
      $region49: #{tpu_custom_call.1} parent=5 // pred_check
        %p338 = pneg %p337
      $region50: #{tpu_custom_call.1} parent=5 // pred_check_branch
        %340 = sbr.rel (%p338) target = $region52
      $region51: #{tpu_custom_call.1} parent=5 // pred_region
        // Predicated region
        $region53: #{tpu_custom_call.1} parent=51 // pred_check
          %p341 = pneg %p64
        $region54: #{tpu_custom_call.1} parent=51 // pred_check_branch
          %343 = sbr.rel (%p341) target = $region56
        $region55: #{tpu_custom_call.1} parent=51 // pred_region
          %s344 = sand.u32 %s54, 1
          %s345 = scalar_lea.sflag [#allocation6], %s344
          %s346 = sand.u32 %s54, 1
          %s347 = smul.addr %s346, 256
          %s348 = scalar_lea.vmem [#allocation5], %s347
          %s349 = smul.u32 32, %s31
          %s350 = smul.u32 2, %s32
          %s352 = ssub.s32 4096, 4096
          %353 = vsyncadd %s345, %s352
          %s354 = smul.addr %s349, 4
          %s355 = sadd.s32 %s350, %s354
          %s356 = smul.addr %s355, 64
          %s357 = scalar_lea.hbm %s0, %s356
          %s358 = sshll.u32 %s348, 4
          %s359 = int_to_ptr.vmem [resolvable:$true] %s358
          %364 = dma.hbm_to_vmem [thread:$0]  %s357, 4096, %s359, %s345, 256, 128, 8
        $region56: #{tpu_custom_call.1} parent=51 // pred_fallthru
          _
      $region52: #{tpu_custom_call.1} parent=5 // pred_fallthru
        _
      %p365 = scmp.le.s32.totalorder 1, %s23
      %p366 = scmp.lt.s32.totalorder %s23, 9
      %p367 = pnand %p365, %p366
      %p368 = pneg %p367
      // Predicated region
      $region57: #{tpu_custom_call.1} parent=5 // pred_check
        _
      $region58: #{tpu_custom_call.1} parent=5 // pred_check_branch
        %370 = sbr.rel (%p367) target = $region60
      $region59: #{tpu_custom_call.1} parent=5 // pred_region
        %s371 = ssub.s32 %s23, 1
        %s372 = sand.u32 %s57, 1
        %s373 = scalar_lea.sflag [#allocation6], %s372
        %s374 = sand.u32 %s57, 1
        %s375 = smul.addr %s374, 256
        %s376 = scalar_lea.vmem [#allocation5], %s375
        // Predicated region
        $region61: #{tpu_custom_call.1} parent=59 // pred_check
          %p377 = pneg %p70
        $region62: #{tpu_custom_call.1} parent=59 // pred_check_branch
          %379 = sbr.rel (%p377) target = $region64
        $region63: #{tpu_custom_call.1} parent=59 // pred_region
          %380 = dma.done %s373, 4096
        $region64: #{tpu_custom_call.1} parent=59 // pred_fallthru
          _
        // Predicated region
        $region65: #{tpu_custom_call.1} parent=59 // pred_check
          %p381 = pneg %p238
        $region66: #{tpu_custom_call.1} parent=59 // pred_check_branch
          %383 = sbr.rel (%p381) target = $region68
        $region67: #{tpu_custom_call.1} parent=59 // pred_region
          %384 = dma.done [#allocation9], 2048
        $region68: #{tpu_custom_call.1} parent=59 // pred_fallthru
          _
        %s385 = sand.u32 %s57, 1
        %s386 = scalar_lea.sflag [#allocation6], %s385
        %s387 = sand.u32 %s57, 1
        %s388 = smul.addr %s387, 256
        %s389 = scalar_lea.vmem [#allocation5], %s388
        %p390 = pneg %p70
        %p391 = pneg %p67
        %p392 = pneg %p91
        %p393 = pneg %p88
        %p394 = pneg %p112
        %p395 = pneg %p109
        %p396 = pneg %p133
        %p397 = pneg %p130
        %p398 = pneg %p154
        %p399 = pneg %p151
        %p400 = pneg %p175
        %p401 = pneg %p172
        %p402 = pneg %p196
        %p403 = pneg %p193
        %p404 = pneg %p217
        %p405 = pneg %p214
        %p406 = pneg %p238
        %p407 = pneg %p235
        %p408 = pneg %p259
        %p409 = pneg %p256
        %p410 = pneg %p285
        %p411 = pneg %p282
        %s412 = sand.u32 %s272, 1
        %s413 = scalar_lea.sflag [#allocation7], %s412
        %s414 = sand.u32 %s272, 1
        %s415 = smul.addr %s414, 256
        %s416 = scalar_lea.vmem [#allocation10], %s415
        %s417 = smul.u32 32, %s34
        %s418 = smul.u32 2, %s35
        %s419 = smul.u32 32, %s34
        %s421 = smul.u32 %s34, 256
        %s422 = smul.u32 %s35, 256
        %p423 = scmp.eq.s32.totalorder %s33, 0
        %p424 = scmp.eq.s32.totalorder %s34, 0
        %p425 = pnand %p423, %p424
        %p426 = pneg %p425
        // Predicated region
        $region69: #{tpu_custom_call.1} parent=59 // pred_check
          _
        $region70: #{tpu_custom_call.1} parent=59 // pred_check_branch
          %428 = sbr.rel (%p425) target = $region72
        $region71: #{tpu_custom_call.1} parent=59 // pred_region
          %s429 = scalar_lea.vmem %s1, %s422
          %v430 = vld [vmem:[%s429] sm:$0xff]
          %v431 = vld [vmem:[%s429 + $0x8] sm:$0xff]
          %v432 = vld [vmem:[%s429 + $0x10] sm:$0xff]
          %v433 = vld [vmem:[%s429 + $0x18] sm:$0xff]
          %v434 = vld [vmem:[%s429 + $0x20] sm:$0xff]
          %v435 = vld [vmem:[%s429 + $0x28] sm:$0xff]
          %v436 = vld [vmem:[%s429 + $0x30] sm:$0xff]
          %v437 = vld [vmem:[%s429 + $0x38] sm:$0xff]
          %v438 = vld [vmem:[%s429 + $0x40] sm:$0xff]
          %v439 = vld [vmem:[%s429 + $0x48] sm:$0xff]
          %v440 = vld [vmem:[%s429 + $0x50] sm:$0xff]
          %v441 = vld [vmem:[%s429 + $0x58] sm:$0xff]
          %v442 = vld [vmem:[%s429 + $0x60] sm:$0xff]
          %v443 = vld [vmem:[%s429 + $0x68] sm:$0xff]
          %v444 = vld [vmem:[%s429 + $0x70] sm:$0xff]
          %v445 = vld [vmem:[%s429 + $0x78] sm:$0xff]
          %v446 = vld [vmem:[%s429 + $0x80] sm:$0xff]
          %v447 = vld [vmem:[%s429 + $0x88] sm:$0xff]
          %v448 = vld [vmem:[%s429 + $0x90] sm:$0xff]
          %v449 = vld [vmem:[%s429 + $0x98] sm:$0xff]
          %v450 = vld [vmem:[%s429 + $0xa0] sm:$0xff]
          %v451 = vld [vmem:[%s429 + $0xa8] sm:$0xff]
          %v452 = vld [vmem:[%s429 + $0xb0] sm:$0xff]
          %v453 = vld [vmem:[%s429 + $0xb8] sm:$0xff]
          %v454 = vld [vmem:[%s429 + $0xc0] sm:$0xff]
          %v455 = vld [vmem:[%s429 + $0xc8] sm:$0xff]
          %v456 = vld [vmem:[%s429 + $0xd0] sm:$0xff]
          %v457 = vld [vmem:[%s429 + $0xd8] sm:$0xff]
          %v458 = vld [vmem:[%s429 + $0xe0] sm:$0xff]
          %v459 = vld [vmem:[%s429 + $0xe8] sm:$0xff]
          %v460 = vld [vmem:[%s429 + $0xf0] sm:$0xff]
          %v461 = vld [vmem:[%s429 + $0xf8] sm:$0xff]
          %v462 = vld [vmem:[%s2] sm:$0xff]
          %v463 = vld [vmem:[%s2 + $0x8] sm:$0xff]
          %v464 = vld [vmem:[%s3] sm:$0x1]
          %v466 = vlaneseq
          %v467 = vshrl.u32 %v466, 7
          %v468 = vsub.s32 0, %v467
          %v469 = vrot.slane %v464, %v468
          %vm471 = vcmask 130048
          %v473 = vsel %vm471, %v430, 0
          %v476 = vsel %vm471, %v431, 0
          %v479 = vsel %vm471, %v432, 0
          %v482 = vsel %vm471, %v433, 0
          %v485 = vsel %vm471, %v434, 0
          %v488 = vsel %vm471, %v435, 0
          %v491 = vsel %vm471, %v436, 0
          %v494 = vsel %vm471, %v437, 0
          %v497 = vsel %vm471, %v438, 0
          %v500 = vsel %vm471, %v439, 0
          %v503 = vsel %vm471, %v440, 0
          %v506 = vsel %vm471, %v441, 0
          %v509 = vsel %vm471, %v442, 0
          %v512 = vsel %vm471, %v443, 0
          %v515 = vsel %vm471, %v444, 0
          %v518 = vsel %vm471, %v445, 0
          %v521 = vsel %vm471, %v446, 0
          %v524 = vsel %vm471, %v447, 0
          %v527 = vsel %vm471, %v448, 0
          %v530 = vsel %vm471, %v449, 0
          %v533 = vsel %vm471, %v450, 0
          %v536 = vsel %vm471, %v451, 0
          %v539 = vsel %vm471, %v452, 0
          %v542 = vsel %vm471, %v453, 0
          %v545 = vsel %vm471, %v454, 0
          %v548 = vsel %vm471, %v455, 0
          %v551 = vsel %vm471, %v456, 0
          %v554 = vsel %vm471, %v457, 0
          %v557 = vsel %vm471, %v458, 0
          %v560 = vsel %vm471, %v459, 0
          %v563 = vsel %vm471, %v460, 0
          %v566 = vsel %vm471, %v461, 0
          %568 = vmatprep.subr.mxu0 0.0
          %569 = vmatpush1.msra.mxu0 %v462
          %570 = vmatprep.subr.mxu0 0.0
          %571 = vmatpush1.msra.mxu0 %v463
          %572 = vmatprep.subr.mxu0 0.0
          %573 = vmatpush1.msra.mxu0 0.0
          %574 = vmatprep.subr.mxu0 0.0
          %575 = vmatpush1.msra.mxu0 0.0
          %576 = vmatprep.subr.mxu0 0.0
          %577 = vmatpush1.msra.mxu0 0.0
          %578 = vmatprep.subr.mxu0 0.0
          %579 = vmatpush1.msra.mxu0 0.0
          %580 = vmatprep.subr.mxu0 0.0
          %581 = vmatpush1.msra.mxu0 0.0
          %582 = vmatprep.subr.mxu0 0.0
          %583 = vmatpush1.msra.mxu0 0.0
          %584 = vmatprep.subr.mxu0 0.0
          %585 = vmatpush1.msra.mxu0 0.0
          %586 = vmatprep.subr.mxu0 0.0
          %587 = vmatpush1.msra.mxu0 0.0
          %588 = vmatprep.subr.mxu0 0.0
          %589 = vmatpush1.msra.mxu0 0.0
          %590 = vmatprep.subr.mxu0 0.0
          %591 = vmatpush1.msra.mxu0 0.0
          %592 = vmatprep.subr.mxu0 0.0
          %593 = vmatpush1.msra.mxu0 0.0
          %594 = vmatprep.subr.mxu0 0.0
          %595 = vmatpush1.msra.mxu0 0.0
          %596 = vmatprep.subr.mxu0 0.0
          %597 = vmatpush1.msra.mxu0 0.0
          %598 = vmatprep.subr.mxu0 0.0
          %599 = vmatpush1.msra.mxu0 0.0
          %600 = vmatprep.subr.mxu0 0.0
          %601 = vmatpush1.msra.mxu0 0.0
          %602 = vmatprep.subr.mxu0 0.0
          %603 = vmatpush1.msra.mxu0 0.0
          %604 = vmatprep.subr.mxu0 0.0
          %605 = vmatpush1.msra.mxu0 0.0
          %606 = vmatprep.subr.mxu0 0.0
          %607 = vmatpush1.msra.mxu0 0.0
          %608 = vmatprep.subr.mxu0 0.0
          %609 = vmatpush1.msra.mxu0 0.0
          %610 = vmatprep.subr.mxu0 0.0
          %611 = vmatpush1.msra.mxu0 0.0
          %612 = vmatprep.subr.mxu0 0.0
          %613 = vmatpush1.msra.mxu0 0.0
          %614 = vmatprep.subr.mxu0 0.0
          %615 = vmatpush1.msra.mxu0 0.0
          %616 = vmatprep.subr.mxu0 0.0
          %617 = vmatpush1.msra.mxu0 0.0
          %618 = vmatprep.subr.mxu0 0.0
          %619 = vmatpush1.msra.mxu0 0.0
          %620 = vmatprep.subr.mxu0 0.0
          %621 = vmatpush1.msra.mxu0 0.0
          %622 = vmatprep.subr.mxu0 0.0
          %623 = vmatpush1.msra.mxu0 0.0
          %624 = vmatprep.subr.mxu0 0.0
          %625 = vmatpush1.msra.mxu0 0.0
          %626 = vmatprep.subr.mxu0 0.0
          %627 = vmatpush1.msra.mxu0 0.0
          %628 = vmatprep.subr.mxu0 0.0
          %629 = vmatpush1.msra.mxu0 0.0
          %630 = vmatprep.subr.mxu0 0.0
          %631 = vmatpush1.msra.mxu0 0.0
          %632 = vmatprep.mubr.f32.mxu0 0.0
          %633 = vmatmul.mubr.f32.gmra.mrb[0].mxu0 %v473
          %v634 = vpop.f32.mrb[0].mxu0
          %v635 = vadd.f32 %v469, %v634
          %v636 = vpop.f32.mrb[0].mxu0
          %637 = vmatprep.mubr.f32.mxu0 0.0
          %638 = vmatmul.mubr.f32.gmra.mrb[0].mxu0 %v476
          %v639 = vpop.f32.mrb[0].mxu0
          %v640 = vadd.f32 %v469, %v639
          %v641 = vpop.f32.mrb[0].mxu0
          %642 = vmatprep.mubr.f32.mxu0 0.0
          %643 = vmatmul.mubr.f32.gmra.mrb[0].mxu0 %v479
          %v644 = vpop.f32.mrb[0].mxu0
          %v645 = vadd.f32 %v469, %v644
          %v646 = vpop.f32.mrb[0].mxu0
          %647 = vmatprep.mubr.f32.mxu0 0.0
          %648 = vmatmul.mubr.f32.gmra.mrb[0].mxu0 %v482
          %v649 = vpop.f32.mrb[0].mxu0
          %v650 = vadd.f32 %v469, %v649
          %v651 = vpop.f32.mrb[0].mxu0
          %652 = vmatprep.mubr.f32.mxu0 0.0
          %653 = vmatmul.mubr.f32.gmra.mrb[0].mxu0 %v485
          %v654 = vpop.f32.mrb[0].mxu0
          %v655 = vadd.f32 %v469, %v654
          %v656 = vpop.f32.mrb[0].mxu0
          %657 = vmatprep.mubr.f32.mxu0 0.0
          %658 = vmatmul.mubr.f32.gmra.mrb[0].mxu0 %v488
          %v659 = vpop.f32.mrb[0].mxu0
          %v660 = vadd.f32 %v469, %v659
          %v661 = vpop.f32.mrb[0].mxu0
          %662 = vmatprep.mubr.f32.mxu0 0.0
          %663 = vmatmul.mubr.f32.gmra.mrb[0].mxu0 %v491
          %v664 = vpop.f32.mrb[0].mxu0
          %v665 = vadd.f32 %v469, %v664
          %v666 = vpop.f32.mrb[0].mxu0
          %667 = vmatprep.mubr.f32.mxu0 0.0
          %668 = vmatmul.mubr.f32.gmra.mrb[0].mxu0 %v494
          %v669 = vpop.f32.mrb[0].mxu0
          %v670 = vadd.f32 %v469, %v669
          %v671 = vpop.f32.mrb[0].mxu0
          %672 = vmatprep.mubr.f32.mxu0 0.0
          %673 = vmatmul.mubr.f32.gmra.mrb[0].mxu0 %v497
          %v674 = vpop.f32.mrb[0].mxu0
          %v675 = vadd.f32 %v469, %v674
          %v676 = vpop.f32.mrb[0].mxu0
          %677 = vmatprep.mubr.f32.mxu0 0.0
          %678 = vmatmul.mubr.f32.gmra.mrb[0].mxu0 %v500
          %v679 = vpop.f32.mrb[0].mxu0
          %v680 = vadd.f32 %v469, %v679
          %v681 = vpop.f32.mrb[0].mxu0
          %682 = vmatprep.mubr.f32.mxu0 0.0
          %683 = vmatmul.mubr.f32.gmra.mrb[0].mxu0 %v503
          %v684 = vpop.f32.mrb[0].mxu0
          %v685 = vadd.f32 %v469, %v684
          %v686 = vpop.f32.mrb[0].mxu0
          %687 = vmatprep.mubr.f32.mxu0 0.0
          %688 = vmatmul.mubr.f32.gmra.mrb[0].mxu0 %v506
          %v689 = vpop.f32.mrb[0].mxu0
          %v690 = vadd.f32 %v469, %v689
          %v691 = vpop.f32.mrb[0].mxu0
          %692 = vmatprep.mubr.f32.mxu0 0.0
          %693 = vmatmul.mubr.f32.gmra.mrb[0].mxu0 %v509
          %v694 = vpop.f32.mrb[0].mxu0
          %v695 = vadd.f32 %v469, %v694
          %v696 = vpop.f32.mrb[0].mxu0
          %697 = vmatprep.mubr.f32.mxu0 0.0
          %698 = vmatmul.mubr.f32.gmra.mrb[0].mxu0 %v512
          %v699 = vpop.f32.mrb[0].mxu0
          %v700 = vadd.f32 %v469, %v699
          %v701 = vpop.f32.mrb[0].mxu0
          %702 = vmatprep.mubr.f32.mxu0 0.0
          %703 = vmatmul.mubr.f32.gmra.mrb[0].mxu0 %v515
          %v704 = vpop.f32.mrb[0].mxu0
          %v705 = vadd.f32 %v469, %v704
          %v706 = vpop.f32.mrb[0].mxu0
          %707 = vmatprep.mubr.f32.mxu0 0.0
          %708 = vmatmul.mubr.f32.gmra.mrb[0].mxu0 %v518
          %v709 = vpop.f32.mrb[0].mxu0
          %v710 = vadd.f32 %v469, %v709
          %v711 = vpop.f32.mrb[0].mxu0
          %712 = vmatprep.mubr.f32.mxu0 0.0
          %713 = vmatmul.mubr.f32.gmra.mrb[0].mxu0 %v521
          %v714 = vpop.f32.mrb[0].mxu0
          %v715 = vadd.f32 %v469, %v714
          %v716 = vpop.f32.mrb[0].mxu0
          %717 = vmatprep.mubr.f32.mxu0 0.0
          %718 = vmatmul.mubr.f32.gmra.mrb[0].mxu0 %v524
          %v719 = vpop.f32.mrb[0].mxu0
          %v720 = vadd.f32 %v469, %v719
          %v721 = vpop.f32.mrb[0].mxu0
          %722 = vmatprep.mubr.f32.mxu0 0.0
          %723 = vmatmul.mubr.f32.gmra.mrb[0].mxu0 %v527
          %v724 = vpop.f32.mrb[0].mxu0
          %v725 = vadd.f32 %v469, %v724
          %v726 = vpop.f32.mrb[0].mxu0
          %727 = vmatprep.mubr.f32.mxu0 0.0
          %728 = vmatmul.mubr.f32.gmra.mrb[0].mxu0 %v530
          %v729 = vpop.f32.mrb[0].mxu0
          %v730 = vadd.f32 %v469, %v729
          %v731 = vpop.f32.mrb[0].mxu0
          %732 = vmatprep.mubr.f32.mxu0 0.0
          %733 = vmatmul.mubr.f32.gmra.mrb[0].mxu0 %v533
          %v734 = vpop.f32.mrb[0].mxu0
          %v735 = vadd.f32 %v469, %v734
          %v736 = vpop.f32.mrb[0].mxu0
          %737 = vmatprep.mubr.f32.mxu0 0.0
          %738 = vmatmul.mubr.f32.gmra.mrb[0].mxu0 %v536
          %v739 = vpop.f32.mrb[0].mxu0
          %v740 = vadd.f32 %v469, %v739
          %v741 = vpop.f32.mrb[0].mxu0
          %742 = vmatprep.mubr.f32.mxu0 0.0
          %743 = vmatmul.mubr.f32.gmra.mrb[0].mxu0 %v539
          %v744 = vpop.f32.mrb[0].mxu0
          %v745 = vadd.f32 %v469, %v744
          %v746 = vpop.f32.mrb[0].mxu0
          %747 = vmatprep.mubr.f32.mxu0 0.0
          %748 = vmatmul.mubr.f32.gmra.mrb[0].mxu0 %v542
          %v749 = vpop.f32.mrb[0].mxu0
          %v750 = vadd.f32 %v469, %v749
          %v751 = vpop.f32.mrb[0].mxu0
          %752 = vmatprep.mubr.f32.mxu0 0.0
          %753 = vmatmul.mubr.f32.gmra.mrb[0].mxu0 %v545
          %v754 = vpop.f32.mrb[0].mxu0
          %v755 = vadd.f32 %v469, %v754
          %v756 = vpop.f32.mrb[0].mxu0
          %757 = vmatprep.mubr.f32.mxu0 0.0
          %758 = vmatmul.mubr.f32.gmra.mrb[0].mxu0 %v548
          %v759 = vpop.f32.mrb[0].mxu0
          %v760 = vadd.f32 %v469, %v759
          %v761 = vpop.f32.mrb[0].mxu0
          %762 = vmatprep.mubr.f32.mxu0 0.0
          %763 = vmatmul.mubr.f32.gmra.mrb[0].mxu0 %v551
          %v764 = vpop.f32.mrb[0].mxu0
          %v765 = vadd.f32 %v469, %v764
          %v766 = vpop.f32.mrb[0].mxu0
          %767 = vmatprep.mubr.f32.mxu0 0.0
          %768 = vmatmul.mubr.f32.gmra.mrb[0].mxu0 %v554
          %v769 = vpop.f32.mrb[0].mxu0
          %v770 = vadd.f32 %v469, %v769
          %v771 = vpop.f32.mrb[0].mxu0
          %772 = vmatprep.mubr.f32.mxu0 0.0
          %773 = vmatmul.mubr.f32.gmra.mrb[0].mxu0 %v557
          %v774 = vpop.f32.mrb[0].mxu0
          %v775 = vadd.f32 %v469, %v774
          %v776 = vpop.f32.mrb[0].mxu0
          %777 = vmatprep.mubr.f32.mxu0 0.0
          %778 = vmatmul.mubr.f32.gmra.mrb[0].mxu0 %v560
          %v779 = vpop.f32.mrb[0].mxu0
          %v780 = vadd.f32 %v469, %v779
          %v781 = vpop.f32.mrb[0].mxu0
          %782 = vmatprep.mubr.f32.mxu0 0.0
          %783 = vmatmul.mubr.f32.gmra.mrb[0].mxu0 %v563
          %v784 = vpop.f32.mrb[0].mxu0
          %v785 = vadd.f32 %v469, %v784
          %v786 = vpop.f32.mrb[0].mxu0
          %787 = vmatprep.mubr.f32.mxu0 0.0
          %788 = vmatmul.mubr.f32.gmra.mrb[0].mxu0 %v566
          %v789 = vpop.f32.mrb[0].mxu0
          %v790 = vadd.f32 %v469, %v789
          %v791 = vpop.f32.mrb[0].mxu0
          %792 = vdwg.mxu0
          %v793 = vmax.f32 %v635, 0.0
          %v794 = vmax.f32 %v640, 0.0
          %v795 = vmax.f32 %v645, 0.0
          %v796 = vmax.f32 %v650, 0.0
          %v797 = vmax.f32 %v655, 0.0
          %v798 = vmax.f32 %v660, 0.0
          %v799 = vmax.f32 %v665, 0.0
          %v800 = vmax.f32 %v670, 0.0
          %v801 = vmax.f32 %v675, 0.0
          %v802 = vmax.f32 %v680, 0.0
          %v803 = vmax.f32 %v685, 0.0
          %v804 = vmax.f32 %v690, 0.0
          %v805 = vmax.f32 %v695, 0.0
          %v806 = vmax.f32 %v700, 0.0
          %v807 = vmax.f32 %v705, 0.0
          %v808 = vmax.f32 %v710, 0.0
          %v809 = vmax.f32 %v715, 0.0
          %v810 = vmax.f32 %v720, 0.0
          %v811 = vmax.f32 %v725, 0.0
          %v812 = vmax.f32 %v730, 0.0
          %v813 = vmax.f32 %v735, 0.0
          %v814 = vmax.f32 %v740, 0.0
          %v815 = vmax.f32 %v745, 0.0
          %v816 = vmax.f32 %v750, 0.0
          %v817 = vmax.f32 %v755, 0.0
          %v818 = vmax.f32 %v760, 0.0
          %v819 = vmax.f32 %v765, 0.0
          %v820 = vmax.f32 %v770, 0.0
          %v821 = vmax.f32 %v775, 0.0
          %v822 = vmax.f32 %v780, 0.0
          %v823 = vmax.f32 %v785, 0.0
          %v824 = vmax.f32 %v790, 0.0
          %v825 = vld [vmem:[%s4] sm:$0xff]
          %v826 = vld [vmem:[%s4 + $0x8] sm:$0xff]
          %v827 = vld [vmem:[%s4 + $0x10] sm:$0xff]
          %v828 = vld [vmem:[%s4 + $0x18] sm:$0xff]
          %v829 = vld [vmem:[%s4 + $0x20] sm:$0xff]
          %v830 = vld [vmem:[%s4 + $0x28] sm:$0xff]
          %v831 = vld [vmem:[%s4 + $0x30] sm:$0xff]
          %v832 = vld [vmem:[%s4 + $0x38] sm:$0xff]
          %v833 = vld [vmem:[%s4 + $0x40] sm:$0xff]
          %v834 = vld [vmem:[%s4 + $0x48] sm:$0xff]
          %v835 = vld [vmem:[%s4 + $0x50] sm:$0xff]
          %v836 = vld [vmem:[%s4 + $0x58] sm:$0xff]
          %v837 = vld [vmem:[%s4 + $0x60] sm:$0xff]
          %v838 = vld [vmem:[%s4 + $0x68] sm:$0xff]
          %v839 = vld [vmem:[%s4 + $0x70] sm:$0xff]
          %v840 = vld [vmem:[%s4 + $0x78] sm:$0xff]
          %v841 = vld [vmem:[%s5] sm:$0x1]
          %v843 = vlaneseq
          %v844 = vshrl.u32 %v843, 7
          %v845 = vsub.s32 0, %v844
          %v846 = vrot.slane %v841, %v845
          %848 = vmatprep.subr.mxu0 0.0
          %849 = vmatpush1.msra.mxu0 %v825
          %850 = vmatprep.subr.mxu0 0.0
          %851 = vmatpush1.msra.mxu0 %v826
          %852 = vmatprep.subr.mxu0 0.0
          %853 = vmatpush1.msra.mxu0 %v827
          %854 = vmatprep.subr.mxu0 0.0
          %855 = vmatpush1.msra.mxu0 %v828
          %856 = vmatprep.subr.mxu0 0.0
          %857 = vmatpush1.msra.mxu0 %v829
          %858 = vmatprep.subr.mxu0 0.0
          %859 = vmatpush1.msra.mxu0 %v830
          %860 = vmatprep.subr.mxu0 0.0
          %861 = vmatpush1.msra.mxu0 %v831
          %862 = vmatprep.subr.mxu0 0.0
          %863 = vmatpush1.msra.mxu0 %v832
          %864 = vmatprep.subr.mxu0 0.0
          %865 = vmatpush1.msra.mxu0 %v833
          %866 = vmatprep.subr.mxu0 0.0
          %867 = vmatpush1.msra.mxu0 %v834
          %868 = vmatprep.subr.mxu0 0.0
          %869 = vmatpush1.msra.mxu0 %v835
          %870 = vmatprep.subr.mxu0 0.0
          %871 = vmatpush1.msra.mxu0 %v836
          %872 = vmatprep.subr.mxu0 0.0
          %873 = vmatpush1.msra.mxu0 %v837
          %874 = vmatprep.subr.mxu0 0.0
          %875 = vmatpush1.msra.mxu0 %v838
          %876 = vmatprep.subr.mxu0 0.0
          %877 = vmatpush1.msra.mxu0 %v839
          %878 = vmatprep.subr.mxu0 0.0
          %879 = vmatpush1.msra.mxu0 %v840
          %880 = vmatprep.subr.mxu0 0.0
          %881 = vmatpush1.msra.mxu0 0.0
          %882 = vmatprep.subr.mxu0 0.0
          %883 = vmatpush1.msra.mxu0 0.0
          %884 = vmatprep.subr.mxu0 0.0
          %885 = vmatpush1.msra.mxu0 0.0
          %886 = vmatprep.subr.mxu0 0.0
          %887 = vmatpush1.msra.mxu0 0.0
          %888 = vmatprep.subr.mxu0 0.0
          %889 = vmatpush1.msra.mxu0 0.0
          %890 = vmatprep.subr.mxu0 0.0
          %891 = vmatpush1.msra.mxu0 0.0
          %892 = vmatprep.subr.mxu0 0.0
          %893 = vmatpush1.msra.mxu0 0.0
          %894 = vmatprep.subr.mxu0 0.0
          %895 = vmatpush1.msra.mxu0 0.0
          %896 = vmatprep.subr.mxu0 0.0
          %897 = vmatpush1.msra.mxu0 0.0
          %898 = vmatprep.subr.mxu0 0.0
          %899 = vmatpush1.msra.mxu0 0.0
          %900 = vmatprep.subr.mxu0 0.0
          %901 = vmatpush1.msra.mxu0 0.0
          %902 = vmatprep.subr.mxu0 0.0
          %903 = vmatpush1.msra.mxu0 0.0
          %904 = vmatprep.subr.mxu0 0.0
          %905 = vmatpush1.msra.mxu0 0.0
          %906 = vmatprep.subr.mxu0 0.0
          %907 = vmatpush1.msra.mxu0 0.0
          %908 = vmatprep.subr.mxu0 0.0
          %909 = vmatpush1.msra.mxu0 0.0
          %910 = vmatprep.subr.mxu0 0.0
          %911 = vmatpush1.msra.mxu0 0.0
          %912 = vmatprep.mubr.f32.mxu0 0.0
          %913 = vmatmul.mubr.f32.gmra.mrb[0].mxu0 %v793
          %v914 = vpop.f32.mrb[0].mxu0
          %v915 = vadd.f32 %v846, %v914
          %v916 = vpop.f32.mrb[0].mxu0
          %917 = vmatprep.mubr.f32.mxu0 0.0
          %918 = vmatmul.mubr.f32.gmra.mrb[0].mxu0 %v794
          %v919 = vpop.f32.mrb[0].mxu0
          %v920 = vadd.f32 %v846, %v919
          %v921 = vpop.f32.mrb[0].mxu0
          %922 = vmatprep.mubr.f32.mxu0 0.0
          %923 = vmatmul.mubr.f32.gmra.mrb[0].mxu0 %v795
          %v924 = vpop.f32.mrb[0].mxu0
          %v925 = vadd.f32 %v846, %v924
          %v926 = vpop.f32.mrb[0].mxu0
          %927 = vmatprep.mubr.f32.mxu0 0.0
          %928 = vmatmul.mubr.f32.gmra.mrb[0].mxu0 %v796
          %v929 = vpop.f32.mrb[0].mxu0
          %v930 = vadd.f32 %v846, %v929
          %v931 = vpop.f32.mrb[0].mxu0
          %932 = vmatprep.mubr.f32.mxu0 0.0
          %933 = vmatmul.mubr.f32.gmra.mrb[0].mxu0 %v797
          %v934 = vpop.f32.mrb[0].mxu0
          %v935 = vadd.f32 %v846, %v934
          %v936 = vpop.f32.mrb[0].mxu0
          %937 = vmatprep.mubr.f32.mxu0 0.0
          %938 = vmatmul.mubr.f32.gmra.mrb[0].mxu0 %v798
          %v939 = vpop.f32.mrb[0].mxu0
          %v940 = vadd.f32 %v846, %v939
          %v941 = vpop.f32.mrb[0].mxu0
          %942 = vmatprep.mubr.f32.mxu0 0.0
          %943 = vmatmul.mubr.f32.gmra.mrb[0].mxu0 %v799
          %v944 = vpop.f32.mrb[0].mxu0
          %v945 = vadd.f32 %v846, %v944
          %v946 = vpop.f32.mrb[0].mxu0
          %947 = vmatprep.mubr.f32.mxu0 0.0
          %948 = vmatmul.mubr.f32.gmra.mrb[0].mxu0 %v800
          %v949 = vpop.f32.mrb[0].mxu0
          %v950 = vadd.f32 %v846, %v949
          %v951 = vpop.f32.mrb[0].mxu0
          %952 = vmatprep.mubr.f32.mxu0 0.0
          %953 = vmatmul.mubr.f32.gmra.mrb[0].mxu0 %v801
          %v954 = vpop.f32.mrb[0].mxu0
          %v955 = vadd.f32 %v846, %v954
          %v956 = vpop.f32.mrb[0].mxu0
          %957 = vmatprep.mubr.f32.mxu0 0.0
          %958 = vmatmul.mubr.f32.gmra.mrb[0].mxu0 %v802
          %v959 = vpop.f32.mrb[0].mxu0
          %v960 = vadd.f32 %v846, %v959
          %v961 = vpop.f32.mrb[0].mxu0
          %962 = vmatprep.mubr.f32.mxu0 0.0
          %963 = vmatmul.mubr.f32.gmra.mrb[0].mxu0 %v803
          %v964 = vpop.f32.mrb[0].mxu0
          %v965 = vadd.f32 %v846, %v964
          %v966 = vpop.f32.mrb[0].mxu0
          %967 = vmatprep.mubr.f32.mxu0 0.0
          %968 = vmatmul.mubr.f32.gmra.mrb[0].mxu0 %v804
          %v969 = vpop.f32.mrb[0].mxu0
          %v970 = vadd.f32 %v846, %v969
          %v971 = vpop.f32.mrb[0].mxu0
          %972 = vmatprep.mubr.f32.mxu0 0.0
          %973 = vmatmul.mubr.f32.gmra.mrb[0].mxu0 %v805
          %v974 = vpop.f32.mrb[0].mxu0
          %v975 = vadd.f32 %v846, %v974
          %v976 = vpop.f32.mrb[0].mxu0
          %977 = vmatprep.mubr.f32.mxu0 0.0
          %978 = vmatmul.mubr.f32.gmra.mrb[0].mxu0 %v806
          %v979 = vpop.f32.mrb[0].mxu0
          %v980 = vadd.f32 %v846, %v979
          %v981 = vpop.f32.mrb[0].mxu0
          %982 = vmatprep.mubr.f32.mxu0 0.0
          %983 = vmatmul.mubr.f32.gmra.mrb[0].mxu0 %v807
          %v984 = vpop.f32.mrb[0].mxu0
          %v985 = vadd.f32 %v846, %v984
          %v986 = vpop.f32.mrb[0].mxu0
          %987 = vmatprep.mubr.f32.mxu0 0.0
          %988 = vmatmul.mubr.f32.gmra.mrb[0].mxu0 %v808
          %v989 = vpop.f32.mrb[0].mxu0
          %v990 = vadd.f32 %v846, %v989
          %v991 = vpop.f32.mrb[0].mxu0
          %992 = vmatprep.mubr.f32.mxu0 0.0
          %993 = vmatmul.mubr.f32.gmra.mrb[0].mxu0 %v809
          %v994 = vpop.f32.mrb[0].mxu0
          %v995 = vadd.f32 %v846, %v994
          %v996 = vpop.f32.mrb[0].mxu0
          %997 = vmatprep.mubr.f32.mxu0 0.0
          %998 = vmatmul.mubr.f32.gmra.mrb[0].mxu0 %v810
          %v999 = vpop.f32.mrb[0].mxu0
          %v1000 = vadd.f32 %v846, %v999
          %v1001 = vpop.f32.mrb[0].mxu0
          %1002 = vmatprep.mubr.f32.mxu0 0.0
          %1003 = vmatmul.mubr.f32.gmra.mrb[0].mxu0 %v811
          %v1004 = vpop.f32.mrb[0].mxu0
          %v1005 = vadd.f32 %v846, %v1004
          %v1006 = vpop.f32.mrb[0].mxu0
          %1007 = vmatprep.mubr.f32.mxu0 0.0
          %1008 = vmatmul.mubr.f32.gmra.mrb[0].mxu0 %v812
          %v1009 = vpop.f32.mrb[0].mxu0
          %v1010 = vadd.f32 %v846, %v1009
          %v1011 = vpop.f32.mrb[0].mxu0
          %1012 = vmatprep.mubr.f32.mxu0 0.0
          %1013 = vmatmul.mubr.f32.gmra.mrb[0].mxu0 %v813
          %v1014 = vpop.f32.mrb[0].mxu0
          %v1015 = vadd.f32 %v846, %v1014
          %v1016 = vpop.f32.mrb[0].mxu0
          %1017 = vmatprep.mubr.f32.mxu0 0.0
          %1018 = vmatmul.mubr.f32.gmra.mrb[0].mxu0 %v814
          %v1019 = vpop.f32.mrb[0].mxu0
          %v1020 = vadd.f32 %v846, %v1019
          %v1021 = vpop.f32.mrb[0].mxu0
          %1022 = vmatprep.mubr.f32.mxu0 0.0
          %1023 = vmatmul.mubr.f32.gmra.mrb[0].mxu0 %v815
          %v1024 = vpop.f32.mrb[0].mxu0
          %v1025 = vadd.f32 %v846, %v1024
          %v1026 = vpop.f32.mrb[0].mxu0
          %1027 = vmatprep.mubr.f32.mxu0 0.0
          %1028 = vmatmul.mubr.f32.gmra.mrb[0].mxu0 %v816
          %v1029 = vpop.f32.mrb[0].mxu0
          %v1030 = vadd.f32 %v846, %v1029
          %v1031 = vpop.f32.mrb[0].mxu0
          %1032 = vmatprep.mubr.f32.mxu0 0.0
          %1033 = vmatmul.mubr.f32.gmra.mrb[0].mxu0 %v817
          %v1034 = vpop.f32.mrb[0].mxu0
          %v1035 = vadd.f32 %v846, %v1034
          %v1036 = vpop.f32.mrb[0].mxu0
          %1037 = vmatprep.mubr.f32.mxu0 0.0
          %1038 = vmatmul.mubr.f32.gmra.mrb[0].mxu0 %v818
          %v1039 = vpop.f32.mrb[0].mxu0
          %v1040 = vadd.f32 %v846, %v1039
          %v1041 = vpop.f32.mrb[0].mxu0
          %1042 = vmatprep.mubr.f32.mxu0 0.0
          %1043 = vmatmul.mubr.f32.gmra.mrb[0].mxu0 %v819
          %v1044 = vpop.f32.mrb[0].mxu0
          %v1045 = vadd.f32 %v846, %v1044
          %v1046 = vpop.f32.mrb[0].mxu0
          %1047 = vmatprep.mubr.f32.mxu0 0.0
          %1048 = vmatmul.mubr.f32.gmra.mrb[0].mxu0 %v820
          %v1049 = vpop.f32.mrb[0].mxu0
          %v1050 = vadd.f32 %v846, %v1049
          %v1051 = vpop.f32.mrb[0].mxu0
          %1052 = vmatprep.mubr.f32.mxu0 0.0
          %1053 = vmatmul.mubr.f32.gmra.mrb[0].mxu0 %v821
          %v1054 = vpop.f32.mrb[0].mxu0
          %v1055 = vadd.f32 %v846, %v1054
          %v1056 = vpop.f32.mrb[0].mxu0
          %1057 = vmatprep.mubr.f32.mxu0 0.0
          %1058 = vmatmul.mubr.f32.gmra.mrb[0].mxu0 %v822
          %v1059 = vpop.f32.mrb[0].mxu0
          %v1060 = vadd.f32 %v846, %v1059
          %v1061 = vpop.f32.mrb[0].mxu0
          %1062 = vmatprep.mubr.f32.mxu0 0.0
          %1063 = vmatmul.mubr.f32.gmra.mrb[0].mxu0 %v823
          %v1064 = vpop.f32.mrb[0].mxu0
          %v1065 = vadd.f32 %v846, %v1064
          %v1066 = vpop.f32.mrb[0].mxu0
          %1067 = vmatprep.mubr.f32.mxu0 0.0
          %1068 = vmatmul.mubr.f32.gmra.mrb[0].mxu0 %v824
          %v1069 = vpop.f32.mrb[0].mxu0
          %v1070 = vadd.f32 %v846, %v1069
          %v1071 = vpop.f32.mrb[0].mxu0
          %1072 = vdwg.mxu0
          %v1073 = vmax.f32 %v915, 0.0
          %v1074 = vmax.f32 %v920, 0.0
          %v1075 = vmax.f32 %v925, 0.0
          %v1076 = vmax.f32 %v930, 0.0
          %v1077 = vmax.f32 %v935, 0.0
          %v1078 = vmax.f32 %v940, 0.0
          %v1079 = vmax.f32 %v945, 0.0
          %v1080 = vmax.f32 %v950, 0.0
          %v1081 = vmax.f32 %v955, 0.0
          %v1082 = vmax.f32 %v960, 0.0
          %v1083 = vmax.f32 %v965, 0.0
          %v1084 = vmax.f32 %v970, 0.0
          %v1085 = vmax.f32 %v975, 0.0
          %v1086 = vmax.f32 %v980, 0.0
          %v1087 = vmax.f32 %v985, 0.0
          %v1088 = vmax.f32 %v990, 0.0
          %v1089 = vmax.f32 %v995, 0.0
          %v1090 = vmax.f32 %v1000, 0.0
          %v1091 = vmax.f32 %v1005, 0.0
          %v1092 = vmax.f32 %v1010, 0.0
          %v1093 = vmax.f32 %v1015, 0.0
          %v1094 = vmax.f32 %v1020, 0.0
          %v1095 = vmax.f32 %v1025, 0.0
          %v1096 = vmax.f32 %v1030, 0.0
          %v1097 = vmax.f32 %v1035, 0.0
          %v1098 = vmax.f32 %v1040, 0.0
          %v1099 = vmax.f32 %v1045, 0.0
          %v1100 = vmax.f32 %v1050, 0.0
          %v1101 = vmax.f32 %v1055, 0.0
          %v1102 = vmax.f32 %v1060, 0.0
          %v1103 = vmax.f32 %v1065, 0.0
          %v1104 = vmax.f32 %v1070, 0.0
          %v1105 = vpack.c.bf16 %v1074, %v1073
          %v1106 = vpack.c.bf16 %v1076, %v1075
          %v1107 = vpack.c.bf16 %v1078, %v1077
          %v1108 = vpack.c.bf16 %v1080, %v1079
          %v1109 = vpack.c.bf16 %v1082, %v1081
          %v1110 = vpack.c.bf16 %v1084, %v1083
          %v1111 = vpack.c.bf16 %v1086, %v1085
          %v1112 = vpack.c.bf16 %v1088, %v1087
          %v1113 = vpack.c.bf16 %v1090, %v1089
          %v1114 = vpack.c.bf16 %v1092, %v1091
          %v1115 = vpack.c.bf16 %v1094, %v1093
          %v1116 = vpack.c.bf16 %v1096, %v1095
          %v1117 = vpack.c.bf16 %v1098, %v1097
          %v1118 = vpack.c.bf16 %v1100, %v1099
          %v1119 = vpack.c.bf16 %v1102, %v1101
          %v1120 = vpack.c.bf16 %v1104, %v1103
          %s1121 = sshra.s32 %s422, 4
          %s1122 = sand.u32 %s422, 15
          %s1123 = smul.addr %s1121, 8
          %s1124 = scalar_lea.vmem [#allocation2], %s1123
          %1125 = vst [vmem:[%s1124] sm:$0xff] %v1105
          %1126 = vst [vmem:[%s1124 + $0x8] sm:$0xff] %v1106
          %1127 = vst [vmem:[%s1124 + $0x10] sm:$0xff] %v1107
          %1128 = vst [vmem:[%s1124 + $0x18] sm:$0xff] %v1108
          %1129 = vst [vmem:[%s1124 + $0x20] sm:$0xff] %v1109
          %1130 = vst [vmem:[%s1124 + $0x28] sm:$0xff] %v1110
          %1131 = vst [vmem:[%s1124 + $0x30] sm:$0xff] %v1111
          %1132 = vst [vmem:[%s1124 + $0x38] sm:$0xff] %v1112
          %1133 = vst [vmem:[%s1124 + $0x40] sm:$0xff] %v1113
          %1134 = vst [vmem:[%s1124 + $0x48] sm:$0xff] %v1114
          %1135 = vst [vmem:[%s1124 + $0x50] sm:$0xff] %v1115
          %1136 = vst [vmem:[%s1124 + $0x58] sm:$0xff] %v1116
          %1137 = vst [vmem:[%s1124 + $0x60] sm:$0xff] %v1117
          %1138 = vst [vmem:[%s1124 + $0x68] sm:$0xff] %v1118
          %1139 = vst [vmem:[%s1124 + $0x70] sm:$0xff] %v1119
          %1140 = vst [vmem:[%s1124 + $0x78] sm:$0xff] %v1120
          %v1141 = vld [vmem:[%s6] sm:$0xff]
          %v1142 = vld [vmem:[%s6 + $0x8] sm:$0xff]
          %v1143 = vld [vmem:[%s6 + $0x10] sm:$0xff]
          %v1144 = vld [vmem:[%s6 + $0x18] sm:$0xff]
          %v1145 = vld [vmem:[%s6 + $0x20] sm:$0xff]
          %v1146 = vld [vmem:[%s6 + $0x28] sm:$0xff]
          %v1147 = vld [vmem:[%s6 + $0x30] sm:$0xff]
          %v1148 = vld [vmem:[%s6 + $0x38] sm:$0xff]
          %v1149 = vld [vmem:[%s6 + $0x40] sm:$0xff]
          %v1150 = vld [vmem:[%s6 + $0x48] sm:$0xff]
          %v1151 = vld [vmem:[%s6 + $0x50] sm:$0xff]
          %v1152 = vld [vmem:[%s6 + $0x58] sm:$0xff]
          %v1153 = vld [vmem:[%s6 + $0x60] sm:$0xff]
          %v1154 = vld [vmem:[%s6 + $0x68] sm:$0xff]
          %v1155 = vld [vmem:[%s6 + $0x70] sm:$0xff]
          %v1156 = vld [vmem:[%s6 + $0x78] sm:$0xff]
          %v1157 = vld [vmem:[%s7] sm:$0x1]
          %v1159 = vlaneseq
          %v1160 = vshrl.u32 %v1159, 7
          %v1161 = vsub.s32 0, %v1160
          %v1162 = vrot.slane %v1157, %v1161
          %1164 = vmatprep.subr.mxu0 0.0
          %1165 = vmatpush1.msra.mxu0 %v1141
          %1166 = vmatprep.subr.mxu0 0.0
          %1167 = vmatpush1.msra.mxu0 %v1142
          %1168 = vmatprep.subr.mxu0 0.0
          %1169 = vmatpush1.msra.mxu0 %v1143
          %1170 = vmatprep.subr.mxu0 0.0
          %1171 = vmatpush1.msra.mxu0 %v1144
          %1172 = vmatprep.subr.mxu0 0.0
          %1173 = vmatpush1.msra.mxu0 %v1145
          %1174 = vmatprep.subr.mxu0 0.0
          %1175 = vmatpush1.msra.mxu0 %v1146
          %1176 = vmatprep.subr.mxu0 0.0
          %1177 = vmatpush1.msra.mxu0 %v1147
          %1178 = vmatprep.subr.mxu0 0.0
          %1179 = vmatpush1.msra.mxu0 %v1148
          %1180 = vmatprep.subr.mxu0 0.0
          %1181 = vmatpush1.msra.mxu0 %v1149
          %1182 = vmatprep.subr.mxu0 0.0
          %1183 = vmatpush1.msra.mxu0 %v1150
          %1184 = vmatprep.subr.mxu0 0.0
          %1185 = vmatpush1.msra.mxu0 %v1151
          %1186 = vmatprep.subr.mxu0 0.0
          %1187 = vmatpush1.msra.mxu0 %v1152
          %1188 = vmatprep.subr.mxu0 0.0
          %1189 = vmatpush1.msra.mxu0 %v1153
          %1190 = vmatprep.subr.mxu0 0.0
          %1191 = vmatpush1.msra.mxu0 %v1154
          %1192 = vmatprep.subr.mxu0 0.0
          %1193 = vmatpush1.msra.mxu0 %v1155
          %1194 = vmatprep.subr.mxu0 0.0
          %1195 = vmatpush1.msra.mxu0 %v1156
          %1196 = vmatprep.subr.mxu0 0.0
          %1197 = vmatpush1.msra.mxu0 0.0
          %1198 = vmatprep.subr.mxu0 0.0
          %1199 = vmatpush1.msra.mxu0 0.0
          %1200 = vmatprep.subr.mxu0 0.0
          %1201 = vmatpush1.msra.mxu0 0.0
          %1202 = vmatprep.subr.mxu0 0.0
          %1203 = vmatpush1.msra.mxu0 0.0
          %1204 = vmatprep.subr.mxu0 0.0
          %1205 = vmatpush1.msra.mxu0 0.0
          %1206 = vmatprep.subr.mxu0 0.0
          %1207 = vmatpush1.msra.mxu0 0.0
          %1208 = vmatprep.subr.mxu0 0.0
          %1209 = vmatpush1.msra.mxu0 0.0
          %1210 = vmatprep.subr.mxu0 0.0
          %1211 = vmatpush1.msra.mxu0 0.0
          %1212 = vmatprep.subr.mxu0 0.0
          %1213 = vmatpush1.msra.mxu0 0.0
          %1214 = vmatprep.subr.mxu0 0.0
          %1215 = vmatpush1.msra.mxu0 0.0
          %1216 = vmatprep.subr.mxu0 0.0
          %1217 = vmatpush1.msra.mxu0 0.0
          %1218 = vmatprep.subr.mxu0 0.0
          %1219 = vmatpush1.msra.mxu0 0.0
          %1220 = vmatprep.subr.mxu0 0.0
          %1221 = vmatpush1.msra.mxu0 0.0
          %1222 = vmatprep.subr.mxu0 0.0
          %1223 = vmatpush1.msra.mxu0 0.0
          %1224 = vmatprep.subr.mxu0 0.0
          %1225 = vmatpush1.msra.mxu0 0.0
          %1226 = vmatprep.subr.mxu0 0.0
          %1227 = vmatpush1.msra.mxu0 0.0
          %1228 = vmatprep.mubr.f32.mxu0 0.0
          %1229 = vmatmul.mubr.f32.gmra.mrb[0].mxu0 %v1073
          %v1230 = vpop.f32.mrb[0].mxu0
          %v1231 = vadd.f32 %v1162, %v1230
          %v1232 = vpop.f32.mrb[0].mxu0
          %1233 = vmatprep.mubr.f32.mxu0 0.0
          %1234 = vmatmul.mubr.f32.gmra.mrb[0].mxu0 %v1074
          %v1235 = vpop.f32.mrb[0].mxu0
          %v1236 = vadd.f32 %v1162, %v1235
          %v1237 = vpop.f32.mrb[0].mxu0
          %1238 = vmatprep.mubr.f32.mxu0 0.0
          %1239 = vmatmul.mubr.f32.gmra.mrb[0].mxu0 %v1075
          %v1240 = vpop.f32.mrb[0].mxu0
          %v1241 = vadd.f32 %v1162, %v1240
          %v1242 = vpop.f32.mrb[0].mxu0
          %1243 = vmatprep.mubr.f32.mxu0 0.0
          %1244 = vmatmul.mubr.f32.gmra.mrb[0].mxu0 %v1076
          %v1245 = vpop.f32.mrb[0].mxu0
          %v1246 = vadd.f32 %v1162, %v1245
          %v1247 = vpop.f32.mrb[0].mxu0
          %1248 = vmatprep.mubr.f32.mxu0 0.0
          %1249 = vmatmul.mubr.f32.gmra.mrb[0].mxu0 %v1077
          %v1250 = vpop.f32.mrb[0].mxu0
          %v1251 = vadd.f32 %v1162, %v1250
          %v1252 = vpop.f32.mrb[0].mxu0
          %1253 = vmatprep.mubr.f32.mxu0 0.0
          %1254 = vmatmul.mubr.f32.gmra.mrb[0].mxu0 %v1078
          %v1255 = vpop.f32.mrb[0].mxu0
          %v1256 = vadd.f32 %v1162, %v1255
          %v1257 = vpop.f32.mrb[0].mxu0
          %1258 = vmatprep.mubr.f32.mxu0 0.0
          %1259 = vmatmul.mubr.f32.gmra.mrb[0].mxu0 %v1079
          %v1260 = vpop.f32.mrb[0].mxu0
          %v1261 = vadd.f32 %v1162, %v1260
          %v1262 = vpop.f32.mrb[0].mxu0
          %1263 = vmatprep.mubr.f32.mxu0 0.0
          %1264 = vmatmul.mubr.f32.gmra.mrb[0].mxu0 %v1080
          %v1265 = vpop.f32.mrb[0].mxu0
          %v1266 = vadd.f32 %v1162, %v1265
          %v1267 = vpop.f32.mrb[0].mxu0
          %1268 = vmatprep.mubr.f32.mxu0 0.0
          %1269 = vmatmul.mubr.f32.gmra.mrb[0].mxu0 %v1081
          %v1270 = vpop.f32.mrb[0].mxu0
          %v1271 = vadd.f32 %v1162, %v1270
          %v1272 = vpop.f32.mrb[0].mxu0
          %1273 = vmatprep.mubr.f32.mxu0 0.0
          %1274 = vmatmul.mubr.f32.gmra.mrb[0].mxu0 %v1082
          %v1275 = vpop.f32.mrb[0].mxu0
          %v1276 = vadd.f32 %v1162, %v1275
          %v1277 = vpop.f32.mrb[0].mxu0
          %1278 = vmatprep.mubr.f32.mxu0 0.0
          %1279 = vmatmul.mubr.f32.gmra.mrb[0].mxu0 %v1083
          %v1280 = vpop.f32.mrb[0].mxu0
          %v1281 = vadd.f32 %v1162, %v1280
          %v1282 = vpop.f32.mrb[0].mxu0
          %1283 = vmatprep.mubr.f32.mxu0 0.0
          %1284 = vmatmul.mubr.f32.gmra.mrb[0].mxu0 %v1084
          %v1285 = vpop.f32.mrb[0].mxu0
          %v1286 = vadd.f32 %v1162, %v1285
          %v1287 = vpop.f32.mrb[0].mxu0
          %1288 = vmatprep.mubr.f32.mxu0 0.0
          %1289 = vmatmul.mubr.f32.gmra.mrb[0].mxu0 %v1085
          %v1290 = vpop.f32.mrb[0].mxu0
          %v1291 = vadd.f32 %v1162, %v1290
          %v1292 = vpop.f32.mrb[0].mxu0
          %1293 = vmatprep.mubr.f32.mxu0 0.0
          %1294 = vmatmul.mubr.f32.gmra.mrb[0].mxu0 %v1086
          %v1295 = vpop.f32.mrb[0].mxu0
          %v1296 = vadd.f32 %v1162, %v1295
          %v1297 = vpop.f32.mrb[0].mxu0
          %1298 = vmatprep.mubr.f32.mxu0 0.0
          %1299 = vmatmul.mubr.f32.gmra.mrb[0].mxu0 %v1087
          %v1300 = vpop.f32.mrb[0].mxu0
          %v1301 = vadd.f32 %v1162, %v1300
          %v1302 = vpop.f32.mrb[0].mxu0
          %1303 = vmatprep.mubr.f32.mxu0 0.0
          %1304 = vmatmul.mubr.f32.gmra.mrb[0].mxu0 %v1088
          %v1305 = vpop.f32.mrb[0].mxu0
          %v1306 = vadd.f32 %v1162, %v1305
          %v1307 = vpop.f32.mrb[0].mxu0
          %1308 = vmatprep.mubr.f32.mxu0 0.0
          %1309 = vmatmul.mubr.f32.gmra.mrb[0].mxu0 %v1089
          %v1310 = vpop.f32.mrb[0].mxu0
          %v1311 = vadd.f32 %v1162, %v1310
          %v1312 = vpop.f32.mrb[0].mxu0
          %1313 = vmatprep.mubr.f32.mxu0 0.0
          %1314 = vmatmul.mubr.f32.gmra.mrb[0].mxu0 %v1090
          %v1315 = vpop.f32.mrb[0].mxu0
          %v1316 = vadd.f32 %v1162, %v1315
          %v1317 = vpop.f32.mrb[0].mxu0
          %1318 = vmatprep.mubr.f32.mxu0 0.0
          %1319 = vmatmul.mubr.f32.gmra.mrb[0].mxu0 %v1091
          %v1320 = vpop.f32.mrb[0].mxu0
          %v1321 = vadd.f32 %v1162, %v1320
          %v1322 = vpop.f32.mrb[0].mxu0
          %1323 = vmatprep.mubr.f32.mxu0 0.0
          %1324 = vmatmul.mubr.f32.gmra.mrb[0].mxu0 %v1092
          %v1325 = vpop.f32.mrb[0].mxu0
          %v1326 = vadd.f32 %v1162, %v1325
          %v1327 = vpop.f32.mrb[0].mxu0
          %1328 = vmatprep.mubr.f32.mxu0 0.0
          %1329 = vmatmul.mubr.f32.gmra.mrb[0].mxu0 %v1093
          %v1330 = vpop.f32.mrb[0].mxu0
          %v1331 = vadd.f32 %v1162, %v1330
          %v1332 = vpop.f32.mrb[0].mxu0
          %1333 = vmatprep.mubr.f32.mxu0 0.0
          %1334 = vmatmul.mubr.f32.gmra.mrb[0].mxu0 %v1094
          %v1335 = vpop.f32.mrb[0].mxu0
          %v1336 = vadd.f32 %v1162, %v1335
          %v1337 = vpop.f32.mrb[0].mxu0
          %1338 = vmatprep.mubr.f32.mxu0 0.0
          %1339 = vmatmul.mubr.f32.gmra.mrb[0].mxu0 %v1095
          %v1340 = vpop.f32.mrb[0].mxu0
          %v1341 = vadd.f32 %v1162, %v1340
          %v1342 = vpop.f32.mrb[0].mxu0
          %1343 = vmatprep.mubr.f32.mxu0 0.0
          %1344 = vmatmul.mubr.f32.gmra.mrb[0].mxu0 %v1096
          %v1345 = vpop.f32.mrb[0].mxu0
          %v1346 = vadd.f32 %v1162, %v1345
          %v1347 = vpop.f32.mrb[0].mxu0
          %1348 = vmatprep.mubr.f32.mxu0 0.0
          %1349 = vmatmul.mubr.f32.gmra.mrb[0].mxu0 %v1097
          %v1350 = vpop.f32.mrb[0].mxu0
          %v1351 = vadd.f32 %v1162, %v1350
          %v1352 = vpop.f32.mrb[0].mxu0
          %1353 = vmatprep.mubr.f32.mxu0 0.0
          %1354 = vmatmul.mubr.f32.gmra.mrb[0].mxu0 %v1098
          %v1355 = vpop.f32.mrb[0].mxu0
          %v1356 = vadd.f32 %v1162, %v1355
          %v1357 = vpop.f32.mrb[0].mxu0
          %1358 = vmatprep.mubr.f32.mxu0 0.0
          %1359 = vmatmul.mubr.f32.gmra.mrb[0].mxu0 %v1099
          %v1360 = vpop.f32.mrb[0].mxu0
          %v1361 = vadd.f32 %v1162, %v1360
          %v1362 = vpop.f32.mrb[0].mxu0
          %1363 = vmatprep.mubr.f32.mxu0 0.0
          %1364 = vmatmul.mubr.f32.gmra.mrb[0].mxu0 %v1100
          %v1365 = vpop.f32.mrb[0].mxu0
          %v1366 = vadd.f32 %v1162, %v1365
          %v1367 = vpop.f32.mrb[0].mxu0
          %1368 = vmatprep.mubr.f32.mxu0 0.0
          %1369 = vmatmul.mubr.f32.gmra.mrb[0].mxu0 %v1101
          %v1370 = vpop.f32.mrb[0].mxu0
          %v1371 = vadd.f32 %v1162, %v1370
          %v1372 = vpop.f32.mrb[0].mxu0
          %1373 = vmatprep.mubr.f32.mxu0 0.0
          %1374 = vmatmul.mubr.f32.gmra.mrb[0].mxu0 %v1102
          %v1375 = vpop.f32.mrb[0].mxu0
          %v1376 = vadd.f32 %v1162, %v1375
          %v1377 = vpop.f32.mrb[0].mxu0
          %1378 = vmatprep.mubr.f32.mxu0 0.0
          %1379 = vmatmul.mubr.f32.gmra.mrb[0].mxu0 %v1103
          %v1380 = vpop.f32.mrb[0].mxu0
          %v1381 = vadd.f32 %v1162, %v1380
          %v1382 = vpop.f32.mrb[0].mxu0
          %1383 = vmatprep.mubr.f32.mxu0 0.0
          %1384 = vmatmul.mubr.f32.gmra.mrb[0].mxu0 %v1104
          %v1385 = vpop.f32.mrb[0].mxu0
          %v1386 = vadd.f32 %v1162, %v1385
          %v1387 = vpop.f32.mrb[0].mxu0
          %1388 = vdwg.mxu0
          %s1389 = scalar_lea.vmem [#allocation3], %s422
          %1390 = vst [vmem:[%s1389] sm:$0xff] %v1231
          %1391 = vst [vmem:[%s1389 + $0x8] sm:$0xff] %v1236
          %1392 = vst [vmem:[%s1389 + $0x10] sm:$0xff] %v1241
          %1393 = vst [vmem:[%s1389 + $0x18] sm:$0xff] %v1246
          %1394 = vst [vmem:[%s1389 + $0x20] sm:$0xff] %v1251
          %1395 = vst [vmem:[%s1389 + $0x28] sm:$0xff] %v1256
          %1396 = vst [vmem:[%s1389 + $0x30] sm:$0xff] %v1261
          %1397 = vst [vmem:[%s1389 + $0x38] sm:$0xff] %v1266
          %1398 = vst [vmem:[%s1389 + $0x40] sm:$0xff] %v1271
          %1399 = vst [vmem:[%s1389 + $0x48] sm:$0xff] %v1276
          %1400 = vst [vmem:[%s1389 + $0x50] sm:$0xff] %v1281
          %1401 = vst [vmem:[%s1389 + $0x58] sm:$0xff] %v1286
          %1402 = vst [vmem:[%s1389 + $0x60] sm:$0xff] %v1291
          %1403 = vst [vmem:[%s1389 + $0x68] sm:$0xff] %v1296
          %1404 = vst [vmem:[%s1389 + $0x70] sm:$0xff] %v1301
          %1405 = vst [vmem:[%s1389 + $0x78] sm:$0xff] %v1306
          %1406 = vst [vmem:[%s1389 + $0x80] sm:$0xff] %v1311
          %1407 = vst [vmem:[%s1389 + $0x88] sm:$0xff] %v1316
          %1408 = vst [vmem:[%s1389 + $0x90] sm:$0xff] %v1321
          %1409 = vst [vmem:[%s1389 + $0x98] sm:$0xff] %v1326
          %1410 = vst [vmem:[%s1389 + $0xa0] sm:$0xff] %v1331
          %1411 = vst [vmem:[%s1389 + $0xa8] sm:$0xff] %v1336
          %1412 = vst [vmem:[%s1389 + $0xb0] sm:$0xff] %v1341
          %1413 = vst [vmem:[%s1389 + $0xb8] sm:$0xff] %v1346
          %1414 = vst [vmem:[%s1389 + $0xc0] sm:$0xff] %v1351
          %1415 = vst [vmem:[%s1389 + $0xc8] sm:$0xff] %v1356
          %1416 = vst [vmem:[%s1389 + $0xd0] sm:$0xff] %v1361
          %1417 = vst [vmem:[%s1389 + $0xd8] sm:$0xff] %v1366
          %1418 = vst [vmem:[%s1389 + $0xe0] sm:$0xff] %v1371
          %1419 = vst [vmem:[%s1389 + $0xe8] sm:$0xff] %v1376
          %1420 = vst [vmem:[%s1389 + $0xf0] sm:$0xff] %v1381
          %1421 = vst [vmem:[%s1389 + $0xf8] sm:$0xff] %v1386
        $region72: #{tpu_custom_call.1} parent=59 // pred_fallthru
          _
        %p1422 = scmp.eq.s32.totalorder %s35, 0
        // Predicated region
        $region73: #{tpu_custom_call.1} parent=59 // pred_check
          %p1423 = pneg %p1422
        $region74: #{tpu_custom_call.1} parent=59 // pred_check_branch
          %1425 = sbr.rel (%p1423) target = $region76
        $region75: #{tpu_custom_call.1} parent=59 // pred_region
          %1426 = vst [vmem:[#allocation4] sm:$0xff] 0.0
          %1427 = vst [vmem:[#allocation4 + $0x8] sm:$0xff] 0.0
          %1428 = vst [vmem:[#allocation4 + $0x10] sm:$0xff] 0.0
          %1429 = vst [vmem:[#allocation4 + $0x18] sm:$0xff] 0.0
          %1430 = vst [vmem:[#allocation4 + $0x20] sm:$0xff] 0.0
          %1431 = vst [vmem:[#allocation4 + $0x28] sm:$0xff] 0.0
          %1432 = vst [vmem:[#allocation4 + $0x30] sm:$0xff] 0.0
          %1433 = vst [vmem:[#allocation4 + $0x38] sm:$0xff] 0.0
          %1434 = vst [vmem:[#allocation4 + $0x40] sm:$0xff] 0.0
          %1435 = vst [vmem:[#allocation4 + $0x48] sm:$0xff] 0.0
          %1436 = vst [vmem:[#allocation4 + $0x50] sm:$0xff] 0.0
          %1437 = vst [vmem:[#allocation4 + $0x58] sm:$0xff] 0.0
          %1438 = vst [vmem:[#allocation4 + $0x60] sm:$0xff] 0.0
          %1439 = vst [vmem:[#allocation4 + $0x68] sm:$0xff] 0.0
          %1440 = vst [vmem:[#allocation4 + $0x70] sm:$0xff] 0.0
          %1441 = vst [vmem:[#allocation4 + $0x78] sm:$0xff] 0.0
          %1442 = vst [vmem:[#allocation4 + $0x80] sm:$0xff] 0.0
          %1443 = vst [vmem:[#allocation4 + $0x88] sm:$0xff] 0.0
          %1444 = vst [vmem:[#allocation4 + $0x90] sm:$0xff] 0.0
          %1445 = vst [vmem:[#allocation4 + $0x98] sm:$0xff] 0.0
          %1446 = vst [vmem:[#allocation4 + $0xa0] sm:$0xff] 0.0
          %1447 = vst [vmem:[#allocation4 + $0xa8] sm:$0xff] 0.0
          %1448 = vst [vmem:[#allocation4 + $0xb0] sm:$0xff] 0.0
          %1449 = vst [vmem:[#allocation4 + $0xb8] sm:$0xff] 0.0
          %1450 = vst [vmem:[#allocation4 + $0xc0] sm:$0xff] 0.0
          %1451 = vst [vmem:[#allocation4 + $0xc8] sm:$0xff] 0.0
          %1452 = vst [vmem:[#allocation4 + $0xd0] sm:$0xff] 0.0
          %1453 = vst [vmem:[#allocation4 + $0xd8] sm:$0xff] 0.0
          %1454 = vst [vmem:[#allocation4 + $0xe0] sm:$0xff] 0.0
          %1455 = vst [vmem:[#allocation4 + $0xe8] sm:$0xff] 0.0
          %1456 = vst [vmem:[#allocation4 + $0xf0] sm:$0xff] 0.0
          %1457 = vst [vmem:[#allocation4 + $0xf8] sm:$0xff] 0.0
        $region76: #{tpu_custom_call.1} parent=59 // pred_fallthru
          _
        %p1458 = scmp.ne.s32.totalorder %s33, 1
        %p1459 = pnand %p1422, %p1458
        %p1460 = pneg %p1459
        // Predicated region
        $region77: #{tpu_custom_call.1} parent=59 // pred_check
          _
        $region78: #{tpu_custom_call.1} parent=59 // pred_check_branch
          %1462 = sbr.rel (%p1459) target = $region80
        $region79: #{tpu_custom_call.1} parent=59 // pred_region
          %1463 = vst [vmem:[%s416] sm:$0xff] 0.0
          %1464 = vst [vmem:[%s416 + $0x8] sm:$0xff] 0.0
          %1465 = vst [vmem:[%s416 + $0x10] sm:$0xff] 0.0
          %1466 = vst [vmem:[%s416 + $0x18] sm:$0xff] 0.0
          %1467 = vst [vmem:[%s416 + $0x20] sm:$0xff] 0.0
          %1468 = vst [vmem:[%s416 + $0x28] sm:$0xff] 0.0
          %1469 = vst [vmem:[%s416 + $0x30] sm:$0xff] 0.0
          %1470 = vst [vmem:[%s416 + $0x38] sm:$0xff] 0.0
          %1471 = vst [vmem:[%s416 + $0x40] sm:$0xff] 0.0
          %1472 = vst [vmem:[%s416 + $0x48] sm:$0xff] 0.0
          %1473 = vst [vmem:[%s416 + $0x50] sm:$0xff] 0.0
          %1474 = vst [vmem:[%s416 + $0x58] sm:$0xff] 0.0
          %1475 = vst [vmem:[%s416 + $0x60] sm:$0xff] 0.0
          %1476 = vst [vmem:[%s416 + $0x68] sm:$0xff] 0.0
          %1477 = vst [vmem:[%s416 + $0x70] sm:$0xff] 0.0
          %1478 = vst [vmem:[%s416 + $0x78] sm:$0xff] 0.0
          %1479 = vst [vmem:[%s416 + $0x80] sm:$0xff] 0.0
          %1480 = vst [vmem:[%s416 + $0x88] sm:$0xff] 0.0
          %1481 = vst [vmem:[%s416 + $0x90] sm:$0xff] 0.0
          %1482 = vst [vmem:[%s416 + $0x98] sm:$0xff] 0.0
          %1483 = vst [vmem:[%s416 + $0xa0] sm:$0xff] 0.0
          %1484 = vst [vmem:[%s416 + $0xa8] sm:$0xff] 0.0
          %1485 = vst [vmem:[%s416 + $0xb0] sm:$0xff] 0.0
          %1486 = vst [vmem:[%s416 + $0xb8] sm:$0xff] 0.0
          %1487 = vst [vmem:[%s416 + $0xc0] sm:$0xff] 0.0
          %1488 = vst [vmem:[%s416 + $0xc8] sm:$0xff] 0.0
          %1489 = vst [vmem:[%s416 + $0xd0] sm:$0xff] 0.0
          %1490 = vst [vmem:[%s416 + $0xd8] sm:$0xff] 0.0
          %1491 = vst [vmem:[%s416 + $0xe0] sm:$0xff] 0.0
          %1492 = vst [vmem:[%s416 + $0xe8] sm:$0xff] 0.0
          %1493 = vst [vmem:[%s416 + $0xf0] sm:$0xff] 0.0
          %1494 = vst [vmem:[%s416 + $0xf8] sm:$0xff] 0.0
        $region80: #{tpu_custom_call.1} parent=59 // pred_fallthru
          _
        %v1495 = vld [vmem:[#allocation4] sm:$0xff]
        %v1496 = vld [vmem:[#allocation4 + $0x8] sm:$0xff]
        %v1497 = vld [vmem:[#allocation4 + $0x10] sm:$0xff]
        %v1498 = vld [vmem:[#allocation4 + $0x18] sm:$0xff]
        %v1499 = vld [vmem:[#allocation4 + $0x20] sm:$0xff]
        %v1500 = vld [vmem:[#allocation4 + $0x28] sm:$0xff]
        %v1501 = vld [vmem:[#allocation4 + $0x30] sm:$0xff]
        %v1502 = vld [vmem:[#allocation4 + $0x38] sm:$0xff]
        %v1503 = vld [vmem:[#allocation4 + $0x40] sm:$0xff]
        %v1504 = vld [vmem:[#allocation4 + $0x48] sm:$0xff]
        %v1505 = vld [vmem:[#allocation4 + $0x50] sm:$0xff]
        %v1506 = vld [vmem:[#allocation4 + $0x58] sm:$0xff]
        %v1507 = vld [vmem:[#allocation4 + $0x60] sm:$0xff]
        %v1508 = vld [vmem:[#allocation4 + $0x68] sm:$0xff]
        %v1509 = vld [vmem:[#allocation4 + $0x70] sm:$0xff]
        %v1510 = vld [vmem:[#allocation4 + $0x78] sm:$0xff]
        %v1511 = vld [vmem:[#allocation4 + $0x80] sm:$0xff]
        %v1512 = vld [vmem:[#allocation4 + $0x88] sm:$0xff]
        %v1513 = vld [vmem:[#allocation4 + $0x90] sm:$0xff]
        %v1514 = vld [vmem:[#allocation4 + $0x98] sm:$0xff]
        %v1515 = vld [vmem:[#allocation4 + $0xa0] sm:$0xff]
        %v1516 = vld [vmem:[#allocation4 + $0xa8] sm:$0xff]
        %v1517 = vld [vmem:[#allocation4 + $0xb0] sm:$0xff]
        %v1518 = vld [vmem:[#allocation4 + $0xb8] sm:$0xff]
        %v1519 = vld [vmem:[#allocation4 + $0xc0] sm:$0xff]
        %v1520 = vld [vmem:[#allocation4 + $0xc8] sm:$0xff]
        %v1521 = vld [vmem:[#allocation4 + $0xd0] sm:$0xff]
        %v1522 = vld [vmem:[#allocation4 + $0xd8] sm:$0xff]
        %v1523 = vld [vmem:[#allocation4 + $0xe0] sm:$0xff]
        %v1524 = vld [vmem:[#allocation4 + $0xe8] sm:$0xff]
        %v1525 = vld [vmem:[#allocation4 + $0xf0] sm:$0xff]
        %v1526 = vld [vmem:[#allocation4 + $0xf8] sm:$0xff]
        %v1527 = vld [vmem:[%s376] sm:$0xff]
        %v1528 = vld [vmem:[%s376 + $0x8] sm:$0xff]
        %v1529 = vld [vmem:[%s376 + $0x10] sm:$0xff]
        %v1530 = vld [vmem:[%s376 + $0x18] sm:$0xff]
        %v1531 = vld [vmem:[%s376 + $0x20] sm:$0xff]
        %v1532 = vld [vmem:[%s376 + $0x28] sm:$0xff]
        %v1533 = vld [vmem:[%s376 + $0x30] sm:$0xff]
        %v1534 = vld [vmem:[%s376 + $0x38] sm:$0xff]
        %v1535 = vld [vmem:[%s376 + $0x40] sm:$0xff]
        %v1536 = vld [vmem:[%s376 + $0x48] sm:$0xff]
        %v1537 = vld [vmem:[%s376 + $0x50] sm:$0xff]
        %v1538 = vld [vmem:[%s376 + $0x58] sm:$0xff]
        %v1539 = vld [vmem:[%s376 + $0x60] sm:$0xff]
        %v1540 = vld [vmem:[%s376 + $0x68] sm:$0xff]
        %v1541 = vld [vmem:[%s376 + $0x70] sm:$0xff]
        %v1542 = vld [vmem:[%s376 + $0x78] sm:$0xff]
        %v1543 = vld [vmem:[%s376 + $0x80] sm:$0xff]
        %v1544 = vld [vmem:[%s376 + $0x88] sm:$0xff]
        %v1545 = vld [vmem:[%s376 + $0x90] sm:$0xff]
        %v1546 = vld [vmem:[%s376 + $0x98] sm:$0xff]
        %v1547 = vld [vmem:[%s376 + $0xa0] sm:$0xff]
        %v1548 = vld [vmem:[%s376 + $0xa8] sm:$0xff]
        %v1549 = vld [vmem:[%s376 + $0xb0] sm:$0xff]
        %v1550 = vld [vmem:[%s376 + $0xb8] sm:$0xff]
        %v1551 = vld [vmem:[%s376 + $0xc0] sm:$0xff]
        %v1552 = vld [vmem:[%s376 + $0xc8] sm:$0xff]
        %v1553 = vld [vmem:[%s376 + $0xd0] sm:$0xff]
        %v1554 = vld [vmem:[%s376 + $0xd8] sm:$0xff]
        %v1555 = vld [vmem:[%s376 + $0xe0] sm:$0xff]
        %v1556 = vld [vmem:[%s376 + $0xe8] sm:$0xff]
        %v1557 = vld [vmem:[%s376 + $0xf0] sm:$0xff]
        %v1558 = vld [vmem:[%s376 + $0xf8] sm:$0xff]
        %p1559 = scmp.lt.s32.totalorder %s33, 0
        %s1560 = ssub.s32 0, %s33
        %s1561 = scalar_select %p1559, %s1560, %s33
        %s1562 = sand.u32 %s1561, 1
        %s1563 = ssub.s32 0, %s1562
        %s1564 = scalar_select %p1559, %s1563, %s1562
        %p1565 = scmp.ne.s32.totalorder %s1564, 0
        %p1566 = scmp.lt.s32.totalorder %s1564, 0
        %p1567 = pnand %p1566, %p1565
        %p1568 = pneg %p1567
        %s1569 = sadd.s32 %s1564, 2
        %s1570 = scalar_select %p1568, %s1569, %s1564
        %s1571 = sshra.s32 %s422, 4
        %s1572 = sand.u32 %s422, 15
        %s1573 = smul.u32 %s1570, 32
        %s1574 = sadd.s32 %s1571, %s1573
        %s1575 = smul.addr %s1574, 8
        %s1576 = scalar_lea.vmem [#allocation2], %s1575
        %v1577 = vld [vmem:[%s1576] sm:$0xff]
        %v1578 = vld [vmem:[%s1576 + $0x8] sm:$0xff]
        %v1579 = vld [vmem:[%s1576 + $0x10] sm:$0xff]
        %v1580 = vld [vmem:[%s1576 + $0x18] sm:$0xff]
        %v1581 = vld [vmem:[%s1576 + $0x20] sm:$0xff]
        %v1582 = vld [vmem:[%s1576 + $0x28] sm:$0xff]
        %v1583 = vld [vmem:[%s1576 + $0x30] sm:$0xff]
        %v1584 = vld [vmem:[%s1576 + $0x38] sm:$0xff]
        %v1585 = vld [vmem:[%s1576 + $0x40] sm:$0xff]
        %v1586 = vld [vmem:[%s1576 + $0x48] sm:$0xff]
        %v1587 = vld [vmem:[%s1576 + $0x50] sm:$0xff]
        %v1588 = vld [vmem:[%s1576 + $0x58] sm:$0xff]
        %v1589 = vld [vmem:[%s1576 + $0x60] sm:$0xff]
        %v1590 = vld [vmem:[%s1576 + $0x68] sm:$0xff]
        %v1591 = vld [vmem:[%s1576 + $0x70] sm:$0xff]
        %v1592 = vld [vmem:[%s1576 + $0x78] sm:$0xff]
        %v1625 = vunpack.c.l.b16 %v1527
        %v1626 = vunpack.c.h.b16 %v1527
        %v1627 = vunpack.c.l.b16 %v1528
        %v1628 = vunpack.c.h.b16 %v1528
        %v1629 = vunpack.c.l.b16 %v1529
        %v1630 = vunpack.c.h.b16 %v1529
        %v1631 = vunpack.c.l.b16 %v1530
        %v1632 = vunpack.c.h.b16 %v1530
        %v1633 = vunpack.c.l.b16 %v1531
        %v1634 = vunpack.c.h.b16 %v1531
        %v1635 = vunpack.c.l.b16 %v1532
        %v1636 = vunpack.c.h.b16 %v1532
        %v1637 = vunpack.c.l.b16 %v1533
        %v1638 = vunpack.c.h.b16 %v1533
        %v1639 = vunpack.c.l.b16 %v1534
        %v1640 = vunpack.c.h.b16 %v1534
        %v1641 = vunpack.c.l.b16 %v1535
        %v1642 = vunpack.c.h.b16 %v1535
        %v1643 = vunpack.c.l.b16 %v1536
        %v1644 = vunpack.c.h.b16 %v1536
        %v1645 = vunpack.c.l.b16 %v1537
        %v1646 = vunpack.c.h.b16 %v1537
        %v1647 = vunpack.c.l.b16 %v1538
        %v1648 = vunpack.c.h.b16 %v1538
        %v1649 = vunpack.c.l.b16 %v1539
        %v1650 = vunpack.c.h.b16 %v1539
        %v1651 = vunpack.c.l.b16 %v1540
        %v1652 = vunpack.c.h.b16 %v1540
        %v1653 = vunpack.c.l.b16 %v1541
        %v1654 = vunpack.c.h.b16 %v1541
        %v1655 = vunpack.c.l.b16 %v1542
        %v1656 = vunpack.c.h.b16 %v1542
        %v1657 = vunpack.c.l.b16 %v1543
        %v1658 = vunpack.c.h.b16 %v1543
        %v1659 = vunpack.c.l.b16 %v1544
        %v1660 = vunpack.c.h.b16 %v1544
        %v1661 = vunpack.c.l.b16 %v1545
        %v1662 = vunpack.c.h.b16 %v1545
        %v1663 = vunpack.c.l.b16 %v1546
        %v1664 = vunpack.c.h.b16 %v1546
        %v1665 = vunpack.c.l.b16 %v1547
        %v1666 = vunpack.c.h.b16 %v1547
        %v1667 = vunpack.c.l.b16 %v1548
        %v1668 = vunpack.c.h.b16 %v1548
        %v1669 = vunpack.c.l.b16 %v1549
        %v1670 = vunpack.c.h.b16 %v1549
        %v1671 = vunpack.c.l.b16 %v1550
        %v1672 = vunpack.c.h.b16 %v1550
        %v1673 = vunpack.c.l.b16 %v1551
        %v1674 = vunpack.c.h.b16 %v1551
        %v1675 = vunpack.c.l.b16 %v1552
        %v1676 = vunpack.c.h.b16 %v1552
        %v1677 = vunpack.c.l.b16 %v1553
        %v1678 = vunpack.c.h.b16 %v1553
        %v1679 = vunpack.c.l.b16 %v1554
        %v1680 = vunpack.c.h.b16 %v1554
        %v1681 = vunpack.c.l.b16 %v1555
        %v1682 = vunpack.c.h.b16 %v1555
        %v1683 = vunpack.c.l.b16 %v1556
        %v1684 = vunpack.c.h.b16 %v1556
        %v1685 = vunpack.c.l.b16 %v1557
        %v1686 = vunpack.c.h.b16 %v1557
        %v1687 = vunpack.c.l.b16 %v1558
        %v1688 = vunpack.c.h.b16 %v1558
        %v1689 = vpack.c.b16 %v1627, %v1625
        %v1690 = vpack.c.b16 %v1628, %v1626
        %v1691 = vpack.c.b16 %v1631, %v1629
        %v1692 = vpack.c.b16 %v1632, %v1630
        %v1693 = vpack.c.b16 %v1635, %v1633
        %v1694 = vpack.c.b16 %v1636, %v1634
        %v1695 = vpack.c.b16 %v1639, %v1637
        %v1696 = vpack.c.b16 %v1640, %v1638
        %v1697 = vpack.c.b16 %v1643, %v1641
        %v1698 = vpack.c.b16 %v1644, %v1642
        %v1699 = vpack.c.b16 %v1647, %v1645
        %v1700 = vpack.c.b16 %v1648, %v1646
        %v1701 = vpack.c.b16 %v1651, %v1649
        %v1702 = vpack.c.b16 %v1652, %v1650
        %v1703 = vpack.c.b16 %v1655, %v1653
        %v1704 = vpack.c.b16 %v1656, %v1654
        %v1705 = vpack.c.b16 %v1659, %v1657
        %v1706 = vpack.c.b16 %v1660, %v1658
        %v1707 = vpack.c.b16 %v1663, %v1661
        %v1708 = vpack.c.b16 %v1664, %v1662
        %v1709 = vpack.c.b16 %v1667, %v1665
        %v1710 = vpack.c.b16 %v1668, %v1666
        %v1711 = vpack.c.b16 %v1671, %v1669
        %v1712 = vpack.c.b16 %v1672, %v1670
        %v1713 = vpack.c.b16 %v1675, %v1673
        %v1714 = vpack.c.b16 %v1676, %v1674
        %v1715 = vpack.c.b16 %v1679, %v1677
        %v1716 = vpack.c.b16 %v1680, %v1678
        %v1717 = vpack.c.b16 %v1683, %v1681
        %v1718 = vpack.c.b16 %v1684, %v1682
        %v1719 = vpack.c.b16 %v1687, %v1685
        %v1720 = vpack.c.b16 %v1688, %v1686
        %1753 = vmatprep.subr.bf16.mxu0 0
        %1754 = vmatpush1.bf16.msra.mxu0 %v1577
        %1755 = vmatprep.subr.bf16.mxu0 0
        %1756 = vmatpush1.bf16.msra.mxu0 %v1578
        %1757 = vmatprep.subr.bf16.mxu0 0
        %1758 = vmatpush1.bf16.msra.mxu0 %v1579
        %1759 = vmatprep.subr.bf16.mxu0 0
        %1760 = vmatpush1.bf16.msra.mxu0 %v1580
        %1761 = vmatprep.subr.bf16.mxu0 0
        %1762 = vmatpush1.bf16.msra.mxu0 %v1581
        %1763 = vmatprep.subr.bf16.mxu0 0
        %1764 = vmatpush1.bf16.msra.mxu0 %v1582
        %1765 = vmatprep.subr.bf16.mxu0 0
        %1766 = vmatpush1.bf16.msra.mxu0 %v1583
        %1767 = vmatprep.subr.bf16.mxu0 0
        %1768 = vmatpush1.bf16.msra.mxu0 %v1584
        %1769 = vmatprep.subr.bf16.mxu0 0
        %1770 = vmatpush1.bf16.msra.mxu0 %v1585
        %1771 = vmatprep.subr.bf16.mxu0 0
        %1772 = vmatpush1.bf16.msra.mxu0 %v1586
        %1773 = vmatprep.subr.bf16.mxu0 0
        %1774 = vmatpush1.bf16.msra.mxu0 %v1587
        %1775 = vmatprep.subr.bf16.mxu0 0
        %1776 = vmatpush1.bf16.msra.mxu0 %v1588
        %1777 = vmatprep.subr.bf16.mxu0 0
        %1778 = vmatpush1.bf16.msra.mxu0 %v1589
        %1779 = vmatprep.subr.bf16.mxu0 0
        %1780 = vmatpush1.bf16.msra.mxu0 %v1590
        %1781 = vmatprep.subr.bf16.mxu0 0
        %1782 = vmatpush1.bf16.msra.mxu0 %v1591
        %1783 = vmatprep.subr.bf16.mxu0 0
        %1784 = vmatpush1.bf16.msra.mxu0 %v1592
        %1785 = vmatprep.mubr.bf16.mxu0 %v1690
        %1786 = vmatmul.mubr.bf16.gmra.mrb[0].mxu0 %v1689
        %v1787 = vpop.f32.mrb[0].mxu0
        %v1788 = vadd.f32 0.0, %v1787
        %v1789 = vpop.f32.mrb[0].mxu0
        %v1790 = vpop.f32.mrb[0].mxu0
        %v1791 = vadd.f32 0.0, %v1790
        %v1792 = vpop.f32.mrb[0].mxu0
        %1793 = vmatprep.mubr.bf16.mxu0 %v1692
        %1794 = vmatmul.mubr.bf16.gmra.mrb[0].mxu0 %v1691
        %v1795 = vpop.f32.mrb[0].mxu0
        %v1796 = vadd.f32 0.0, %v1795
        %v1797 = vpop.f32.mrb[0].mxu0
        %v1798 = vpop.f32.mrb[0].mxu0
        %v1799 = vadd.f32 0.0, %v1798
        %v1800 = vpop.f32.mrb[0].mxu0
        %1801 = vmatprep.mubr.bf16.mxu0 %v1694
        %1802 = vmatmul.mubr.bf16.gmra.mrb[0].mxu0 %v1693
        %v1803 = vpop.f32.mrb[0].mxu0
        %v1804 = vadd.f32 0.0, %v1803
        %v1805 = vpop.f32.mrb[0].mxu0
        %v1806 = vpop.f32.mrb[0].mxu0
        %v1807 = vadd.f32 0.0, %v1806
        %v1808 = vpop.f32.mrb[0].mxu0
        %1809 = vmatprep.mubr.bf16.mxu0 %v1696
        %1810 = vmatmul.mubr.bf16.gmra.mrb[0].mxu0 %v1695
        %v1811 = vpop.f32.mrb[0].mxu0
        %v1812 = vadd.f32 0.0, %v1811
        %v1813 = vpop.f32.mrb[0].mxu0
        %v1814 = vpop.f32.mrb[0].mxu0
        %v1815 = vadd.f32 0.0, %v1814
        %v1816 = vpop.f32.mrb[0].mxu0
        %1817 = vmatprep.mubr.bf16.mxu0 %v1698
        %1818 = vmatmul.mubr.bf16.gmra.mrb[0].mxu0 %v1697
        %v1819 = vpop.f32.mrb[0].mxu0
        %v1820 = vadd.f32 0.0, %v1819
        %v1821 = vpop.f32.mrb[0].mxu0
        %v1822 = vpop.f32.mrb[0].mxu0
        %v1823 = vadd.f32 0.0, %v1822
        %v1824 = vpop.f32.mrb[0].mxu0
        %1825 = vmatprep.mubr.bf16.mxu0 %v1700
        %1826 = vmatmul.mubr.bf16.gmra.mrb[0].mxu0 %v1699
        %v1827 = vpop.f32.mrb[0].mxu0
        %v1828 = vadd.f32 0.0, %v1827
        %v1829 = vpop.f32.mrb[0].mxu0
        %v1830 = vpop.f32.mrb[0].mxu0
        %v1831 = vadd.f32 0.0, %v1830
        %v1832 = vpop.f32.mrb[0].mxu0
        %1833 = vmatprep.mubr.bf16.mxu0 %v1702
        %1834 = vmatmul.mubr.bf16.gmra.mrb[0].mxu0 %v1701
        %v1835 = vpop.f32.mrb[0].mxu0
        %v1836 = vadd.f32 0.0, %v1835
        %v1837 = vpop.f32.mrb[0].mxu0
        %v1838 = vpop.f32.mrb[0].mxu0
        %v1839 = vadd.f32 0.0, %v1838
        %v1840 = vpop.f32.mrb[0].mxu0
        %1841 = vmatprep.mubr.bf16.mxu0 %v1704
        %1842 = vmatmul.mubr.bf16.gmra.mrb[0].mxu0 %v1703
        %v1843 = vpop.f32.mrb[0].mxu0
        %v1844 = vadd.f32 0.0, %v1843
        %v1845 = vpop.f32.mrb[0].mxu0
        %v1846 = vpop.f32.mrb[0].mxu0
        %v1847 = vadd.f32 0.0, %v1846
        %v1848 = vpop.f32.mrb[0].mxu0
        %1849 = vmatprep.mubr.bf16.mxu0 %v1706
        %1850 = vmatmul.mubr.bf16.gmra.mrb[0].mxu0 %v1705
        %v1851 = vpop.f32.mrb[0].mxu0
        %v1852 = vadd.f32 0.0, %v1851
        %v1853 = vpop.f32.mrb[0].mxu0
        %v1854 = vpop.f32.mrb[0].mxu0
        %v1855 = vadd.f32 0.0, %v1854
        %v1856 = vpop.f32.mrb[0].mxu0
        %1857 = vmatprep.mubr.bf16.mxu0 %v1708
        %1858 = vmatmul.mubr.bf16.gmra.mrb[0].mxu0 %v1707
        %v1859 = vpop.f32.mrb[0].mxu0
        %v1860 = vadd.f32 0.0, %v1859
        %v1861 = vpop.f32.mrb[0].mxu0
        %v1862 = vpop.f32.mrb[0].mxu0
        %v1863 = vadd.f32 0.0, %v1862
        %v1864 = vpop.f32.mrb[0].mxu0
        %1865 = vmatprep.mubr.bf16.mxu0 %v1710
        %1866 = vmatmul.mubr.bf16.gmra.mrb[0].mxu0 %v1709
        %v1867 = vpop.f32.mrb[0].mxu0
        %v1868 = vadd.f32 0.0, %v1867
        %v1869 = vpop.f32.mrb[0].mxu0
        %v1870 = vpop.f32.mrb[0].mxu0
        %v1871 = vadd.f32 0.0, %v1870
        %v1872 = vpop.f32.mrb[0].mxu0
        %1873 = vmatprep.mubr.bf16.mxu0 %v1712
        %1874 = vmatmul.mubr.bf16.gmra.mrb[0].mxu0 %v1711
        %v1875 = vpop.f32.mrb[0].mxu0
        %v1876 = vadd.f32 0.0, %v1875
        %v1877 = vpop.f32.mrb[0].mxu0
        %v1878 = vpop.f32.mrb[0].mxu0
        %v1879 = vadd.f32 0.0, %v1878
        %v1880 = vpop.f32.mrb[0].mxu0
        %1881 = vmatprep.mubr.bf16.mxu0 %v1714
        %1882 = vmatmul.mubr.bf16.gmra.mrb[0].mxu0 %v1713
        %v1883 = vpop.f32.mrb[0].mxu0
        %v1884 = vadd.f32 0.0, %v1883
        %v1885 = vpop.f32.mrb[0].mxu0
        %v1886 = vpop.f32.mrb[0].mxu0
        %v1887 = vadd.f32 0.0, %v1886
        %v1888 = vpop.f32.mrb[0].mxu0
        %1889 = vmatprep.mubr.bf16.mxu0 %v1716
        %1890 = vmatmul.mubr.bf16.gmra.mrb[0].mxu0 %v1715
        %v1891 = vpop.f32.mrb[0].mxu0
        %v1892 = vadd.f32 0.0, %v1891
        %v1893 = vpop.f32.mrb[0].mxu0
        %v1894 = vpop.f32.mrb[0].mxu0
        %v1895 = vadd.f32 0.0, %v1894
        %v1896 = vpop.f32.mrb[0].mxu0
        %1897 = vmatprep.mubr.bf16.mxu0 %v1718
        %1898 = vmatmul.mubr.bf16.gmra.mrb[0].mxu0 %v1717
        %v1899 = vpop.f32.mrb[0].mxu0
        %v1900 = vadd.f32 0.0, %v1899
        %v1901 = vpop.f32.mrb[0].mxu0
        %v1902 = vpop.f32.mrb[0].mxu0
        %v1903 = vadd.f32 0.0, %v1902
        %v1904 = vpop.f32.mrb[0].mxu0
        %1905 = vmatprep.mubr.bf16.mxu0 %v1720
        %1906 = vmatmul.mubr.bf16.gmra.mrb[0].mxu0 %v1719
        %v1907 = vpop.f32.mrb[0].mxu0
        %v1908 = vadd.f32 0.0, %v1907
        %v1909 = vpop.f32.mrb[0].mxu0
        %v1910 = vpop.f32.mrb[0].mxu0
        %v1911 = vadd.f32 0.0, %v1910
        %v1912 = vpop.f32.mrb[0].mxu0
        %1913 = vdwg.mxu0
        %v1914 = vadd.f32 %v1495, %v1788
        %v1915 = vadd.f32 %v1496, %v1791
        %v1916 = vadd.f32 %v1497, %v1796
        %v1917 = vadd.f32 %v1498, %v1799
        %v1918 = vadd.f32 %v1499, %v1804
        %v1919 = vadd.f32 %v1500, %v1807
        %v1920 = vadd.f32 %v1501, %v1812
        %v1921 = vadd.f32 %v1502, %v1815
        %v1922 = vadd.f32 %v1503, %v1820
        %v1923 = vadd.f32 %v1504, %v1823
        %v1924 = vadd.f32 %v1505, %v1828
        %v1925 = vadd.f32 %v1506, %v1831
        %v1926 = vadd.f32 %v1507, %v1836
        %v1927 = vadd.f32 %v1508, %v1839
        %v1928 = vadd.f32 %v1509, %v1844
        %v1929 = vadd.f32 %v1510, %v1847
        %v1930 = vadd.f32 %v1511, %v1852
        %v1931 = vadd.f32 %v1512, %v1855
        %v1932 = vadd.f32 %v1513, %v1860
        %v1933 = vadd.f32 %v1514, %v1863
        %v1934 = vadd.f32 %v1515, %v1868
        %v1935 = vadd.f32 %v1516, %v1871
        %v1936 = vadd.f32 %v1517, %v1876
        %v1937 = vadd.f32 %v1518, %v1879
        %v1938 = vadd.f32 %v1519, %v1884
        %v1939 = vadd.f32 %v1520, %v1887
        %v1940 = vadd.f32 %v1521, %v1892
        %v1941 = vadd.f32 %v1522, %v1895
        %v1942 = vadd.f32 %v1523, %v1900
        %v1943 = vadd.f32 %v1524, %v1903
        %v1944 = vadd.f32 %v1525, %v1908
        %v1945 = vadd.f32 %v1526, %v1911
        %1946 = vst [vmem:[#allocation4] sm:$0xff] %v1914
        %1947 = vst [vmem:[#allocation4 + $0x8] sm:$0xff] %v1915
        %1948 = vst [vmem:[#allocation4 + $0x10] sm:$0xff] %v1916
        %1949 = vst [vmem:[#allocation4 + $0x18] sm:$0xff] %v1917
        %1950 = vst [vmem:[#allocation4 + $0x20] sm:$0xff] %v1918
        %1951 = vst [vmem:[#allocation4 + $0x28] sm:$0xff] %v1919
        %1952 = vst [vmem:[#allocation4 + $0x30] sm:$0xff] %v1920
        %1953 = vst [vmem:[#allocation4 + $0x38] sm:$0xff] %v1921
        %1954 = vst [vmem:[#allocation4 + $0x40] sm:$0xff] %v1922
        %1955 = vst [vmem:[#allocation4 + $0x48] sm:$0xff] %v1923
        %1956 = vst [vmem:[#allocation4 + $0x50] sm:$0xff] %v1924
        %1957 = vst [vmem:[#allocation4 + $0x58] sm:$0xff] %v1925
        %1958 = vst [vmem:[#allocation4 + $0x60] sm:$0xff] %v1926
        %1959 = vst [vmem:[#allocation4 + $0x68] sm:$0xff] %v1927
        %1960 = vst [vmem:[#allocation4 + $0x70] sm:$0xff] %v1928
        %1961 = vst [vmem:[#allocation4 + $0x78] sm:$0xff] %v1929
        %1962 = vst [vmem:[#allocation4 + $0x80] sm:$0xff] %v1930
        %1963 = vst [vmem:[#allocation4 + $0x88] sm:$0xff] %v1931
        %1964 = vst [vmem:[#allocation4 + $0x90] sm:$0xff] %v1932
        %1965 = vst [vmem:[#allocation4 + $0x98] sm:$0xff] %v1933
        %1966 = vst [vmem:[#allocation4 + $0xa0] sm:$0xff] %v1934
        %1967 = vst [vmem:[#allocation4 + $0xa8] sm:$0xff] %v1935
        %1968 = vst [vmem:[#allocation4 + $0xb0] sm:$0xff] %v1936
        %1969 = vst [vmem:[#allocation4 + $0xb8] sm:$0xff] %v1937
        %1970 = vst [vmem:[#allocation4 + $0xc0] sm:$0xff] %v1938
        %1971 = vst [vmem:[#allocation4 + $0xc8] sm:$0xff] %v1939
        %1972 = vst [vmem:[#allocation4 + $0xd0] sm:$0xff] %v1940
        %1973 = vst [vmem:[#allocation4 + $0xd8] sm:$0xff] %v1941
        %1974 = vst [vmem:[#allocation4 + $0xe0] sm:$0xff] %v1942
        %1975 = vst [vmem:[#allocation4 + $0xe8] sm:$0xff] %v1943
        %1976 = vst [vmem:[#allocation4 + $0xf0] sm:$0xff] %v1944
        %1977 = vst [vmem:[#allocation4 + $0xf8] sm:$0xff] %v1945
        %p1978 = scmp.eq.s32.totalorder %s35, 1
        // Predicated region
        $region81: #{tpu_custom_call.1} parent=59 // pred_check
          %p1979 = pneg %p1978
        $region82: #{tpu_custom_call.1} parent=59 // pred_check_branch
          %1981 = sbr.rel (%p1979) target = $region84
        $region83: #{tpu_custom_call.1} parent=59 // pred_region
          %v1982 = vld [vmem:[#allocation4] sm:$0xff]
          %v1983 = vld [vmem:[#allocation4 + $0x8] sm:$0xff]
          %v1984 = vld [vmem:[#allocation4 + $0x10] sm:$0xff]
          %v1985 = vld [vmem:[#allocation4 + $0x18] sm:$0xff]
          %v1986 = vld [vmem:[#allocation4 + $0x20] sm:$0xff]
          %v1987 = vld [vmem:[#allocation4 + $0x28] sm:$0xff]
          %v1988 = vld [vmem:[#allocation4 + $0x30] sm:$0xff]
          %v1989 = vld [vmem:[#allocation4 + $0x38] sm:$0xff]
          %v1990 = vld [vmem:[#allocation4 + $0x40] sm:$0xff]
          %v1991 = vld [vmem:[#allocation4 + $0x48] sm:$0xff]
          %v1992 = vld [vmem:[#allocation4 + $0x50] sm:$0xff]
          %v1993 = vld [vmem:[#allocation4 + $0x58] sm:$0xff]
          %v1994 = vld [vmem:[#allocation4 + $0x60] sm:$0xff]
          %v1995 = vld [vmem:[#allocation4 + $0x68] sm:$0xff]
          %v1996 = vld [vmem:[#allocation4 + $0x70] sm:$0xff]
          %v1997 = vld [vmem:[#allocation4 + $0x78] sm:$0xff]
          %v1998 = vld [vmem:[#allocation4 + $0x80] sm:$0xff]
          %v1999 = vld [vmem:[#allocation4 + $0x88] sm:$0xff]
          %v2000 = vld [vmem:[#allocation4 + $0x90] sm:$0xff]
          %v2001 = vld [vmem:[#allocation4 + $0x98] sm:$0xff]
          %v2002 = vld [vmem:[#allocation4 + $0xa0] sm:$0xff]
          %v2003 = vld [vmem:[#allocation4 + $0xa8] sm:$0xff]
          %v2004 = vld [vmem:[#allocation4 + $0xb0] sm:$0xff]
          %v2005 = vld [vmem:[#allocation4 + $0xb8] sm:$0xff]
          %v2006 = vld [vmem:[#allocation4 + $0xc0] sm:$0xff]
          %v2007 = vld [vmem:[#allocation4 + $0xc8] sm:$0xff]
          %v2008 = vld [vmem:[#allocation4 + $0xd0] sm:$0xff]
          %v2009 = vld [vmem:[#allocation4 + $0xd8] sm:$0xff]
          %v2010 = vld [vmem:[#allocation4 + $0xe0] sm:$0xff]
          %v2011 = vld [vmem:[#allocation4 + $0xe8] sm:$0xff]
          %v2012 = vld [vmem:[#allocation4 + $0xf0] sm:$0xff]
          %v2013 = vld [vmem:[#allocation4 + $0xf8] sm:$0xff]
          %s2014 = scalar_lea.vmem [#allocation3], %s421
          %v2015 = vld [vmem:[%s2014] sm:$0xff]
          %v2016 = vld [vmem:[%s2014 + $0x8] sm:$0xff]
          %v2017 = vld [vmem:[%s2014 + $0x10] sm:$0xff]
          %v2018 = vld [vmem:[%s2014 + $0x18] sm:$0xff]
          %v2019 = vld [vmem:[%s2014 + $0x20] sm:$0xff]
          %v2020 = vld [vmem:[%s2014 + $0x28] sm:$0xff]
          %v2021 = vld [vmem:[%s2014 + $0x30] sm:$0xff]
          %v2022 = vld [vmem:[%s2014 + $0x38] sm:$0xff]
          %v2023 = vld [vmem:[%s2014 + $0x40] sm:$0xff]
          %v2024 = vld [vmem:[%s2014 + $0x48] sm:$0xff]
          %v2025 = vld [vmem:[%s2014 + $0x50] sm:$0xff]
          %v2026 = vld [vmem:[%s2014 + $0x58] sm:$0xff]
          %v2027 = vld [vmem:[%s2014 + $0x60] sm:$0xff]
          %v2028 = vld [vmem:[%s2014 + $0x68] sm:$0xff]
          %v2029 = vld [vmem:[%s2014 + $0x70] sm:$0xff]
          %v2030 = vld [vmem:[%s2014 + $0x78] sm:$0xff]
          %v2031 = vld [vmem:[%s2014 + $0x80] sm:$0xff]
          %v2032 = vld [vmem:[%s2014 + $0x88] sm:$0xff]
          %v2033 = vld [vmem:[%s2014 + $0x90] sm:$0xff]
          %v2034 = vld [vmem:[%s2014 + $0x98] sm:$0xff]
          %v2035 = vld [vmem:[%s2014 + $0xa0] sm:$0xff]
          %v2036 = vld [vmem:[%s2014 + $0xa8] sm:$0xff]
          %v2037 = vld [vmem:[%s2014 + $0xb0] sm:$0xff]
          %v2038 = vld [vmem:[%s2014 + $0xb8] sm:$0xff]
          %v2039 = vld [vmem:[%s2014 + $0xc0] sm:$0xff]
          %v2040 = vld [vmem:[%s2014 + $0xc8] sm:$0xff]
          %v2041 = vld [vmem:[%s2014 + $0xd0] sm:$0xff]
          %v2042 = vld [vmem:[%s2014 + $0xd8] sm:$0xff]
          %v2043 = vld [vmem:[%s2014 + $0xe0] sm:$0xff]
          %v2044 = vld [vmem:[%s2014 + $0xe8] sm:$0xff]
          %v2045 = vld [vmem:[%s2014 + $0xf0] sm:$0xff]
          %v2046 = vld [vmem:[%s2014 + $0xf8] sm:$0xff]
          %s2047 = sadd.s32 %s33, 1
          %s2048 = smul.u32 %s2047, 128
          %s2049 = scalar_lea.vmem %s6, %s2048
          %v2050 = vld [vmem:[%s2049] sm:$0xff]
          %v2051 = vld [vmem:[%s2049 + $0x8] sm:$0xff]
          %v2052 = vld [vmem:[%s2049 + $0x10] sm:$0xff]
          %v2053 = vld [vmem:[%s2049 + $0x18] sm:$0xff]
          %v2054 = vld [vmem:[%s2049 + $0x20] sm:$0xff]
          %v2055 = vld [vmem:[%s2049 + $0x28] sm:$0xff]
          %v2056 = vld [vmem:[%s2049 + $0x30] sm:$0xff]
          %v2057 = vld [vmem:[%s2049 + $0x38] sm:$0xff]
          %v2058 = vld [vmem:[%s2049 + $0x40] sm:$0xff]
          %v2059 = vld [vmem:[%s2049 + $0x48] sm:$0xff]
          %v2060 = vld [vmem:[%s2049 + $0x50] sm:$0xff]
          %v2061 = vld [vmem:[%s2049 + $0x58] sm:$0xff]
          %v2062 = vld [vmem:[%s2049 + $0x60] sm:$0xff]
          %v2063 = vld [vmem:[%s2049 + $0x68] sm:$0xff]
          %v2064 = vld [vmem:[%s2049 + $0x70] sm:$0xff]
          %v2065 = vld [vmem:[%s2049 + $0x78] sm:$0xff]
          %2066 = vmatprep.subr.mxu0 0.0
          %2067 = vmatpush1.msra.mxu0 %v2050
          %2068 = vmatprep.subr.mxu0 0.0
          %2069 = vmatpush1.msra.mxu0 %v2051
          %2070 = vmatprep.subr.mxu0 0.0
          %2071 = vmatpush1.msra.mxu0 %v2052
          %2072 = vmatprep.subr.mxu0 0.0
          %2073 = vmatpush1.msra.mxu0 %v2053
          %2074 = vmatprep.subr.mxu0 0.0
          %2075 = vmatpush1.msra.mxu0 %v2054
          %2076 = vmatprep.subr.mxu0 0.0
          %2077 = vmatpush1.msra.mxu0 %v2055
          %2078 = vmatprep.subr.mxu0 0.0
          %2079 = vmatpush1.msra.mxu0 %v2056
          %2080 = vmatprep.subr.mxu0 0.0
          %2081 = vmatpush1.msra.mxu0 %v2057
          %2082 = vmatprep.subr.mxu0 0.0
          %2083 = vmatpush1.msra.mxu0 %v2058
          %2084 = vmatprep.subr.mxu0 0.0
          %2085 = vmatpush1.msra.mxu0 %v2059
          %2086 = vmatprep.subr.mxu0 0.0
          %2087 = vmatpush1.msra.mxu0 %v2060
          %2088 = vmatprep.subr.mxu0 0.0
          %2089 = vmatpush1.msra.mxu0 %v2061
          %2090 = vmatprep.subr.mxu0 0.0
          %2091 = vmatpush1.msra.mxu0 %v2062
          %2092 = vmatprep.subr.mxu0 0.0
          %2093 = vmatpush1.msra.mxu0 %v2063
          %2094 = vmatprep.subr.mxu0 0.0
          %2095 = vmatpush1.msra.mxu0 %v2064
          %2096 = vmatprep.subr.mxu0 0.0
          %2097 = vmatpush1.msra.mxu0 %v2065
          %2098 = vmatprep.subr.mxu0 0.0
          %2099 = vmatpush1.msra.mxu0 0.0
          %2100 = vmatprep.subr.mxu0 0.0
          %2101 = vmatpush1.msra.mxu0 0.0
          %2102 = vmatprep.subr.mxu0 0.0
          %2103 = vmatpush1.msra.mxu0 0.0
          %2104 = vmatprep.subr.mxu0 0.0
          %2105 = vmatpush1.msra.mxu0 0.0
          %2106 = vmatprep.subr.mxu0 0.0
          %2107 = vmatpush1.msra.mxu0 0.0
          %2108 = vmatprep.subr.mxu0 0.0
          %2109 = vmatpush1.msra.mxu0 0.0
          %2110 = vmatprep.subr.mxu0 0.0
          %2111 = vmatpush1.msra.mxu0 0.0
          %2112 = vmatprep.subr.mxu0 0.0
          %2113 = vmatpush1.msra.mxu0 0.0
          %2114 = vmatprep.subr.mxu0 0.0
          %2115 = vmatpush1.msra.mxu0 0.0
          %2116 = vmatprep.subr.mxu0 0.0
          %2117 = vmatpush1.msra.mxu0 0.0
          %2118 = vmatprep.subr.mxu0 0.0
          %2119 = vmatpush1.msra.mxu0 0.0
          %2120 = vmatprep.subr.mxu0 0.0
          %2121 = vmatpush1.msra.mxu0 0.0
          %2122 = vmatprep.subr.mxu0 0.0
          %2123 = vmatpush1.msra.mxu0 0.0
          %2124 = vmatprep.subr.mxu0 0.0
          %2125 = vmatpush1.msra.mxu0 0.0
          %2126 = vmatprep.subr.mxu0 0.0
          %2127 = vmatpush1.msra.mxu0 0.0
          %2128 = vmatprep.subr.mxu0 0.0
          %2129 = vmatpush1.msra.mxu0 0.0
          %2130 = vmatprep.mubr.f32.mxu0 0.0
          %2131 = vmatmul.mubr.f32.gmra.mrb[0].mxu0 %v1982
          %v2132 = vpop.f32.mrb[0].mxu0
          %v2133 = vadd.f32 0.0, %v2132
          %v2134 = vpop.f32.mrb[0].mxu0
          %2135 = vmatprep.mubr.f32.mxu0 0.0
          %2136 = vmatmul.mubr.f32.gmra.mrb[0].mxu0 %v1983
          %v2137 = vpop.f32.mrb[0].mxu0
          %v2138 = vadd.f32 0.0, %v2137
          %v2139 = vpop.f32.mrb[0].mxu0
          %2140 = vmatprep.mubr.f32.mxu0 0.0
          %2141 = vmatmul.mubr.f32.gmra.mrb[0].mxu0 %v1984
          %v2142 = vpop.f32.mrb[0].mxu0
          %v2143 = vadd.f32 0.0, %v2142
          %v2144 = vpop.f32.mrb[0].mxu0
          %2145 = vmatprep.mubr.f32.mxu0 0.0
          %2146 = vmatmul.mubr.f32.gmra.mrb[0].mxu0 %v1985
          %v2147 = vpop.f32.mrb[0].mxu0
          %v2148 = vadd.f32 0.0, %v2147
          %v2149 = vpop.f32.mrb[0].mxu0
          %2150 = vmatprep.mubr.f32.mxu0 0.0
          %2151 = vmatmul.mubr.f32.gmra.mrb[0].mxu0 %v1986
          %v2152 = vpop.f32.mrb[0].mxu0
          %v2153 = vadd.f32 0.0, %v2152
          %v2154 = vpop.f32.mrb[0].mxu0
          %2155 = vmatprep.mubr.f32.mxu0 0.0
          %2156 = vmatmul.mubr.f32.gmra.mrb[0].mxu0 %v1987
          %v2157 = vpop.f32.mrb[0].mxu0
          %v2158 = vadd.f32 0.0, %v2157
          %v2159 = vpop.f32.mrb[0].mxu0
          %2160 = vmatprep.mubr.f32.mxu0 0.0
          %2161 = vmatmul.mubr.f32.gmra.mrb[0].mxu0 %v1988
          %v2162 = vpop.f32.mrb[0].mxu0
          %v2163 = vadd.f32 0.0, %v2162
          %v2164 = vpop.f32.mrb[0].mxu0
          %2165 = vmatprep.mubr.f32.mxu0 0.0
          %2166 = vmatmul.mubr.f32.gmra.mrb[0].mxu0 %v1989
          %v2167 = vpop.f32.mrb[0].mxu0
          %v2168 = vadd.f32 0.0, %v2167
          %v2169 = vpop.f32.mrb[0].mxu0
          %2170 = vmatprep.mubr.f32.mxu0 0.0
          %2171 = vmatmul.mubr.f32.gmra.mrb[0].mxu0 %v1990
          %v2172 = vpop.f32.mrb[0].mxu0
          %v2173 = vadd.f32 0.0, %v2172
          %v2174 = vpop.f32.mrb[0].mxu0
          %2175 = vmatprep.mubr.f32.mxu0 0.0
          %2176 = vmatmul.mubr.f32.gmra.mrb[0].mxu0 %v1991
          %v2177 = vpop.f32.mrb[0].mxu0
          %v2178 = vadd.f32 0.0, %v2177
          %v2179 = vpop.f32.mrb[0].mxu0
          %2180 = vmatprep.mubr.f32.mxu0 0.0
          %2181 = vmatmul.mubr.f32.gmra.mrb[0].mxu0 %v1992
          %v2182 = vpop.f32.mrb[0].mxu0
          %v2183 = vadd.f32 0.0, %v2182
          %v2184 = vpop.f32.mrb[0].mxu0
          %2185 = vmatprep.mubr.f32.mxu0 0.0
          %2186 = vmatmul.mubr.f32.gmra.mrb[0].mxu0 %v1993
          %v2187 = vpop.f32.mrb[0].mxu0
          %v2188 = vadd.f32 0.0, %v2187
          %v2189 = vpop.f32.mrb[0].mxu0
          %2190 = vmatprep.mubr.f32.mxu0 0.0
          %2191 = vmatmul.mubr.f32.gmra.mrb[0].mxu0 %v1994
          %v2192 = vpop.f32.mrb[0].mxu0
          %v2193 = vadd.f32 0.0, %v2192
          %v2194 = vpop.f32.mrb[0].mxu0
          %2195 = vmatprep.mubr.f32.mxu0 0.0
          %2196 = vmatmul.mubr.f32.gmra.mrb[0].mxu0 %v1995
          %v2197 = vpop.f32.mrb[0].mxu0
          %v2198 = vadd.f32 0.0, %v2197
          %v2199 = vpop.f32.mrb[0].mxu0
          %2200 = vmatprep.mubr.f32.mxu0 0.0
          %2201 = vmatmul.mubr.f32.gmra.mrb[0].mxu0 %v1996
          %v2202 = vpop.f32.mrb[0].mxu0
          %v2203 = vadd.f32 0.0, %v2202
          %v2204 = vpop.f32.mrb[0].mxu0
          %2205 = vmatprep.mubr.f32.mxu0 0.0
          %2206 = vmatmul.mubr.f32.gmra.mrb[0].mxu0 %v1997
          %v2207 = vpop.f32.mrb[0].mxu0
          %v2208 = vadd.f32 0.0, %v2207
          %v2209 = vpop.f32.mrb[0].mxu0
          %2210 = vmatprep.mubr.f32.mxu0 0.0
          %2211 = vmatmul.mubr.f32.gmra.mrb[0].mxu0 %v1998
          %v2212 = vpop.f32.mrb[0].mxu0
          %v2213 = vadd.f32 0.0, %v2212
          %v2214 = vpop.f32.mrb[0].mxu0
          %2215 = vmatprep.mubr.f32.mxu0 0.0
          %2216 = vmatmul.mubr.f32.gmra.mrb[0].mxu0 %v1999
          %v2217 = vpop.f32.mrb[0].mxu0
          %v2218 = vadd.f32 0.0, %v2217
          %v2219 = vpop.f32.mrb[0].mxu0
          %2220 = vmatprep.mubr.f32.mxu0 0.0
          %2221 = vmatmul.mubr.f32.gmra.mrb[0].mxu0 %v2000
          %v2222 = vpop.f32.mrb[0].mxu0
          %v2223 = vadd.f32 0.0, %v2222
          %v2224 = vpop.f32.mrb[0].mxu0
          %2225 = vmatprep.mubr.f32.mxu0 0.0
          %2226 = vmatmul.mubr.f32.gmra.mrb[0].mxu0 %v2001
          %v2227 = vpop.f32.mrb[0].mxu0
          %v2228 = vadd.f32 0.0, %v2227
          %v2229 = vpop.f32.mrb[0].mxu0
          %2230 = vmatprep.mubr.f32.mxu0 0.0
          %2231 = vmatmul.mubr.f32.gmra.mrb[0].mxu0 %v2002
          %v2232 = vpop.f32.mrb[0].mxu0
          %v2233 = vadd.f32 0.0, %v2232
          %v2234 = vpop.f32.mrb[0].mxu0
          %2235 = vmatprep.mubr.f32.mxu0 0.0
          %2236 = vmatmul.mubr.f32.gmra.mrb[0].mxu0 %v2003
          %v2237 = vpop.f32.mrb[0].mxu0
          %v2238 = vadd.f32 0.0, %v2237
          %v2239 = vpop.f32.mrb[0].mxu0
          %2240 = vmatprep.mubr.f32.mxu0 0.0
          %2241 = vmatmul.mubr.f32.gmra.mrb[0].mxu0 %v2004
          %v2242 = vpop.f32.mrb[0].mxu0
          %v2243 = vadd.f32 0.0, %v2242
          %v2244 = vpop.f32.mrb[0].mxu0
          %2245 = vmatprep.mubr.f32.mxu0 0.0
          %2246 = vmatmul.mubr.f32.gmra.mrb[0].mxu0 %v2005
          %v2247 = vpop.f32.mrb[0].mxu0
          %v2248 = vadd.f32 0.0, %v2247
          %v2249 = vpop.f32.mrb[0].mxu0
          %2250 = vmatprep.mubr.f32.mxu0 0.0
          %2251 = vmatmul.mubr.f32.gmra.mrb[0].mxu0 %v2006
          %v2252 = vpop.f32.mrb[0].mxu0
          %v2253 = vadd.f32 0.0, %v2252
          %v2254 = vpop.f32.mrb[0].mxu0
          %2255 = vmatprep.mubr.f32.mxu0 0.0
          %2256 = vmatmul.mubr.f32.gmra.mrb[0].mxu0 %v2007
          %v2257 = vpop.f32.mrb[0].mxu0
          %v2258 = vadd.f32 0.0, %v2257
          %v2259 = vpop.f32.mrb[0].mxu0
          %2260 = vmatprep.mubr.f32.mxu0 0.0
          %2261 = vmatmul.mubr.f32.gmra.mrb[0].mxu0 %v2008
          %v2262 = vpop.f32.mrb[0].mxu0
          %v2263 = vadd.f32 0.0, %v2262
          %v2264 = vpop.f32.mrb[0].mxu0
          %2265 = vmatprep.mubr.f32.mxu0 0.0
          %2266 = vmatmul.mubr.f32.gmra.mrb[0].mxu0 %v2009
          %v2267 = vpop.f32.mrb[0].mxu0
          %v2268 = vadd.f32 0.0, %v2267
          %v2269 = vpop.f32.mrb[0].mxu0
          %2270 = vmatprep.mubr.f32.mxu0 0.0
          %2271 = vmatmul.mubr.f32.gmra.mrb[0].mxu0 %v2010
          %v2272 = vpop.f32.mrb[0].mxu0
          %v2273 = vadd.f32 0.0, %v2272
          %v2274 = vpop.f32.mrb[0].mxu0
          %2275 = vmatprep.mubr.f32.mxu0 0.0
          %2276 = vmatmul.mubr.f32.gmra.mrb[0].mxu0 %v2011
          %v2277 = vpop.f32.mrb[0].mxu0
          %v2278 = vadd.f32 0.0, %v2277
          %v2279 = vpop.f32.mrb[0].mxu0
          %2280 = vmatprep.mubr.f32.mxu0 0.0
          %2281 = vmatmul.mubr.f32.gmra.mrb[0].mxu0 %v2012
          %v2282 = vpop.f32.mrb[0].mxu0
          %v2283 = vadd.f32 0.0, %v2282
          %v2284 = vpop.f32.mrb[0].mxu0
          %2285 = vmatprep.mubr.f32.mxu0 0.0
          %2286 = vmatmul.mubr.f32.gmra.mrb[0].mxu0 %v2013
          %v2287 = vpop.f32.mrb[0].mxu0
          %v2288 = vadd.f32 0.0, %v2287
          %v2289 = vpop.f32.mrb[0].mxu0
          %2290 = vdwg.mxu0
          %v2291 = vadd.f32 %v2015, %v2133
          %v2292 = vadd.f32 %v2016, %v2138
          %v2293 = vadd.f32 %v2017, %v2143
          %v2294 = vadd.f32 %v2018, %v2148
          %v2295 = vadd.f32 %v2019, %v2153
          %v2296 = vadd.f32 %v2020, %v2158
          %v2297 = vadd.f32 %v2021, %v2163
          %v2298 = vadd.f32 %v2022, %v2168
          %v2299 = vadd.f32 %v2023, %v2173
          %v2300 = vadd.f32 %v2024, %v2178
          %v2301 = vadd.f32 %v2025, %v2183
          %v2302 = vadd.f32 %v2026, %v2188
          %v2303 = vadd.f32 %v2027, %v2193
          %v2304 = vadd.f32 %v2028, %v2198
          %v2305 = vadd.f32 %v2029, %v2203
          %v2306 = vadd.f32 %v2030, %v2208
          %v2307 = vadd.f32 %v2031, %v2213
          %v2308 = vadd.f32 %v2032, %v2218
          %v2309 = vadd.f32 %v2033, %v2223
          %v2310 = vadd.f32 %v2034, %v2228
          %v2311 = vadd.f32 %v2035, %v2233
          %v2312 = vadd.f32 %v2036, %v2238
          %v2313 = vadd.f32 %v2037, %v2243
          %v2314 = vadd.f32 %v2038, %v2248
          %v2315 = vadd.f32 %v2039, %v2253
          %v2316 = vadd.f32 %v2040, %v2258
          %v2317 = vadd.f32 %v2041, %v2263
          %v2318 = vadd.f32 %v2042, %v2268
          %v2319 = vadd.f32 %v2043, %v2273
          %v2320 = vadd.f32 %v2044, %v2278
          %v2321 = vadd.f32 %v2045, %v2283
          %v2322 = vadd.f32 %v2046, %v2288
          %2323 = vst [vmem:[%s2014] sm:$0xff] %v2291
          %2324 = vst [vmem:[%s2014 + $0x8] sm:$0xff] %v2292
          %2325 = vst [vmem:[%s2014 + $0x10] sm:$0xff] %v2293
          %2326 = vst [vmem:[%s2014 + $0x18] sm:$0xff] %v2294
          %2327 = vst [vmem:[%s2014 + $0x20] sm:$0xff] %v2295
          %2328 = vst [vmem:[%s2014 + $0x28] sm:$0xff] %v2296
          %2329 = vst [vmem:[%s2014 + $0x30] sm:$0xff] %v2297
          %2330 = vst [vmem:[%s2014 + $0x38] sm:$0xff] %v2298
          %2331 = vst [vmem:[%s2014 + $0x40] sm:$0xff] %v2299
          %2332 = vst [vmem:[%s2014 + $0x48] sm:$0xff] %v2300
          %2333 = vst [vmem:[%s2014 + $0x50] sm:$0xff] %v2301
          %2334 = vst [vmem:[%s2014 + $0x58] sm:$0xff] %v2302
          %2335 = vst [vmem:[%s2014 + $0x60] sm:$0xff] %v2303
          %2336 = vst [vmem:[%s2014 + $0x68] sm:$0xff] %v2304
          %2337 = vst [vmem:[%s2014 + $0x70] sm:$0xff] %v2305
          %2338 = vst [vmem:[%s2014 + $0x78] sm:$0xff] %v2306
          %2339 = vst [vmem:[%s2014 + $0x80] sm:$0xff] %v2307
          %2340 = vst [vmem:[%s2014 + $0x88] sm:$0xff] %v2308
          %2341 = vst [vmem:[%s2014 + $0x90] sm:$0xff] %v2309
          %2342 = vst [vmem:[%s2014 + $0x98] sm:$0xff] %v2310
          %2343 = vst [vmem:[%s2014 + $0xa0] sm:$0xff] %v2311
          %2344 = vst [vmem:[%s2014 + $0xa8] sm:$0xff] %v2312
          %2345 = vst [vmem:[%s2014 + $0xb0] sm:$0xff] %v2313
          %2346 = vst [vmem:[%s2014 + $0xb8] sm:$0xff] %v2314
          %2347 = vst [vmem:[%s2014 + $0xc0] sm:$0xff] %v2315
          %2348 = vst [vmem:[%s2014 + $0xc8] sm:$0xff] %v2316
          %2349 = vst [vmem:[%s2014 + $0xd0] sm:$0xff] %v2317
          %2350 = vst [vmem:[%s2014 + $0xd8] sm:$0xff] %v2318
          %2351 = vst [vmem:[%s2014 + $0xe0] sm:$0xff] %v2319
          %2352 = vst [vmem:[%s2014 + $0xe8] sm:$0xff] %v2320
          %2353 = vst [vmem:[%s2014 + $0xf0] sm:$0xff] %v2321
          %2354 = vst [vmem:[%s2014 + $0xf8] sm:$0xff] %v2322
          %p2355 = scmp.lt.s32.totalorder %s33, 1
          // Predicated region
          $region85: #{tpu_custom_call.1} parent=83 // pred_check
            %p2356 = pneg %p2355
          $region86: #{tpu_custom_call.1} parent=83 // pred_check_branch
            %2358 = sbr.rel (%p2356) target = $region88
          $region87: #{tpu_custom_call.1} parent=83 // pred_region
            %v2359 = vpack.c.bf16 %v1983, %v1982
            %v2360 = vpack.c.bf16 %v1985, %v1984
            %v2361 = vpack.c.bf16 %v1987, %v1986
            %v2362 = vpack.c.bf16 %v1989, %v1988
            %v2363 = vpack.c.bf16 %v1991, %v1990
            %v2364 = vpack.c.bf16 %v1993, %v1992
            %v2365 = vpack.c.bf16 %v1995, %v1994
            %v2366 = vpack.c.bf16 %v1997, %v1996
            %v2367 = vpack.c.bf16 %v1999, %v1998
            %v2368 = vpack.c.bf16 %v2001, %v2000
            %v2369 = vpack.c.bf16 %v2003, %v2002
            %v2370 = vpack.c.bf16 %v2005, %v2004
            %v2371 = vpack.c.bf16 %v2007, %v2006
            %v2372 = vpack.c.bf16 %v2009, %v2008
            %v2373 = vpack.c.bf16 %v2011, %v2010
            %v2374 = vpack.c.bf16 %v2013, %v2012
            %p2375 = scmp.lt.s32.totalorder %s2047, 0
            %s2376 = ssub.s32 0, %s2047
            %s2377 = scalar_select %p2375, %s2376, %s2047
            %s2378 = sand.u32 %s2377, 1
            %s2379 = ssub.s32 0, %s2378
            %s2380 = scalar_select %p2375, %s2379, %s2378
            %p2381 = scmp.ne.s32.totalorder %s2380, 0
            %p2382 = scmp.lt.s32.totalorder %s2380, 0
            %p2383 = pnand %p2382, %p2381
            %p2384 = pneg %p2383
            %s2385 = sadd.s32 %s2380, 2
            %s2386 = scalar_select %p2384, %s2385, %s2380
            %s2387 = sshra.s32 %s421, 4
            %s2388 = sand.u32 %s421, 15
            %s2389 = smul.u32 %s2386, 32
            %s2390 = sadd.s32 %s2387, %s2389
            %s2391 = smul.addr %s2390, 8
            %s2392 = scalar_lea.vmem [#allocation2], %s2391
            %2393 = vst [vmem:[%s2392] sm:$0xff] %v2359
            %2394 = vst [vmem:[%s2392 + $0x8] sm:$0xff] %v2360
            %2395 = vst [vmem:[%s2392 + $0x10] sm:$0xff] %v2361
            %2396 = vst [vmem:[%s2392 + $0x18] sm:$0xff] %v2362
            %2397 = vst [vmem:[%s2392 + $0x20] sm:$0xff] %v2363
            %2398 = vst [vmem:[%s2392 + $0x28] sm:$0xff] %v2364
            %2399 = vst [vmem:[%s2392 + $0x30] sm:$0xff] %v2365
            %2400 = vst [vmem:[%s2392 + $0x38] sm:$0xff] %v2366
            %2401 = vst [vmem:[%s2392 + $0x40] sm:$0xff] %v2367
            %2402 = vst [vmem:[%s2392 + $0x48] sm:$0xff] %v2368
            %2403 = vst [vmem:[%s2392 + $0x50] sm:$0xff] %v2369
            %2404 = vst [vmem:[%s2392 + $0x58] sm:$0xff] %v2370
            %2405 = vst [vmem:[%s2392 + $0x60] sm:$0xff] %v2371
            %2406 = vst [vmem:[%s2392 + $0x68] sm:$0xff] %v2372
            %2407 = vst [vmem:[%s2392 + $0x70] sm:$0xff] %v2373
            %2408 = vst [vmem:[%s2392 + $0x78] sm:$0xff] %v2374
          $region88: #{tpu_custom_call.1} parent=83 // pred_fallthru
            _
          %p2409 = scmp.eq.s32.totalorder %s33, 1
          // Predicated region
          $region89: #{tpu_custom_call.1} parent=83 // pred_check
            %p2410 = pneg %p2409
          $region90: #{tpu_custom_call.1} parent=83 // pred_check_branch
            %2412 = sbr.rel (%p2410) target = $region92
          $region91: #{tpu_custom_call.1} parent=83 // pred_region
            %v2413 = vld [vmem:[%s2014] sm:$0xff]
            %v2414 = vld [vmem:[%s2014 + $0x8] sm:$0xff]
            %v2415 = vld [vmem:[%s2014 + $0x10] sm:$0xff]
            %v2416 = vld [vmem:[%s2014 + $0x18] sm:$0xff]
            %v2417 = vld [vmem:[%s2014 + $0x20] sm:$0xff]
            %v2418 = vld [vmem:[%s2014 + $0x28] sm:$0xff]
            %v2419 = vld [vmem:[%s2014 + $0x30] sm:$0xff]
            %v2420 = vld [vmem:[%s2014 + $0x38] sm:$0xff]
            %v2421 = vld [vmem:[%s2014 + $0x40] sm:$0xff]
            %v2422 = vld [vmem:[%s2014 + $0x48] sm:$0xff]
            %v2423 = vld [vmem:[%s2014 + $0x50] sm:$0xff]
            %v2424 = vld [vmem:[%s2014 + $0x58] sm:$0xff]
            %v2425 = vld [vmem:[%s2014 + $0x60] sm:$0xff]
            %v2426 = vld [vmem:[%s2014 + $0x68] sm:$0xff]
            %v2427 = vld [vmem:[%s2014 + $0x70] sm:$0xff]
            %v2428 = vld [vmem:[%s2014 + $0x78] sm:$0xff]
            %v2429 = vld [vmem:[%s2014 + $0x80] sm:$0xff]
            %v2430 = vld [vmem:[%s2014 + $0x88] sm:$0xff]
            %v2431 = vld [vmem:[%s2014 + $0x90] sm:$0xff]
            %v2432 = vld [vmem:[%s2014 + $0x98] sm:$0xff]
            %v2433 = vld [vmem:[%s2014 + $0xa0] sm:$0xff]
            %v2434 = vld [vmem:[%s2014 + $0xa8] sm:$0xff]
            %v2435 = vld [vmem:[%s2014 + $0xb0] sm:$0xff]
            %v2436 = vld [vmem:[%s2014 + $0xb8] sm:$0xff]
            %v2437 = vld [vmem:[%s2014 + $0xc0] sm:$0xff]
            %v2438 = vld [vmem:[%s2014 + $0xc8] sm:$0xff]
            %v2439 = vld [vmem:[%s2014 + $0xd0] sm:$0xff]
            %v2440 = vld [vmem:[%s2014 + $0xd8] sm:$0xff]
            %v2441 = vld [vmem:[%s2014 + $0xe0] sm:$0xff]
            %v2442 = vld [vmem:[%s2014 + $0xe8] sm:$0xff]
            %v2443 = vld [vmem:[%s2014 + $0xf0] sm:$0xff]
            %v2444 = vld [vmem:[%s2014 + $0xf8] sm:$0xff]
            %v2445 = vmax.f32 %v2413, 0.0
            %v2446 = vmax.f32 %v2414, 0.0
            %v2447 = vmax.f32 %v2415, 0.0
            %v2448 = vmax.f32 %v2416, 0.0
            %v2449 = vmax.f32 %v2417, 0.0
            %v2450 = vmax.f32 %v2418, 0.0
            %v2451 = vmax.f32 %v2419, 0.0
            %v2452 = vmax.f32 %v2420, 0.0
            %v2453 = vmax.f32 %v2421, 0.0
            %v2454 = vmax.f32 %v2422, 0.0
            %v2455 = vmax.f32 %v2423, 0.0
            %v2456 = vmax.f32 %v2424, 0.0
            %v2457 = vmax.f32 %v2425, 0.0
            %v2458 = vmax.f32 %v2426, 0.0
            %v2459 = vmax.f32 %v2427, 0.0
            %v2460 = vmax.f32 %v2428, 0.0
            %v2461 = vmax.f32 %v2429, 0.0
            %v2462 = vmax.f32 %v2430, 0.0
            %v2463 = vmax.f32 %v2431, 0.0
            %v2464 = vmax.f32 %v2432, 0.0
            %v2465 = vmax.f32 %v2433, 0.0
            %v2466 = vmax.f32 %v2434, 0.0
            %v2467 = vmax.f32 %v2435, 0.0
            %v2468 = vmax.f32 %v2436, 0.0
            %v2469 = vmax.f32 %v2437, 0.0
            %v2470 = vmax.f32 %v2438, 0.0
            %v2471 = vmax.f32 %v2439, 0.0
            %v2472 = vmax.f32 %v2440, 0.0
            %v2473 = vmax.f32 %v2441, 0.0
            %v2474 = vmax.f32 %v2442, 0.0
            %v2475 = vmax.f32 %v2443, 0.0
            %v2476 = vmax.f32 %v2444, 0.0
            %v2477 = vld [vmem:[#allocation8] sm:$0xff]
            %v2478 = vld [vmem:[#allocation8 + $0x8] sm:$0xff]
            %v2479 = vld [vmem:[#allocation8 + $0x10] sm:$0xff]
            %v2480 = vld [vmem:[#allocation8 + $0x18] sm:$0xff]
            %v2481 = vld [vmem:[#allocation8 + $0x20] sm:$0xff]
            %v2482 = vld [vmem:[#allocation8 + $0x28] sm:$0xff]
            %v2483 = vld [vmem:[#allocation8 + $0x30] sm:$0xff]
            %v2484 = vld [vmem:[#allocation8 + $0x38] sm:$0xff]
            %v2485 = vld [vmem:[#allocation8 + $0x40] sm:$0xff]
            %v2486 = vld [vmem:[#allocation8 + $0x48] sm:$0xff]
            %v2487 = vld [vmem:[#allocation8 + $0x50] sm:$0xff]
            %v2488 = vld [vmem:[#allocation8 + $0x58] sm:$0xff]
            %v2489 = vld [vmem:[#allocation8 + $0x60] sm:$0xff]
            %v2490 = vld [vmem:[#allocation8 + $0x68] sm:$0xff]
            %v2491 = vld [vmem:[#allocation8 + $0x70] sm:$0xff]
            %v2492 = vld [vmem:[#allocation8 + $0x78] sm:$0xff]
            %v2493 = vld [vmem:[%s9] sm:$0x1]
            %v2495 = vlaneseq
            %v2496 = vshrl.u32 %v2495, 7
            %v2497 = vsub.s32 0, %v2496
            %v2498 = vrot.slane %v2493, %v2497
            %2500 = vmatprep.subr.mxu0 0.0
            %2501 = vmatpush1.msra.mxu0 %v2477
            %2502 = vmatprep.subr.mxu0 0.0
            %2503 = vmatpush1.msra.mxu0 %v2478
            %2504 = vmatprep.subr.mxu0 0.0
            %2505 = vmatpush1.msra.mxu0 %v2479
            %2506 = vmatprep.subr.mxu0 0.0
            %2507 = vmatpush1.msra.mxu0 %v2480
            %2508 = vmatprep.subr.mxu0 0.0
            %2509 = vmatpush1.msra.mxu0 %v2481
            %2510 = vmatprep.subr.mxu0 0.0
            %2511 = vmatpush1.msra.mxu0 %v2482
            %2512 = vmatprep.subr.mxu0 0.0
            %2513 = vmatpush1.msra.mxu0 %v2483
            %2514 = vmatprep.subr.mxu0 0.0
            %2515 = vmatpush1.msra.mxu0 %v2484
            %2516 = vmatprep.subr.mxu0 0.0
            %2517 = vmatpush1.msra.mxu0 %v2485
            %2518 = vmatprep.subr.mxu0 0.0
            %2519 = vmatpush1.msra.mxu0 %v2486
            %2520 = vmatprep.subr.mxu0 0.0
            %2521 = vmatpush1.msra.mxu0 %v2487
            %2522 = vmatprep.subr.mxu0 0.0
            %2523 = vmatpush1.msra.mxu0 %v2488
            %2524 = vmatprep.subr.mxu0 0.0
            %2525 = vmatpush1.msra.mxu0 %v2489
            %2526 = vmatprep.subr.mxu0 0.0
            %2527 = vmatpush1.msra.mxu0 %v2490
            %2528 = vmatprep.subr.mxu0 0.0
            %2529 = vmatpush1.msra.mxu0 %v2491
            %2530 = vmatprep.subr.mxu0 0.0
            %2531 = vmatpush1.msra.mxu0 %v2492
            %2532 = vmatprep.subr.mxu0 0.0
            %2533 = vmatpush1.msra.mxu0 0.0
            %2534 = vmatprep.subr.mxu0 0.0
            %2535 = vmatpush1.msra.mxu0 0.0
            %2536 = vmatprep.subr.mxu0 0.0
            %2537 = vmatpush1.msra.mxu0 0.0
            %2538 = vmatprep.subr.mxu0 0.0
            %2539 = vmatpush1.msra.mxu0 0.0
            %2540 = vmatprep.subr.mxu0 0.0
            %2541 = vmatpush1.msra.mxu0 0.0
            %2542 = vmatprep.subr.mxu0 0.0
            %2543 = vmatpush1.msra.mxu0 0.0
            %2544 = vmatprep.subr.mxu0 0.0
            %2545 = vmatpush1.msra.mxu0 0.0
            %2546 = vmatprep.subr.mxu0 0.0
            %2547 = vmatpush1.msra.mxu0 0.0
            %2548 = vmatprep.subr.mxu0 0.0
            %2549 = vmatpush1.msra.mxu0 0.0
            %2550 = vmatprep.subr.mxu0 0.0
            %2551 = vmatpush1.msra.mxu0 0.0
            %2552 = vmatprep.subr.mxu0 0.0
            %2553 = vmatpush1.msra.mxu0 0.0
            %2554 = vmatprep.subr.mxu0 0.0
            %2555 = vmatpush1.msra.mxu0 0.0
            %2556 = vmatprep.subr.mxu0 0.0
            %2557 = vmatpush1.msra.mxu0 0.0
            %2558 = vmatprep.subr.mxu0 0.0
            %2559 = vmatpush1.msra.mxu0 0.0
            %2560 = vmatprep.subr.mxu0 0.0
            %2561 = vmatpush1.msra.mxu0 0.0
            %2562 = vmatprep.subr.mxu0 0.0
            %2563 = vmatpush1.msra.mxu0 0.0
            %2564 = vmatprep.mubr.f32.mxu0 0.0
            %2565 = vmatmul.mubr.f32.gmra.mrb[0].mxu0 %v2445
            %v2566 = vpop.f32.mrb[0].mxu0
            %v2567 = vadd.f32 %v2498, %v2566
            %v2568 = vpop.f32.mrb[0].mxu0
            %2569 = vmatprep.mubr.f32.mxu0 0.0
            %2570 = vmatmul.mubr.f32.gmra.mrb[0].mxu0 %v2446
            %v2571 = vpop.f32.mrb[0].mxu0
            %v2572 = vadd.f32 %v2498, %v2571
            %v2573 = vpop.f32.mrb[0].mxu0
            %2574 = vmatprep.mubr.f32.mxu0 0.0
            %2575 = vmatmul.mubr.f32.gmra.mrb[0].mxu0 %v2447
            %v2576 = vpop.f32.mrb[0].mxu0
            %v2577 = vadd.f32 %v2498, %v2576
            %v2578 = vpop.f32.mrb[0].mxu0
            %2579 = vmatprep.mubr.f32.mxu0 0.0
            %2580 = vmatmul.mubr.f32.gmra.mrb[0].mxu0 %v2448
            %v2581 = vpop.f32.mrb[0].mxu0
            %v2582 = vadd.f32 %v2498, %v2581
            %v2583 = vpop.f32.mrb[0].mxu0
            %2584 = vmatprep.mubr.f32.mxu0 0.0
            %2585 = vmatmul.mubr.f32.gmra.mrb[0].mxu0 %v2449
            %v2586 = vpop.f32.mrb[0].mxu0
            %v2587 = vadd.f32 %v2498, %v2586
            %v2588 = vpop.f32.mrb[0].mxu0
            %2589 = vmatprep.mubr.f32.mxu0 0.0
            %2590 = vmatmul.mubr.f32.gmra.mrb[0].mxu0 %v2450
            %v2591 = vpop.f32.mrb[0].mxu0
            %v2592 = vadd.f32 %v2498, %v2591
            %v2593 = vpop.f32.mrb[0].mxu0
            %2594 = vmatprep.mubr.f32.mxu0 0.0
            %2595 = vmatmul.mubr.f32.gmra.mrb[0].mxu0 %v2451
            %v2596 = vpop.f32.mrb[0].mxu0
            %v2597 = vadd.f32 %v2498, %v2596
            %v2598 = vpop.f32.mrb[0].mxu0
            %2599 = vmatprep.mubr.f32.mxu0 0.0
            %2600 = vmatmul.mubr.f32.gmra.mrb[0].mxu0 %v2452
            %v2601 = vpop.f32.mrb[0].mxu0
            %v2602 = vadd.f32 %v2498, %v2601
            %v2603 = vpop.f32.mrb[0].mxu0
            %2604 = vmatprep.mubr.f32.mxu0 0.0
            %2605 = vmatmul.mubr.f32.gmra.mrb[0].mxu0 %v2453
            %v2606 = vpop.f32.mrb[0].mxu0
            %v2607 = vadd.f32 %v2498, %v2606
            %v2608 = vpop.f32.mrb[0].mxu0
            %2609 = vmatprep.mubr.f32.mxu0 0.0
            %2610 = vmatmul.mubr.f32.gmra.mrb[0].mxu0 %v2454
            %v2611 = vpop.f32.mrb[0].mxu0
            %v2612 = vadd.f32 %v2498, %v2611
            %v2613 = vpop.f32.mrb[0].mxu0
            %2614 = vmatprep.mubr.f32.mxu0 0.0
            %2615 = vmatmul.mubr.f32.gmra.mrb[0].mxu0 %v2455
            %v2616 = vpop.f32.mrb[0].mxu0
            %v2617 = vadd.f32 %v2498, %v2616
            %v2618 = vpop.f32.mrb[0].mxu0
            %2619 = vmatprep.mubr.f32.mxu0 0.0
            %2620 = vmatmul.mubr.f32.gmra.mrb[0].mxu0 %v2456
            %v2621 = vpop.f32.mrb[0].mxu0
            %v2622 = vadd.f32 %v2498, %v2621
            %v2623 = vpop.f32.mrb[0].mxu0
            %2624 = vmatprep.mubr.f32.mxu0 0.0
            %2625 = vmatmul.mubr.f32.gmra.mrb[0].mxu0 %v2457
            %v2626 = vpop.f32.mrb[0].mxu0
            %v2627 = vadd.f32 %v2498, %v2626
            %v2628 = vpop.f32.mrb[0].mxu0
            %2629 = vmatprep.mubr.f32.mxu0 0.0
            %2630 = vmatmul.mubr.f32.gmra.mrb[0].mxu0 %v2458
            %v2631 = vpop.f32.mrb[0].mxu0
            %v2632 = vadd.f32 %v2498, %v2631
            %v2633 = vpop.f32.mrb[0].mxu0
            %2634 = vmatprep.mubr.f32.mxu0 0.0
            %2635 = vmatmul.mubr.f32.gmra.mrb[0].mxu0 %v2459
            %v2636 = vpop.f32.mrb[0].mxu0
            %v2637 = vadd.f32 %v2498, %v2636
            %v2638 = vpop.f32.mrb[0].mxu0
            %2639 = vmatprep.mubr.f32.mxu0 0.0
            %2640 = vmatmul.mubr.f32.gmra.mrb[0].mxu0 %v2460
            %v2641 = vpop.f32.mrb[0].mxu0
            %v2642 = vadd.f32 %v2498, %v2641
            %v2643 = vpop.f32.mrb[0].mxu0
            %2644 = vmatprep.mubr.f32.mxu0 0.0
            %2645 = vmatmul.mubr.f32.gmra.mrb[0].mxu0 %v2461
            %v2646 = vpop.f32.mrb[0].mxu0
            %v2647 = vadd.f32 %v2498, %v2646
            %v2648 = vpop.f32.mrb[0].mxu0
            %2649 = vmatprep.mubr.f32.mxu0 0.0
            %2650 = vmatmul.mubr.f32.gmra.mrb[0].mxu0 %v2462
            %v2651 = vpop.f32.mrb[0].mxu0
            %v2652 = vadd.f32 %v2498, %v2651
            %v2653 = vpop.f32.mrb[0].mxu0
            %2654 = vmatprep.mubr.f32.mxu0 0.0
            %2655 = vmatmul.mubr.f32.gmra.mrb[0].mxu0 %v2463
            %v2656 = vpop.f32.mrb[0].mxu0
            %v2657 = vadd.f32 %v2498, %v2656
            %v2658 = vpop.f32.mrb[0].mxu0
            %2659 = vmatprep.mubr.f32.mxu0 0.0
            %2660 = vmatmul.mubr.f32.gmra.mrb[0].mxu0 %v2464
            %v2661 = vpop.f32.mrb[0].mxu0
            %v2662 = vadd.f32 %v2498, %v2661
            %v2663 = vpop.f32.mrb[0].mxu0
            %2664 = vmatprep.mubr.f32.mxu0 0.0
            %2665 = vmatmul.mubr.f32.gmra.mrb[0].mxu0 %v2465
            %v2666 = vpop.f32.mrb[0].mxu0
            %v2667 = vadd.f32 %v2498, %v2666
            %v2668 = vpop.f32.mrb[0].mxu0
            %2669 = vmatprep.mubr.f32.mxu0 0.0
            %2670 = vmatmul.mubr.f32.gmra.mrb[0].mxu0 %v2466
            %v2671 = vpop.f32.mrb[0].mxu0
            %v2672 = vadd.f32 %v2498, %v2671
            %v2673 = vpop.f32.mrb[0].mxu0
            %2674 = vmatprep.mubr.f32.mxu0 0.0
            %2675 = vmatmul.mubr.f32.gmra.mrb[0].mxu0 %v2467
            %v2676 = vpop.f32.mrb[0].mxu0
            %v2677 = vadd.f32 %v2498, %v2676
            %v2678 = vpop.f32.mrb[0].mxu0
            %2679 = vmatprep.mubr.f32.mxu0 0.0
            %2680 = vmatmul.mubr.f32.gmra.mrb[0].mxu0 %v2468
            %v2681 = vpop.f32.mrb[0].mxu0
            %v2682 = vadd.f32 %v2498, %v2681
            %v2683 = vpop.f32.mrb[0].mxu0
            %2684 = vmatprep.mubr.f32.mxu0 0.0
            %2685 = vmatmul.mubr.f32.gmra.mrb[0].mxu0 %v2469
            %v2686 = vpop.f32.mrb[0].mxu0
            %v2687 = vadd.f32 %v2498, %v2686
            %v2688 = vpop.f32.mrb[0].mxu0
            %2689 = vmatprep.mubr.f32.mxu0 0.0
            %2690 = vmatmul.mubr.f32.gmra.mrb[0].mxu0 %v2470
            %v2691 = vpop.f32.mrb[0].mxu0
            %v2692 = vadd.f32 %v2498, %v2691
            %v2693 = vpop.f32.mrb[0].mxu0
            %2694 = vmatprep.mubr.f32.mxu0 0.0
            %2695 = vmatmul.mubr.f32.gmra.mrb[0].mxu0 %v2471
            %v2696 = vpop.f32.mrb[0].mxu0
            %v2697 = vadd.f32 %v2498, %v2696
            %v2698 = vpop.f32.mrb[0].mxu0
            %2699 = vmatprep.mubr.f32.mxu0 0.0
            %2700 = vmatmul.mubr.f32.gmra.mrb[0].mxu0 %v2472
            %v2701 = vpop.f32.mrb[0].mxu0
            %v2702 = vadd.f32 %v2498, %v2701
            %v2703 = vpop.f32.mrb[0].mxu0
            %2704 = vmatprep.mubr.f32.mxu0 0.0
            %2705 = vmatmul.mubr.f32.gmra.mrb[0].mxu0 %v2473
            %v2706 = vpop.f32.mrb[0].mxu0
            %v2707 = vadd.f32 %v2498, %v2706
            %v2708 = vpop.f32.mrb[0].mxu0
            %2709 = vmatprep.mubr.f32.mxu0 0.0
            %2710 = vmatmul.mubr.f32.gmra.mrb[0].mxu0 %v2474
            %v2711 = vpop.f32.mrb[0].mxu0
            %v2712 = vadd.f32 %v2498, %v2711
            %v2713 = vpop.f32.mrb[0].mxu0
            %2714 = vmatprep.mubr.f32.mxu0 0.0
            %2715 = vmatmul.mubr.f32.gmra.mrb[0].mxu0 %v2475
            %v2716 = vpop.f32.mrb[0].mxu0
            %v2717 = vadd.f32 %v2498, %v2716
            %v2718 = vpop.f32.mrb[0].mxu0
            %2719 = vmatprep.mubr.f32.mxu0 0.0
            %2720 = vmatmul.mubr.f32.gmra.mrb[0].mxu0 %v2476
            %v2721 = vpop.f32.mrb[0].mxu0
            %v2722 = vadd.f32 %v2498, %v2721
            %v2723 = vpop.f32.mrb[0].mxu0
            %2724 = vdwg.mxu0
            %2725 = vst [vmem:[%s416] sm:$0xff] %v2567
            %2726 = vst [vmem:[%s416 + $0x8] sm:$0xff] %v2572
            %2727 = vst [vmem:[%s416 + $0x10] sm:$0xff] %v2577
            %2728 = vst [vmem:[%s416 + $0x18] sm:$0xff] %v2582
            %2729 = vst [vmem:[%s416 + $0x20] sm:$0xff] %v2587
            %2730 = vst [vmem:[%s416 + $0x28] sm:$0xff] %v2592
            %2731 = vst [vmem:[%s416 + $0x30] sm:$0xff] %v2597
            %2732 = vst [vmem:[%s416 + $0x38] sm:$0xff] %v2602
            %2733 = vst [vmem:[%s416 + $0x40] sm:$0xff] %v2607
            %2734 = vst [vmem:[%s416 + $0x48] sm:$0xff] %v2612
            %2735 = vst [vmem:[%s416 + $0x50] sm:$0xff] %v2617
            %2736 = vst [vmem:[%s416 + $0x58] sm:$0xff] %v2622
            %2737 = vst [vmem:[%s416 + $0x60] sm:$0xff] %v2627
            %2738 = vst [vmem:[%s416 + $0x68] sm:$0xff] %v2632
            %2739 = vst [vmem:[%s416 + $0x70] sm:$0xff] %v2637
            %2740 = vst [vmem:[%s416 + $0x78] sm:$0xff] %v2642
            %2741 = vst [vmem:[%s416 + $0x80] sm:$0xff] %v2647
            %2742 = vst [vmem:[%s416 + $0x88] sm:$0xff] %v2652
            %2743 = vst [vmem:[%s416 + $0x90] sm:$0xff] %v2657
            %2744 = vst [vmem:[%s416 + $0x98] sm:$0xff] %v2662
            %2745 = vst [vmem:[%s416 + $0xa0] sm:$0xff] %v2667
            %2746 = vst [vmem:[%s416 + $0xa8] sm:$0xff] %v2672
            %2747 = vst [vmem:[%s416 + $0xb0] sm:$0xff] %v2677
            %2748 = vst [vmem:[%s416 + $0xb8] sm:$0xff] %v2682
            %2749 = vst [vmem:[%s416 + $0xc0] sm:$0xff] %v2687
            %2750 = vst [vmem:[%s416 + $0xc8] sm:$0xff] %v2692
            %2751 = vst [vmem:[%s416 + $0xd0] sm:$0xff] %v2697
            %2752 = vst [vmem:[%s416 + $0xd8] sm:$0xff] %v2702
            %2753 = vst [vmem:[%s416 + $0xe0] sm:$0xff] %v2707
            %2754 = vst [vmem:[%s416 + $0xe8] sm:$0xff] %v2712
            %2755 = vst [vmem:[%s416 + $0xf0] sm:$0xff] %v2717
            %2756 = vst [vmem:[%s416 + $0xf8] sm:$0xff] %v2722
          $region92: #{tpu_custom_call.1} parent=83 // pred_fallthru
            _
        $region84: #{tpu_custom_call.1} parent=59 // pred_fallthru
          _
        %s2757 = sand.u32 %s272, 1
        %s2758 = scalar_lea.sflag [#allocation7], %s2757
        %s2759 = sand.u32 %s272, 1
        %s2760 = smul.addr %s2759, 256
        %s2761 = scalar_lea.vmem [#allocation10], %s2760
        // Predicated region
        $region93: #{tpu_custom_call.1} parent=59 // pred_check
          %p2762 = pneg %p282
        $region94: #{tpu_custom_call.1} parent=59 // pred_check_branch
          %2764 = sbr.rel (%p2762) target = $region96
        $region95: #{tpu_custom_call.1} parent=59 // pred_region
          %s2765 = smul.u32 32, %s34
          %s2767 = ssub.s32 4096, 4096
          %2768 = vsyncadd %s2758, %s2767
          %s2769 = smul.addr %s2765, 128
          %s2770 = scalar_lea.hbm %s10, %s2769
          %s2771 = sshll.u32 %s2761, 4
          %s2772 = int_to_ptr.vmem [resolvable:$true] %s2771
          %2777 = dma.vmem_to_hbm [thread:$0]  %s2772, 4096, %s2770, %s2758, 128, 128, 8
        $region96: #{tpu_custom_call.1} parent=59 // pred_fallthru
          _
      $region60: #{tpu_custom_call.1} parent=5 // pred_fallthru
        _
      %p2778 = scmp.le.s32.totalorder 2, %s23
      // Predicated region
      $region97: #{tpu_custom_call.1} parent=5 // pred_check
        %p2779 = pneg %p2778
      $region98: #{tpu_custom_call.1} parent=5 // pred_check_branch
        %2781 = sbr.rel (%p2779) target = $region100
      $region99: #{tpu_custom_call.1} parent=5 // pred_region
        %s2782 = ssub.s32 %s23, 2
        // Predicated region
        $region101: #{tpu_custom_call.1} parent=99 // pred_check
          %p2783 = pneg %p288
        $region102: #{tpu_custom_call.1} parent=99 // pred_check_branch
          %2785 = sbr.rel (%p2783) target = $region104
        $region103: #{tpu_custom_call.1} parent=99 // pred_region
          %s2786 = sand.u32 %s273, 1
          %s2787 = scalar_lea.sflag [#allocation7], %s2786
          %s2788 = sand.u32 %s273, 1
          %s2789 = smul.addr %s2788, 256
          %s2790 = scalar_lea.vmem [#allocation10], %s2789
          %2791 = dma.done %s2787, 4096
        $region104: #{tpu_custom_call.1} parent=99 // pred_fallthru
          _
      $region100: #{tpu_custom_call.1} parent=5 // pred_fallthru
        _
    $region6: #{tpu_custom_call.1} parent=1 // loop_footer
      %s27 = sadd.s32 1, %s23
    $region7: #{tpu_custom_call.1} parent=1 // loop_footer_branch
      %22 = sbr.rel target = $region3
    $region8: #{tpu_custom_call.1} parent=1 // loop_exit
      _
    %2792 = vsyncpa [#allocation6], 1
    %s2793 = scalar_lea.sflag [#allocation6], 1
    %2794 = vsyncpa %s2793, 1
    %2795 = vsyncpa [#allocation9], 1
    %2796 = vsyncpa [#allocation7], 1
    %s2797 = scalar_lea.sflag [#allocation7], 1
    %2798 = vsyncpa %s2797, 1

</llo_original>
